<compile_context>
chip_gen: v7x
topology: tpu7x:2x2x1
jax: 0.10.0
libtpu: 0.0.40
codegen_flags: <defaults>
</compile_context>

<pallas_src>
import functools

import numpy as np

import jax
import jax.numpy as jnp
from jax.experimental import pallas as pl
from jax.experimental.pallas import tpu as pltpu


def _stage_kernel(mask_ref, x_ref, w1_ref, w2_ref, b1_ref, b2_ref, o_ref, *,
                  num_blocks):
    """Applies `num_blocks` stride-1 identity BasicBlocks to a packed slab.

    mask_ref : (3, ncols) keep-masks (compute dtype):
               row 0: 0 where the l-1 tap must be zeroed (segment column 0),
               row 1: 0 where the l+1 tap must be zeroed (segment column L-1),
               row 2: 0 on padded tail columns (segment column >= L).
    x_ref    : (C, ncols) packed activations, ncols = Nb * Lc (compute dtype).
    w1_ref   : (B, 3, O, C) conv1 tap matrices (BN1 scale folded).
    w2_ref   : (B, 3, O, O) conv2 tap matrices (BN2 scale folded).
    b1_ref   : (B, O, 1)   folded BN1 bias (f32).
    b2_ref   : (B, O, 1)   folded BN2 bias (f32).
    o_ref    : (O, ncols)  output (original activation dtype).
    """
    ncols = x_ref.shape[-1]
    cdt = x_ref.dtype
    keep = mask_ref[...]
    left_keep = keep[0:1]
    right_keep = keep[1:2]
    valid_keep = keep[2:3]

    def conv3_bn(a_f32, w_ref, b_ref, blk):
        # k=3 / stride-1 / pad-1 conv as three accumulated MXU matmuls; the
        # tap shifts use pltpu.roll (XLU slot) and the keep-masks reproduce
        # conv zero-padding and stop the cyclic wrap from leaking the
        # neighbouring sample / tail garbage into valid columns.
        a = a_f32.astype(cdt)
        a_l = pltpu.roll(a, shift=1, axis=1) * left_keep          # col l -> a[l-1]
        a_r = pltpu.roll(a, shift=ncols - 1, axis=1) * right_keep  # col l -> a[l+1]
        acc = jnp.dot(w_ref[blk, 1], a, preferred_element_type=jnp.float32)
        acc = acc + jnp.dot(w_ref[blk, 0], a_l,
                            preferred_element_type=jnp.float32)
        acc = acc + jnp.dot(w_ref[blk, 2], a_r,
                            preferred_element_type=jnp.float32)
        return acc + b_ref[blk]

    # Residual stream stays in f32 in VMEM across the fused blocks; only the
    # matmul operands are cast down to the (bf16) compute dtype.
    x = x_ref[...].astype(jnp.float32)
    for blk in range(num_blocks):
        h = jnp.maximum(conv3_bn(x, w1_ref, b1_ref, blk), 0.0)
        g = conv3_bn(h, w2_ref, b2_ref, blk)
        x = jnp.maximum(g + x, 0.0)

    # Re-zero the padded tail so the packed layout can be carried into the
    # next stage / pallas_call without garbage leaking through the roll wrap.
    o_ref[...] = (x * valid_keep).astype(o_ref.dtype)


def _pick_batch_block(n, c, lc, itemsize):
    """Samples per grid step: fill a modest VMEM budget, keep >= 2 grid steps
    (v7x has two TensorCores) and divide the batch evenly."""
    per_sample = c * lc * (4 * itemsize + 24)  # in/out double-buffers + f32 temps
    nb = max(1, min(n, (16 * 1024 * 1024) // max(per_sample, 1)))
    if n >= 2:
        nb = min(nb, n // 2)
    nb = max(nb, 1)
    while n % nb:
        nb -= 1
    return nb


def basic_block_stage(x, block_params, *, compute_dtype=jnp.bfloat16):
    """Runs a sequence of stride-1 identity BasicBlocks
    (conv3->BN->ReLU->conv3->BN, + identity residual, ReLU) fused into ONE
    pallas_call.

    x            : (N, C, L) activations.
    block_params : sequence of (w1, w2, scale1, bias1, scale2, bias2) with
                   w1, w2 of shape (C, C, 3) and inference-mode BatchNorm
                   folded into per-channel scale / bias of shape (C,).
    compute_dtype: MXU operand dtype (bf16 default; accumulation and all
                   elementwise math stay f32, output keeps x.dtype).
    """
    N, C, L = x.shape
    num_blocks = len(block_params)
    assert num_blocks >= 1
    O = C  # stride=1 / identity residual => inplanes == planes
    for (w1, w2, s1, t1, s2, t2) in block_params:
        assert w1.shape == (O, C, 3) and w2.shape == (O, O, 3)
        assert s1.shape == (O,) and t1.shape == (O,)
        assert s2.shape == (O,) and t2.shape == (O,)

    cdt = jnp.dtype(compute_dtype)
    out_dtype = x.dtype

    # Lane-dense length: next multiple of 128 (no forced extra lane).
    Lc = max(128, ((L + 127) // 128) * 128)
    nb = _pick_batch_block(N, C, Lc, cdt.itemsize)
    ncols = nb * Lc

    # Per-column keep-masks (periodic in Lc), built once on the host.
    col = np.arange(ncols) % Lc
    keep = np.ones((3, ncols), dtype=np.float32)
    keep[0, col == 0] = 0.0       # left tap: conv zero-pad / sample-wrap cols
    keep[1, col == L - 1] = 0.0   # right tap: conv zero-pad / sample-wrap cols
    keep[2, col >= L] = 0.0       # padded tail columns
    mask = jnp.asarray(keep, dtype=cdt)

    # Fold BN scale into the conv weights and split per tap:
    # (B, 3, O, Cin), tap 0/1/2 applied to x[l-1] / x[l] / x[l+1].
    def fold(w, scale):
        wf = (w * scale[:, None, None]).astype(cdt)
        return jnp.stack([wf[:, :, 0], wf[:, :, 1], wf[:, :, 2]], axis=0)

    w1s = jnp.stack([fold(p[0], p[2]) for p in block_params], axis=0)
    w2s = jnp.stack([fold(p[1], p[4]) for p in block_params], axis=0)
    b1s = jnp.stack([p[3].reshape(O, 1) for p in block_params],
                    axis=0).astype(jnp.float32)
    b2s = jnp.stack([p[5].reshape(O, 1) for p in block_params],
                    axis=0).astype(jnp.float32)

    # Pack activations ONCE per stage into the lane-dense (C, N*Lc) layout
    # (columns = sample-major concatenation of Lc-padded length segments).
    xp = jnp.pad(x.astype(cdt), ((0, 0), (0, 0), (0, Lc - L)))
    xp = jnp.transpose(xp, (1, 0, 2)).reshape(C, N * Lc)

    kernel = functools.partial(_stage_kernel, num_blocks=num_blocks)

    def build(single_buffer_consts):
        def const_spec(shape, index_map):
            # Weights / biases / masks have constant index maps -> fetched
            # once; single-buffering them reclaims VMEM (matters most on v7x).
            if single_buffer_consts:
                return pl.BlockSpec(shape, index_map,
                                    pipeline_mode=pl.Buffered(1))
            return pl.BlockSpec(shape, index_map)

        grid_spec = pltpu.PrefetchScalarGridSpec(
            num_scalar_prefetch=0,
            grid=(N // nb,),
            in_specs=[
                const_spec((3, ncols), lambda g: (0, 0)),
                pl.BlockSpec((C, ncols), lambda g: (0, g)),
                const_spec((num_blocks, 3, O, C), lambda g: (0, 0, 0, 0)),
                const_spec((num_blocks, 3, O, O), lambda g: (0, 0, 0, 0)),
                const_spec((num_blocks, O, 1), lambda g: (0, 0, 0)),
                const_spec((num_blocks, O, 1), lambda g: (0, 0, 0)),
            ],
            out_specs=pl.BlockSpec((O, ncols), lambda g: (0, g)),
        )
        return pl.pallas_call(
            kernel,
            out_shape=jax.ShapeDtypeStruct((O, N * Lc), out_dtype),
            grid_spec=grid_spec,
            compiler_params=pltpu.CompilerParams(
                dimension_semantics=("parallel",),
                vmem_limit_bytes=48 * 1024 * 1024),
        )

    args = (mask, xp, w1s, w2s, b1s, b2s)
    try:
        out = build(True)(*args)
    except Exception:  # pragma: no cover - jax w/o BlockSpec pipeline_mode
        out = build(False)(*args)

    # Unpack ONCE per stage back to (N, C, L).
    out = out.reshape(O, N, Lc)[:, :, :L]
    return jnp.transpose(out, (1, 0, 2))


# ---------------------------- pure-JAX reference ----------------------------
def _conv1d(x, w):
    return jax.lax.conv_general_dilated(
        x, w, window_strides=(1,), padding=((1, 1),),
        dimension_numbers=("NCH", "OIH", "NCH"))


def basic_block_ref(x, w1, w2, scale1, bias1, scale2, bias2):
    h = _conv1d(x, w1)
    h = h * scale1[None, :, None] + bias1[None, :, None]
    h = jnp.maximum(h, 0.0)
    g = _conv1d(h, w2)
    g = g * scale2[None, :, None] + bias2[None, :, None]
    return jnp.maximum(g + x, 0.0)


def stage_ref(x, block_params):
    for p in block_params:
        x = basic_block_ref(x, *p)
    return x


if __name__ == "__main__":
    root = jax.random.PRNGKey(0)

    def make_block_params(key, c):
        ks = jax.random.split(key, 10)
        eps = 1e-5
        w1 = jax.random.normal(ks[0], (c, c, 3), jnp.float32) * 0.1
        w2 = jax.random.normal(ks[1], (c, c, 3), jnp.float32) * 0.1
        g1 = 1.0 + 0.1 * jax.random.normal(ks[2], (c,), jnp.float32)
        be1 = 0.1 * jax.random.normal(ks[3], (c,), jnp.float32)
        m1 = 0.1 * jax.random.normal(ks[4], (c,), jnp.float32)
        v1 = jnp.abs(jax.random.normal(ks[5], (c,), jnp.float32)) + 0.5
        g2 = 1.0 + 0.1 * jax.random.normal(ks[6], (c,), jnp.float32)
        be2 = 0.1 * jax.random.normal(ks[7], (c,), jnp.float32)
        m2 = 0.1 * jax.random.normal(ks[8], (c,), jnp.float32)
        v2 = jnp.abs(jax.random.normal(ks[9], (c,), jnp.float32)) + 0.5
        s1 = g1 / jnp.sqrt(v1 + eps)
        b1 = be1 - m1 * s1
        s2 = g2 / jnp.sqrt(v2 + eps)
        b2 = be2 - m2 * s2
        return (w1, w2, s1, b1, s2, b2)

    top_keys = jax.random.split(root, 2)

    # --- Config A: layer1-style stage stand-in: 2 fused stride-1 blocks,
    #     L not a multiple of 128 (exercises padded-tail masking). -----------
    N, C, L, B = 4, 16, 96, 2
    keysA = jax.random.split(top_keys[0], B + 1)
    x = jax.random.normal(keysA[0], (N, C, L), jnp.float32)
    params = [make_block_params(keysA[i + 1], C) for i in range(B)]
    ref = stage_ref(x, params)

    out_f32 = jax.block_until_ready(
        basic_block_stage(x, params, compute_dtype=jnp.float32))
    assert out_f32.shape == (N, C, L)
    err = float(jnp.max(jnp.abs(out_f32 - ref)))
    assert jnp.allclose(out_f32, ref, atol=1e-3, rtol=1e-3), f"f32 err {err}"

    out_bf16 = jax.block_until_ready(basic_block_stage(x, params))  # bf16 MXU
    assert out_bf16.shape == (N, C, L)
    err = float(jnp.max(jnp.abs(out_bf16 - ref)))
    assert jnp.allclose(out_bf16, ref, atol=2e-1, rtol=1e-1), f"bf16 err {err}"

    # --- Config B: L an exact multiple of 128 (Lc == L, no padded tail) —
    #     exercises the cross-sample wrap masking of the rolled taps. --------
    N2, C2, L2 = 2, 8, 128
    keysB = jax.random.split(top_keys[1], 2)
    x2 = jax.random.normal(keysB[0], (N2, C2, L2), jnp.float32)
    params2 = [make_block_params(keysB[1], C2)]
    ref2 = stage_ref(x2, params2)
    out2 = jax.block_until_ready(
        basic_block_stage(x2, params2, compute_dtype=jnp.float32))
    assert out2.shape == (N2, C2, L2)
    err = float(jnp.max(jnp.abs(out2 - ref2)))
    assert jnp.allclose(out2, ref2, atol=1e-3, rtol=1e-3), f"wrap err {err}"

    print("KERNEL_OK")
</pallas_src>

<mosaic_0001>
module attributes {stable_mosaic.version = 11 : i64} {
  func.func @_stage_kernel(%arg0: i32, %arg1: memref<3x256xf32, #tpu.memory_space<vmem>>, %arg2: memref<16x256xf32, #tpu.memory_space<vmem>>, %arg3: memref<2x3x16x16xf32, #tpu.memory_space<vmem>>, %arg4: memref<2x3x16x16xf32, #tpu.memory_space<vmem>>, %arg5: memref<2x16x1xf32, #tpu.memory_space<vmem>>, %arg6: memref<2x16x1xf32, #tpu.memory_space<vmem>>, %arg7: memref<16x256xf32, #tpu.memory_space<vmem>>) attributes {dimension_semantics = [#tpu.dimension_semantics<parallel>], iteration_bounds = array<i64: 2>, scalar_prefetch = 0 : i64, scratch_operands = 0 : i64, tpu.core_type = #tpu.core_type<tc>, window_params = [{pipeline_mode = #tpu.pipeline_mode<synchronous>, transform_indices = @transform_0, window_bounds = array<i64: 3, 256>}, {transform_indices = @transform_1, window_bounds = array<i64: 16, 256>}, {pipeline_mode = #tpu.pipeline_mode<synchronous>, transform_indices = @transform_2, window_bounds = array<i64: 2, 3, 16, 16>}, {pipeline_mode = #tpu.pipeline_mode<synchronous>, transform_indices = @transform_3, window_bounds = array<i64: 2, 3, 16, 16>}, {pipeline_mode = #tpu.pipeline_mode<synchronous>, transform_indices = @transform_4, window_bounds = array<i64: 2, 16, 1>}, {pipeline_mode = #tpu.pipeline_mode<synchronous>, transform_indices = @transform_5, window_bounds = array<i64: 2, 16, 1>}, {transform_indices = @transform_6, window_bounds = array<i64: 16, 256>}]} {
    %c0 = arith.constant 0 : index
    %c0_0 = arith.constant 0 : index
    %0 = vector.load %arg1[%c0, %c0_0] : memref<3x256xf32, #tpu.memory_space<vmem>>, vector<3x256xf32>
    %1 = vector.extract_strided_slice %0 {offsets = [0, 0], sizes = [1, 256], strides = [1, 1]} : vector<3x256xf32> to vector<1x256xf32>
    %2 = vector.extract_strided_slice %0 {offsets = [1, 0], sizes = [1, 256], strides = [1, 1]} : vector<3x256xf32> to vector<1x256xf32>
    %3 = vector.extract_strided_slice %0 {offsets = [2, 0], sizes = [1, 256], strides = [1, 1]} : vector<3x256xf32> to vector<1x256xf32>
    %c0_1 = arith.constant 0 : index
    %c0_2 = arith.constant 0 : index
    %4 = vector.load %arg2[%c0_1, %c0_2] : memref<16x256xf32, #tpu.memory_space<vmem>>, vector<16x256xf32>
    %c1_i32 = arith.constant 1 : i32
    %5 = tpu.dynamic_rotate %4 by %c1_i32 dim 1 : vector<16x256xf32>, i32 -> vector<16x256xf32>
    %6 = vector.broadcast %1 : vector<1x256xf32> to vector<16x256xf32>
    %7 = arith.mulf %5, %6 : vector<16x256xf32>
    %c255_i32 = arith.constant 255 : i32
    %8 = tpu.dynamic_rotate %4 by %c255_i32 dim 1 : vector<16x256xf32>, i32 -> vector<16x256xf32>
    %9 = vector.broadcast %2 : vector<1x256xf32> to vector<16x256xf32>
    %10 = arith.mulf %8, %9 : vector<16x256xf32>
    %c0_3 = arith.constant 0 : index
    %c1 = arith.constant 1 : index
    %c0_4 = arith.constant 0 : index
    %c0_5 = arith.constant 0 : index
    %11 = vector.load %arg3[%c0_3, %c1, %c0_4, %c0_5] : memref<2x3x16x16xf32, #tpu.memory_space<vmem>>, vector<1x1x16x16xf32>
    %12 = vector.shape_cast %11 : vector<1x1x16x16xf32> to vector<16x16xf32>
    %cst = arith.constant dense<0.000000e+00> : vector<16x256xf32>
    %13 = tpu.matmul %12, %4, %cst {dimension_numbers = #tpu.dot_dimension_numbers<[1], [0], [0], [1], [0, 0, 1, 1], [], []>} : vector<16x16xf32>, vector<16x256xf32>, vector<16x256xf32> -> vector<16x256xf32>
    %c0_6 = arith.constant 0 : index
    %c0_7 = arith.constant 0 : index
    %c0_8 = arith.constant 0 : index
    %c0_9 = arith.constant 0 : index
    %14 = vector.load %arg3[%c0_6, %c0_7, %c0_8, %c0_9] : memref<2x3x16x16xf32, #tpu.memory_space<vmem>>, vector<1x1x16x16xf32>
    %15 = vector.shape_cast %14 : vector<1x1x16x16xf32> to vector<16x16xf32>
    %cst_10 = arith.constant dense<0.000000e+00> : vector<16x256xf32>
    %16 = tpu.matmul %15, %7, %cst_10 {dimension_numbers = #tpu.dot_dimension_numbers<[1], [0], [0], [1], [0, 0, 1, 1], [], []>} : vector<16x16xf32>, vector<16x256xf32>, vector<16x256xf32> -> vector<16x256xf32>
    %17 = arith.addf %13, %16 : vector<16x256xf32>
    %c0_11 = arith.constant 0 : index
    %c2 = arith.constant 2 : index
    %c0_12 = arith.constant 0 : index
    %c0_13 = arith.constant 0 : index
    %18 = vector.load %arg3[%c0_11, %c2, %c0_12, %c0_13] : memref<2x3x16x16xf32, #tpu.memory_space<vmem>>, vector<1x1x16x16xf32>
    %19 = vector.shape_cast %18 : vector<1x1x16x16xf32> to vector<16x16xf32>
    %cst_14 = arith.constant dense<0.000000e+00> : vector<16x256xf32>
    %20 = tpu.matmul %19, %10, %cst_14 {dimension_numbers = #tpu.dot_dimension_numbers<[1], [0], [0], [1], [0, 0, 1, 1], [], []>} : vector<16x16xf32>, vector<16x256xf32>, vector<16x256xf32> -> vector<16x256xf32>
    %21 = arith.addf %17, %20 : vector<16x256xf32>
    %c0_15 = arith.constant 0 : index
    %c0_16 = arith.constant 0 : index
    %c0_17 = arith.constant 0 : index
    %22 = vector.load %arg5[%c0_15, %c0_16, %c0_17] : memref<2x16x1xf32, #tpu.memory_space<vmem>>, vector<1x16x1xf32>
    %23 = vector.shape_cast %22 : vector<1x16x1xf32> to vector<16x1xf32>
    %24 = vector.broadcast %23 : vector<16x1xf32> to vector<16x256xf32>
    %25 = arith.addf %21, %24 : vector<16x256xf32>
    %cst_18 = arith.constant 0.000000e+00 : f32
    %26 = vector.broadcast %cst_18 : f32 to vector<16x256xf32>
    %27 = arith.maximumf %25, %26 : vector<16x256xf32>
    %c1_i32_19 = arith.constant 1 : i32
    %28 = tpu.dynamic_rotate %27 by %c1_i32_19 dim 1 : vector<16x256xf32>, i32 -> vector<16x256xf32>
    %29 = vector.broadcast %1 : vector<1x256xf32> to vector<16x256xf32>
    %30 = arith.mulf %28, %29 : vector<16x256xf32>
    %c255_i32_20 = arith.constant 255 : i32
    %31 = tpu.dynamic_rotate %27 by %c255_i32_20 dim 1 : vector<16x256xf32>, i32 -> vector<16x256xf32>
    %32 = vector.broadcast %2 : vector<1x256xf32> to vector<16x256xf32>
    %33 = arith.mulf %31, %32 : vector<16x256xf32>
    %c0_21 = arith.constant 0 : index
    %c1_22 = arith.constant 1 : index
    %c0_23 = arith.constant 0 : index
    %c0_24 = arith.constant 0 : index
    %34 = vector.load %arg4[%c0_21, %c1_22, %c0_23, %c0_24] : memref<2x3x16x16xf32, #tpu.memory_space<vmem>>, vector<1x1x16x16xf32>
    %35 = vector.shape_cast %34 : vector<1x1x16x16xf32> to vector<16x16xf32>
    %cst_25 = arith.constant dense<0.000000e+00> : vector<16x256xf32>
    %36 = tpu.matmul %35, %27, %cst_25 {dimension_numbers = #tpu.dot_dimension_numbers<[1], [0], [0], [1], [0, 0, 1, 1], [], []>} : vector<16x16xf32>, vector<16x256xf32>, vector<16x256xf32> -> vector<16x256xf32>
    %c0_26 = arith.constant 0 : index
    %c0_27 = arith.constant 0 : index
    %c0_28 = arith.constant 0 : index
    %c0_29 = arith.constant 0 : index
    %37 = vector.load %arg4[%c0_26, %c0_27, %c0_28, %c0_29] : memref<2x3x16x16xf32, #tpu.memory_space<vmem>>, vector<1x1x16x16xf32>
    %38 = vector.shape_cast %37 : vector<1x1x16x16xf32> to vector<16x16xf32>
    %cst_30 = arith.constant dense<0.000000e+00> : vector<16x256xf32>
    %39 = tpu.matmul %38, %30, %cst_30 {dimension_numbers = #tpu.dot_dimension_numbers<[1], [0], [0], [1], [0, 0, 1, 1], [], []>} : vector<16x16xf32>, vector<16x256xf32>, vector<16x256xf32> -> vector<16x256xf32>
    %40 = arith.addf %36, %39 : vector<16x256xf32>
    %c0_31 = arith.constant 0 : index
    %c2_32 = arith.constant 2 : index
    %c0_33 = arith.constant 0 : index
    %c0_34 = arith.constant 0 : index
    %41 = vector.load %arg4[%c0_31, %c2_32, %c0_33, %c0_34] : memref<2x3x16x16xf32, #tpu.memory_space<vmem>>, vector<1x1x16x16xf32>
    %42 = vector.shape_cast %41 : vector<1x1x16x16xf32> to vector<16x16xf32>
    %cst_35 = arith.constant dense<0.000000e+00> : vector<16x256xf32>
    %43 = tpu.matmul %42, %33, %cst_35 {dimension_numbers = #tpu.dot_dimension_numbers<[1], [0], [0], [1], [0, 0, 1, 1], [], []>} : vector<16x16xf32>, vector<16x256xf32>, vector<16x256xf32> -> vector<16x256xf32>
    %44 = arith.addf %40, %43 : vector<16x256xf32>
    %c0_36 = arith.constant 0 : index
    %c0_37 = arith.constant 0 : index
    %c0_38 = arith.constant 0 : index
    %45 = vector.load %arg6[%c0_36, %c0_37, %c0_38] : memref<2x16x1xf32, #tpu.memory_space<vmem>>, vector<1x16x1xf32>
    %46 = vector.shape_cast %45 : vector<1x16x1xf32> to vector<16x1xf32>
    %47 = vector.broadcast %46 : vector<16x1xf32> to vector<16x256xf32>
    %48 = arith.addf %44, %47 : vector<16x256xf32>
    %49 = arith.addf %48, %4 : vector<16x256xf32>
    %cst_39 = arith.constant 0.000000e+00 : f32
    %50 = vector.broadcast %cst_39 : f32 to vector<16x256xf32>
    %51 = arith.maximumf %49, %50 : vector<16x256xf32>
    %c1_i32_40 = arith.constant 1 : i32
    %52 = tpu.dynamic_rotate %51 by %c1_i32_40 dim 1 : vector<16x256xf32>, i32 -> vector<16x256xf32>
    %53 = vector.broadcast %1 : vector<1x256xf32> to vector<16x256xf32>
    %54 = arith.mulf %52, %53 : vector<16x256xf32>
    %c255_i32_41 = arith.constant 255 : i32
    %55 = tpu.dynamic_rotate %51 by %c255_i32_41 dim 1 : vector<16x256xf32>, i32 -> vector<16x256xf32>
    %56 = vector.broadcast %2 : vector<1x256xf32> to vector<16x256xf32>
    %57 = arith.mulf %55, %56 : vector<16x256xf32>
    %c1_42 = arith.constant 1 : index
    %c1_43 = arith.constant 1 : index
    %c0_44 = arith.constant 0 : index
    %c0_45 = arith.constant 0 : index
    %58 = vector.load %arg3[%c1_42, %c1_43, %c0_44, %c0_45] : memref<2x3x16x16xf32, #tpu.memory_space<vmem>>, vector<1x1x16x16xf32>
    %59 = vector.shape_cast %58 : vector<1x1x16x16xf32> to vector<16x16xf32>
    %cst_46 = arith.constant dense<0.000000e+00> : vector<16x256xf32>
    %60 = tpu.matmul %59, %51, %cst_46 {dimension_numbers = #tpu.dot_dimension_numbers<[1], [0], [0], [1], [0, 0, 1, 1], [], []>} : vector<16x16xf32>, vector<16x256xf32>, vector<16x256xf32> -> vector<16x256xf32>
    %c1_47 = arith.constant 1 : index
    %c0_48 = arith.constant 0 : index
    %c0_49 = arith.constant 0 : index
    %c0_50 = arith.constant 0 : index
    %61 = vector.load %arg3[%c1_47, %c0_48, %c0_49, %c0_50] : memref<2x3x16x16xf32, #tpu.memory_space<vmem>>, vector<1x1x16x16xf32>
    %62 = vector.shape_cast %61 : vector<1x1x16x16xf32> to vector<16x16xf32>
    %cst_51 = arith.constant dense<0.000000e+00> : vector<16x256xf32>
    %63 = tpu.matmul %62, %54, %cst_51 {dimension_numbers = #tpu.dot_dimension_numbers<[1], [0], [0], [1], [0, 0, 1, 1], [], []>} : vector<16x16xf32>, vector<16x256xf32>, vector<16x256xf32> -> vector<16x256xf32>
    %64 = arith.addf %60, %63 : vector<16x256xf32>
    %c1_52 = arith.constant 1 : index
    %c2_53 = arith.constant 2 : index
    %c0_54 = arith.constant 0 : index
    %c0_55 = arith.constant 0 : index
    %65 = vector.load %arg3[%c1_52, %c2_53, %c0_54, %c0_55] : memref<2x3x16x16xf32, #tpu.memory_space<vmem>>, vector<1x1x16x16xf32>
    %66 = vector.shape_cast %65 : vector<1x1x16x16xf32> to vector<16x16xf32>
    %cst_56 = arith.constant dense<0.000000e+00> : vector<16x256xf32>
    %67 = tpu.matmul %66, %57, %cst_56 {dimension_numbers = #tpu.dot_dimension_numbers<[1], [0], [0], [1], [0, 0, 1, 1], [], []>} : vector<16x16xf32>, vector<16x256xf32>, vector<16x256xf32> -> vector<16x256xf32>
    %68 = arith.addf %64, %67 : vector<16x256xf32>
    %c1_57 = arith.constant 1 : index
    %c0_58 = arith.constant 0 : index
    %c0_59 = arith.constant 0 : index
    %69 = vector.load %arg5[%c1_57, %c0_58, %c0_59] : memref<2x16x1xf32, #tpu.memory_space<vmem>>, vector<1x16x1xf32>
    %70 = vector.shape_cast %69 : vector<1x16x1xf32> to vector<16x1xf32>
    %71 = vector.broadcast %70 : vector<16x1xf32> to vector<16x256xf32>
    %72 = arith.addf %68, %71 : vector<16x256xf32>
    %cst_60 = arith.constant 0.000000e+00 : f32
    %73 = vector.broadcast %cst_60 : f32 to vector<16x256xf32>
    %74 = arith.maximumf %72, %73 : vector<16x256xf32>
    %c1_i32_61 = arith.constant 1 : i32
    %75 = tpu.dynamic_rotate %74 by %c1_i32_61 dim 1 : vector<16x256xf32>, i32 -> vector<16x256xf32>
    %76 = vector.broadcast %1 : vector<1x256xf32> to vector<16x256xf32>
    %77 = arith.mulf %75, %76 : vector<16x256xf32>
    %c255_i32_62 = arith.constant 255 : i32
    %78 = tpu.dynamic_rotate %74 by %c255_i32_62 dim 1 : vector<16x256xf32>, i32 -> vector<16x256xf32>
    %79 = vector.broadcast %2 : vector<1x256xf32> to vector<16x256xf32>
    %80 = arith.mulf %78, %79 : vector<16x256xf32>
    %c1_63 = arith.constant 1 : index
    %c1_64 = arith.constant 1 : index
    %c0_65 = arith.constant 0 : index
    %c0_66 = arith.constant 0 : index
    %81 = vector.load %arg4[%c1_63, %c1_64, %c0_65, %c0_66] : memref<2x3x16x16xf32, #tpu.memory_space<vmem>>, vector<1x1x16x16xf32>
    %82 = vector.shape_cast %81 : vector<1x1x16x16xf32> to vector<16x16xf32>
    %cst_67 = arith.constant dense<0.000000e+00> : vector<16x256xf32>
    %83 = tpu.matmul %82, %74, %cst_67 {dimension_numbers = #tpu.dot_dimension_numbers<[1], [0], [0], [1], [0, 0, 1, 1], [], []>} : vector<16x16xf32>, vector<16x256xf32>, vector<16x256xf32> -> vector<16x256xf32>
    %c1_68 = arith.constant 1 : index
    %c0_69 = arith.constant 0 : index
    %c0_70 = arith.constant 0 : index
    %c0_71 = arith.constant 0 : index
    %84 = vector.load %arg4[%c1_68, %c0_69, %c0_70, %c0_71] : memref<2x3x16x16xf32, #tpu.memory_space<vmem>>, vector<1x1x16x16xf32>
    %85 = vector.shape_cast %84 : vector<1x1x16x16xf32> to vector<16x16xf32>
    %cst_72 = arith.constant dense<0.000000e+00> : vector<16x256xf32>
    %86 = tpu.matmul %85, %77, %cst_72 {dimension_numbers = #tpu.dot_dimension_numbers<[1], [0], [0], [1], [0, 0, 1, 1], [], []>} : vector<16x16xf32>, vector<16x256xf32>, vector<16x256xf32> -> vector<16x256xf32>
    %87 = arith.addf %83, %86 : vector<16x256xf32>
    %c1_73 = arith.constant 1 : index
    %c2_74 = arith.constant 2 : index
    %c0_75 = arith.constant 0 : index
    %c0_76 = arith.constant 0 : index
    %88 = vector.load %arg4[%c1_73, %c2_74, %c0_75, %c0_76] : memref<2x3x16x16xf32, #tpu.memory_space<vmem>>, vector<1x1x16x16xf32>
    %89 = vector.shape_cast %88 : vector<1x1x16x16xf32> to vector<16x16xf32>
    %cst_77 = arith.constant dense<0.000000e+00> : vector<16x256xf32>
    %90 = tpu.matmul %89, %80, %cst_77 {dimension_numbers = #tpu.dot_dimension_numbers<[1], [0], [0], [1], [0, 0, 1, 1], [], []>} : vector<16x16xf32>, vector<16x256xf32>, vector<16x256xf32> -> vector<16x256xf32>
    %91 = arith.addf %87, %90 : vector<16x256xf32>
    %c1_78 = arith.constant 1 : index
    %c0_79 = arith.constant 0 : index
    %c0_80 = arith.constant 0 : index
    %92 = vector.load %arg6[%c1_78, %c0_79, %c0_80] : memref<2x16x1xf32, #tpu.memory_space<vmem>>, vector<1x16x1xf32>
    %93 = vector.shape_cast %92 : vector<1x16x1xf32> to vector<16x1xf32>
    %94 = vector.broadcast %93 : vector<16x1xf32> to vector<16x256xf32>
    %95 = arith.addf %91, %94 : vector<16x256xf32>
    %96 = arith.addf %95, %51 : vector<16x256xf32>
    %cst_81 = arith.constant 0.000000e+00 : f32
    %97 = vector.broadcast %cst_81 : f32 to vector<16x256xf32>
    %98 = arith.maximumf %96, %97 : vector<16x256xf32>
    %99 = vector.broadcast %3 : vector<1x256xf32> to vector<16x256xf32>
    %100 = arith.mulf %98, %99 : vector<16x256xf32>
    %c0_82 = arith.constant 0 : index
    %c0_83 = arith.constant 0 : index
    %101 = vector.load %arg7[%c0_82, %c0_83] : memref<16x256xf32, #tpu.memory_space<vmem>>, vector<16x256xf32>
    tpu.vector_store %arg7[%c0_82, %c0_83], %100 {strides = array<i32>} : memref<16x256xf32, #tpu.memory_space<vmem>>, vector<16x256xf32>,
    return
  }
  func.func @transform_0(%arg0: i32) -> (i32, i32) {
    %c0_i32 = arith.constant 0 : i32
    %c0_i32_0 = arith.constant 0 : i32
    %c0_i32_1 = arith.constant 0 : i32
    return %c0_i32, %c0_i32_0 : i32, i32
  }
  func.func @transform_1(%arg0: i32) -> (i32, i32) {
    %c0_i32 = arith.constant 0 : i32
    %c0_i32_0 = arith.constant 0 : i32
    return %c0_i32, %arg0 : i32, i32
  }
  func.func @transform_2(%arg0: i32) -> (i32, i32, i32, i32) {
    %c0_i32 = arith.constant 0 : i32
    %c0_i32_0 = arith.constant 0 : i32
    %c0_i32_1 = arith.constant 0 : i32
    %c0_i32_2 = arith.constant 0 : i32
    %c0_i32_3 = arith.constant 0 : i32
    return %c0_i32, %c0_i32_0, %c0_i32_1, %c0_i32_2 : i32, i32, i32, i32
  }
  func.func @transform_3(%arg0: i32) -> (i32, i32, i32, i32) {
    %c0_i32 = arith.constant 0 : i32
    %c0_i32_0 = arith.constant 0 : i32
    %c0_i32_1 = arith.constant 0 : i32
    %c0_i32_2 = arith.constant 0 : i32
    %c0_i32_3 = arith.constant 0 : i32
    return %c0_i32, %c0_i32_0, %c0_i32_1, %c0_i32_2 : i32, i32, i32, i32
  }
  func.func @transform_4(%arg0: i32) -> (i32, i32, i32) {
    %c0_i32 = arith.constant 0 : i32
    %c0_i32_0 = arith.constant 0 : i32
    %c0_i32_1 = arith.constant 0 : i32
    %c0_i32_2 = arith.constant 0 : i32
    return %c0_i32, %c0_i32_0, %c0_i32_1 : i32, i32, i32
  }
  func.func @transform_5(%arg0: i32) -> (i32, i32, i32) {
    %c0_i32 = arith.constant 0 : i32
    %c0_i32_0 = arith.constant 0 : i32
    %c0_i32_1 = arith.constant 0 : i32
    %c0_i32_2 = arith.constant 0 : i32
    return %c0_i32, %c0_i32_0, %c0_i32_1 : i32, i32, i32
  }
  func.func @transform_6(%arg0: i32) -> (i32, i32) {
    %c0_i32 = arith.constant 0 : i32
    %c0_i32_0 = arith.constant 0 : i32
    return %c0_i32, %arg0 : i32, i32
  }
}

module attributes {stable_mosaic.version = 11 : i64} {
  func.func @_stage_kernel(%arg0: i32, %arg1: memref<3x256xf32, #tpu.memory_space<vmem>>, %arg2: memref<16x256xf32, #tpu.memory_space<vmem>>, %arg3: memref<2x3x16x16xf32, #tpu.memory_space<vmem>>, %arg4: memref<2x3x16x16xf32, #tpu.memory_space<vmem>>, %arg5: memref<2x16x1xf32, #tpu.memory_space<vmem>>, %arg6: memref<2x16x1xf32, #tpu.memory_space<vmem>>, %arg7: memref<16x256xf32, #tpu.memory_space<vmem>>) attributes {dimension_semantics = [#tpu.dimension_semantics<parallel>], iteration_bounds = array<i64: 2>, scalar_prefetch = 0 : i64, scratch_operands = 0 : i64, tpu.core_type = #tpu.core_type<tc>, window_params = [{pipeline_mode = #tpu.pipeline_mode<synchronous>, transform_indices = @transform_0, window_bounds = array<i64: 3, 256>}, {transform_indices = @transform_1, window_bounds = array<i64: 16, 256>}, {pipeline_mode = #tpu.pipeline_mode<synchronous>, transform_indices = @transform_2, window_bounds = array<i64: 2, 3, 16, 16>}, {pipeline_mode = #tpu.pipeline_mode<synchronous>, transform_indices = @transform_3, window_bounds = array<i64: 2, 3, 16, 16>}, {pipeline_mode = #tpu.pipeline_mode<synchronous>, transform_indices = @transform_4, window_bounds = array<i64: 2, 16, 1>}, {pipeline_mode = #tpu.pipeline_mode<synchronous>, transform_indices = @transform_5, window_bounds = array<i64: 2, 16, 1>}, {transform_indices = @transform_6, window_bounds = array<i64: 16, 256>}]} {
    %c0 = arith.constant 0 : index
    %c0_0 = arith.constant 0 : index
    %0 = vector.load %arg1[%c0, %c0_0] : memref<3x256xf32, #tpu.memory_space<vmem>>, vector<3x256xf32>
    %1 = vector.extract_strided_slice %0 {offsets = [0, 0], sizes = [1, 256], strides = [1, 1]} : vector<3x256xf32> to vector<1x256xf32>
    %2 = vector.extract_strided_slice %0 {offsets = [1, 0], sizes = [1, 256], strides = [1, 1]} : vector<3x256xf32> to vector<1x256xf32>
    %3 = vector.extract_strided_slice %0 {offsets = [2, 0], sizes = [1, 256], strides = [1, 1]} : vector<3x256xf32> to vector<1x256xf32>
    %c0_1 = arith.constant 0 : index
    %c0_2 = arith.constant 0 : index
    %4 = vector.load %arg2[%c0_1, %c0_2] : memref<16x256xf32, #tpu.memory_space<vmem>>, vector<16x256xf32>
    %c1_i32 = arith.constant 1 : i32
    %5 = tpu.dynamic_rotate %4 by %c1_i32 dim 1 : vector<16x256xf32>, i32 -> vector<16x256xf32>
    %6 = vector.broadcast %1 : vector<1x256xf32> to vector<16x256xf32>
    %7 = arith.mulf %5, %6 : vector<16x256xf32>
    %c255_i32 = arith.constant 255 : i32
    %8 = tpu.dynamic_rotate %4 by %c255_i32 dim 1 : vector<16x256xf32>, i32 -> vector<16x256xf32>
    %9 = vector.broadcast %2 : vector<1x256xf32> to vector<16x256xf32>
    %10 = arith.mulf %8, %9 : vector<16x256xf32>
    %c0_3 = arith.constant 0 : index
    %c1 = arith.constant 1 : index
    %c0_4 = arith.constant 0 : index
    %c0_5 = arith.constant 0 : index
    %11 = vector.load %arg3[%c0_3, %c1, %c0_4, %c0_5] : memref<2x3x16x16xf32, #tpu.memory_space<vmem>>, vector<1x1x16x16xf32>
    %12 = vector.shape_cast %11 : vector<1x1x16x16xf32> to vector<16x16xf32>
    %cst = arith.constant dense<0.000000e+00> : vector<16x256xf32>
    %13 = tpu.matmul %12, %4, %cst {dimension_numbers = #tpu.dot_dimension_numbers<[1], [0], [0], [1], [0, 0, 1, 1], [], []>} : vector<16x16xf32>, vector<16x256xf32>, vector<16x256xf32> -> vector<16x256xf32>
    %c0_6 = arith.constant 0 : index
    %c0_7 = arith.constant 0 : index
    %c0_8 = arith.constant 0 : index
    %c0_9 = arith.constant 0 : index
    %14 = vector.load %arg3[%c0_6, %c0_7, %c0_8, %c0_9] : memref<2x3x16x16xf32, #tpu.memory_space<vmem>>, vector<1x1x16x16xf32>
    %15 = vector.shape_cast %14 : vector<1x1x16x16xf32> to vector<16x16xf32>
    %cst_10 = arith.constant dense<0.000000e+00> : vector<16x256xf32>
    %16 = tpu.matmul %15, %7, %cst_10 {dimension_numbers = #tpu.dot_dimension_numbers<[1], [0], [0], [1], [0, 0, 1, 1], [], []>} : vector<16x16xf32>, vector<16x256xf32>, vector<16x256xf32> -> vector<16x256xf32>
    %17 = arith.addf %13, %16 : vector<16x256xf32>
    %c0_11 = arith.constant 0 : index
    %c2 = arith.constant 2 : index
    %c0_12 = arith.constant 0 : index
    %c0_13 = arith.constant 0 : index
    %18 = vector.load %arg3[%c0_11, %c2, %c0_12, %c0_13] : memref<2x3x16x16xf32, #tpu.memory_space<vmem>>, vector<1x1x16x16xf32>
    %19 = vector.shape_cast %18 : vector<1x1x16x16xf32> to vector<16x16xf32>
    %cst_14 = arith.constant dense<0.000000e+00> : vector<16x256xf32>
    %20 = tpu.matmul %19, %10, %cst_14 {dimension_numbers = #tpu.dot_dimension_numbers<[1], [0], [0], [1], [0, 0, 1, 1], [], []>} : vector<16x16xf32>, vector<16x256xf32>, vector<16x256xf32> -> vector<16x256xf32>
    %21 = arith.addf %17, %20 : vector<16x256xf32>
    %c0_15 = arith.constant 0 : index
    %c0_16 = arith.constant 0 : index
    %c0_17 = arith.constant 0 : index
    %22 = vector.load %arg5[%c0_15, %c0_16, %c0_17] : memref<2x16x1xf32, #tpu.memory_space<vmem>>, vector<1x16x1xf32>
    %23 = vector.shape_cast %22 : vector<1x16x1xf32> to vector<16x1xf32>
    %24 = vector.broadcast %23 : vector<16x1xf32> to vector<16x256xf32>
    %25 = arith.addf %21, %24 : vector<16x256xf32>
    %cst_18 = arith.constant 0.000000e+00 : f32
    %26 = vector.broadcast %cst_18 : f32 to vector<16x256xf32>
    %27 = arith.maximumf %25, %26 : vector<16x256xf32>
    %c1_i32_19 = arith.constant 1 : i32
    %28 = tpu.dynamic_rotate %27 by %c1_i32_19 dim 1 : vector<16x256xf32>, i32 -> vector<16x256xf32>
    %29 = vector.broadcast %1 : vector<1x256xf32> to vector<16x256xf32>
    %30 = arith.mulf %28, %29 : vector<16x256xf32>
    %c255_i32_20 = arith.constant 255 : i32
    %31 = tpu.dynamic_rotate %27 by %c255_i32_20 dim 1 : vector<16x256xf32>, i32 -> vector<16x256xf32>
    %32 = vector.broadcast %2 : vector<1x256xf32> to vector<16x256xf32>
    %33 = arith.mulf %31, %32 : vector<16x256xf32>
    %c0_21 = arith.constant 0 : index
    %c1_22 = arith.constant 1 : index
    %c0_23 = arith.constant 0 : index
    %c0_24 = arith.constant 0 : index
    %34 = vector.load %arg4[%c0_21, %c1_22, %c0_23, %c0_24] : memref<2x3x16x16xf32, #tpu.memory_space<vmem>>, vector<1x1x16x16xf32>
    %35 = vector.shape_cast %34 : vector<1x1x16x16xf32> to vector<16x16xf32>
    %cst_25 = arith.constant dense<0.000000e+00> : vector<16x256xf32>
    %36 = tpu.matmul %35, %27, %cst_25 {dimension_numbers = #tpu.dot_dimension_numbers<[1], [0], [0], [1], [0, 0, 1, 1], [], []>} : vector<16x16xf32>, vector<16x256xf32>, vector<16x256xf32> -> vector<16x256xf32>
    %c0_26 = arith.constant 0 : index
    %c0_27 = arith.constant 0 : index
    %c0_28 = arith.constant 0 : index
    %c0_29 = arith.constant 0 : index
    %37 = vector.load %arg4[%c0_26, %c0_27, %c0_28, %c0_29] : memref<2x3x16x16xf32, #tpu.memory_space<vmem>>, vector<1x1x16x16xf32>
    %38 = vector.shape_cast %37 : vector<1x1x16x16xf32> to vector<16x16xf32>
    %cst_30 = arith.constant dense<0.000000e+00> : vector<16x256xf32>
    %39 = tpu.matmul %38, %30, %cst_30 {dimension_numbers = #tpu.dot_dimension_numbers<[1], [0], [0], [1], [0, 0, 1, 1], [], []>} : vector<16x16xf32>, vector<16x256xf32>, vector<16x256xf32> -> vector<16x256xf32>
    %40 = arith.addf %36, %39 : vector<16x256xf32>
    %c0_31 = arith.constant 0 : index
    %c2_32 = arith.constant 2 : index
    %c0_33 = arith.constant 0 : index
    %c0_34 = arith.constant 0 : index
    %41 = vector.load %arg4[%c0_31, %c2_32, %c0_33, %c0_34] : memref<2x3x16x16xf32, #tpu.memory_space<vmem>>, vector<1x1x16x16xf32>
    %42 = vector.shape_cast %41 : vector<1x1x16x16xf32> to vector<16x16xf32>
    %cst_35 = arith.constant dense<0.000000e+00> : vector<16x256xf32>
    %43 = tpu.matmul %42, %33, %cst_35 {dimension_numbers = #tpu.dot_dimension_numbers<[1], [0], [0], [1], [0, 0, 1, 1], [], []>} : vector<16x16xf32>, vector<16x256xf32>, vector<16x256xf32> -> vector<16x256xf32>
    %44 = arith.addf %40, %43 : vector<16x256xf32>
    %c0_36 = arith.constant 0 : index
    %c0_37 = arith.constant 0 : index
    %c0_38 = arith.constant 0 : index
    %45 = vector.load %arg6[%c0_36, %c0_37, %c0_38] : memref<2x16x1xf32, #tpu.memory_space<vmem>>, vector<1x16x1xf32>
    %46 = vector.shape_cast %45 : vector<1x16x1xf32> to vector<16x1xf32>
    %47 = vector.broadcast %46 : vector<16x1xf32> to vector<16x256xf32>
    %48 = arith.addf %44, %47 : vector<16x256xf32>
    %49 = arith.addf %48, %4 : vector<16x256xf32>
    %cst_39 = arith.constant 0.000000e+00 : f32
    %50 = vector.broadcast %cst_39 : f32 to vector<16x256xf32>
    %51 = arith.maximumf %49, %50 : vector<16x256xf32>
    %c1_i32_40 = arith.constant 1 : i32
    %52 = tpu.dynamic_rotate %51 by %c1_i32_40 dim 1 : vector<16x256xf32>, i32 -> vector<16x256xf32>
    %53 = vector.broadcast %1 : vector<1x256xf32> to vector<16x256xf32>
    %54 = arith.mulf %52, %53 : vector<16x256xf32>
    %c255_i32_41 = arith.constant 255 : i32
    %55 = tpu.dynamic_rotate %51 by %c255_i32_41 dim 1 : vector<16x256xf32>, i32 -> vector<16x256xf32>
    %56 = vector.broadcast %2 : vector<1x256xf32> to vector<16x256xf32>
    %57 = arith.mulf %55, %56 : vector<16x256xf32>
    %c1_42 = arith.constant 1 : index
    %c1_43 = arith.constant 1 : index
    %c0_44 = arith.constant 0 : index
    %c0_45 = arith.constant 0 : index
    %58 = vector.load %arg3[%c1_42, %c1_43, %c0_44, %c0_45] : memref<2x3x16x16xf32, #tpu.memory_space<vmem>>, vector<1x1x16x16xf32>
    %59 = vector.shape_cast %58 : vector<1x1x16x16xf32> to vector<16x16xf32>
    %cst_46 = arith.constant dense<0.000000e+00> : vector<16x256xf32>
    %60 = tpu.matmul %59, %51, %cst_46 {dimension_numbers = #tpu.dot_dimension_numbers<[1], [0], [0], [1], [0, 0, 1, 1], [], []>} : vector<16x16xf32>, vector<16x256xf32>, vector<16x256xf32> -> vector<16x256xf32>
    %c1_47 = arith.constant 1 : index
    %c0_48 = arith.constant 0 : index
    %c0_49 = arith.constant 0 : index
    %c0_50 = arith.constant 0 : index
    %61 = vector.load %arg3[%c1_47, %c0_48, %c0_49, %c0_50] : memref<2x3x16x16xf32, #tpu.memory_space<vmem>>, vector<1x1x16x16xf32>
    %62 = vector.shape_cast %61 : vector<1x1x16x16xf32> to vector<16x16xf32>
    %cst_51 = arith.constant dense<0.000000e+00> : vector<16x256xf32>
    %63 = tpu.matmul %62, %54, %cst_51 {dimension_numbers = #tpu.dot_dimension_numbers<[1], [0], [0], [1], [0, 0, 1, 1], [], []>} : vector<16x16xf32>, vector<16x256xf32>, vector<16x256xf32> -> vector<16x256xf32>
    %64 = arith.addf %60, %63 : vector<16x256xf32>
    %c1_52 = arith.constant 1 : index
    %c2_53 = arith.constant 2 : index
    %c0_54 = arith.constant 0 : index
    %c0_55 = arith.constant 0 : index
    %65 = vector.load %arg3[%c1_52, %c2_53, %c0_54, %c0_55] : memref<2x3x16x16xf32, #tpu.memory_space<vmem>>, vector<1x1x16x16xf32>
    %66 = vector.shape_cast %65 : vector<1x1x16x16xf32> to vector<16x16xf32>
    %cst_56 = arith.constant dense<0.000000e+00> : vector<16x256xf32>
    %67 = tpu.matmul %66, %57, %cst_56 {dimension_numbers = #tpu.dot_dimension_numbers<[1], [0], [0], [1], [0, 0, 1, 1], [], []>} : vector<16x16xf32>, vector<16x256xf32>, vector<16x256xf32> -> vector<16x256xf32>
    %68 = arith.addf %64, %67 : vector<16x256xf32>
    %c1_57 = arith.constant 1 : index
    %c0_58 = arith.constant 0 : index
    %c0_59 = arith.constant 0 : index
    %69 = vector.load %arg5[%c1_57, %c0_58, %c0_59] : memref<2x16x1xf32, #tpu.memory_space<vmem>>, vector<1x16x1xf32>
    %70 = vector.shape_cast %69 : vector<1x16x1xf32> to vector<16x1xf32>
    %71 = vector.broadcast %70 : vector<16x1xf32> to vector<16x256xf32>
    %72 = arith.addf %68, %71 : vector<16x256xf32>
    %cst_60 = arith.constant 0.000000e+00 : f32
    %73 = vector.broadcast %cst_60 : f32 to vector<16x256xf32>
    %74 = arith.maximumf %72, %73 : vector<16x256xf32>
    %c1_i32_61 = arith.constant 1 : i32
    %75 = tpu.dynamic_rotate %74 by %c1_i32_61 dim 1 : vector<16x256xf32>, i32 -> vector<16x256xf32>
    %76 = vector.broadcast %1 : vector<1x256xf32> to vector<16x256xf32>
    %77 = arith.mulf %75, %76 : vector<16x256xf32>
    %c255_i32_62 = arith.constant 255 : i32
    %78 = tpu.dynamic_rotate %74 by %c255_i32_62 dim 1 : vector<16x256xf32>, i32 -> vector<16x256xf32>
    %79 = vector.broadcast %2 : vector<1x256xf32> to vector<16x256xf32>
    %80 = arith.mulf %78, %79 : vector<16x256xf32>
    %c1_63 = arith.constant 1 : index
    %c1_64 = arith.constant 1 : index
    %c0_65 = arith.constant 0 : index
    %c0_66 = arith.constant 0 : index
    %81 = vector.load %arg4[%c1_63, %c1_64, %c0_65, %c0_66] : memref<2x3x16x16xf32, #tpu.memory_space<vmem>>, vector<1x1x16x16xf32>
    %82 = vector.shape_cast %81 : vector<1x1x16x16xf32> to vector<16x16xf32>
    %cst_67 = arith.constant dense<0.000000e+00> : vector<16x256xf32>
    %83 = tpu.matmul %82, %74, %cst_67 {dimension_numbers = #tpu.dot_dimension_numbers<[1], [0], [0], [1], [0, 0, 1, 1], [], []>} : vector<16x16xf32>, vector<16x256xf32>, vector<16x256xf32> -> vector<16x256xf32>
    %c1_68 = arith.constant 1 : index
    %c0_69 = arith.constant 0 : index
    %c0_70 = arith.constant 0 : index
    %c0_71 = arith.constant 0 : index
    %84 = vector.load %arg4[%c1_68, %c0_69, %c0_70, %c0_71] : memref<2x3x16x16xf32, #tpu.memory_space<vmem>>, vector<1x1x16x16xf32>
    %85 = vector.shape_cast %84 : vector<1x1x16x16xf32> to vector<16x16xf32>
    %cst_72 = arith.constant dense<0.000000e+00> : vector<16x256xf32>
    %86 = tpu.matmul %85, %77, %cst_72 {dimension_numbers = #tpu.dot_dimension_numbers<[1], [0], [0], [1], [0, 0, 1, 1], [], []>} : vector<16x16xf32>, vector<16x256xf32>, vector<16x256xf32> -> vector<16x256xf32>
    %87 = arith.addf %83, %86 : vector<16x256xf32>
    %c1_73 = arith.constant 1 : index
    %c2_74 = arith.constant 2 : index
    %c0_75 = arith.constant 0 : index
    %c0_76 = arith.constant 0 : index
    %88 = vector.load %arg4[%c1_73, %c2_74, %c0_75, %c0_76] : memref<2x3x16x16xf32, #tpu.memory_space<vmem>>, vector<1x1x16x16xf32>
    %89 = vector.shape_cast %88 : vector<1x1x16x16xf32> to vector<16x16xf32>
    %cst_77 = arith.constant dense<0.000000e+00> : vector<16x256xf32>
    %90 = tpu.matmul %89, %80, %cst_77 {dimension_numbers = #tpu.dot_dimension_numbers<[1], [0], [0], [1], [0, 0, 1, 1], [], []>} : vector<16x16xf32>, vector<16x256xf32>, vector<16x256xf32> -> vector<16x256xf32>
    %91 = arith.addf %87, %90 : vector<16x256xf32>
    %c1_78 = arith.constant 1 : index
    %c0_79 = arith.constant 0 : index
    %c0_80 = arith.constant 0 : index
    %92 = vector.load %arg6[%c1_78, %c0_79, %c0_80] : memref<2x16x1xf32, #tpu.memory_space<vmem>>, vector<1x16x1xf32>
    %93 = vector.shape_cast %92 : vector<1x16x1xf32> to vector<16x1xf32>
    %94 = vector.broadcast %93 : vector<16x1xf32> to vector<16x256xf32>
    %95 = arith.addf %91, %94 : vector<16x256xf32>
    %96 = arith.addf %95, %51 : vector<16x256xf32>
    %cst_81 = arith.constant 0.000000e+00 : f32
    %97 = vector.broadcast %cst_81 : f32 to vector<16x256xf32>
    %98 = arith.maximumf %96, %97 : vector<16x256xf32>
    %99 = vector.broadcast %3 : vector<1x256xf32> to vector<16x256xf32>
    %100 = arith.mulf %98, %99 : vector<16x256xf32>
    %c0_82 = arith.constant 0 : index
    %c0_83 = arith.constant 0 : index
    %101 = vector.load %arg7[%c0_82, %c0_83] : memref<16x256xf32, #tpu.memory_space<vmem>>, vector<16x256xf32>
    tpu.vector_store %arg7[%c0_82, %c0_83], %100 {strides = array<i32>} : memref<16x256xf32, #tpu.memory_space<vmem>>, vector<16x256xf32>,
    return
  }
  func.func @transform_0(%arg0: i32) -> (i32, i32) {
    %c0_i32 = arith.constant 0 : i32
    %c0_i32_0 = arith.constant 0 : i32
    %c0_i32_1 = arith.constant 0 : i32
    return %c0_i32, %c0_i32_0 : i32, i32
  }
  func.func @transform_1(%arg0: i32) -> (i32, i32) {
    %c0_i32 = arith.constant 0 : i32
    %c0_i32_0 = arith.constant 0 : i32
    return %c0_i32, %arg0 : i32, i32
  }
  func.func @transform_2(%arg0: i32) -> (i32, i32, i32, i32) {
    %c0_i32 = arith.constant 0 : i32
    %c0_i32_0 = arith.constant 0 : i32
    %c0_i32_1 = arith.constant 0 : i32
    %c0_i32_2 = arith.constant 0 : i32
    %c0_i32_3 = arith.constant 0 : i32
    return %c0_i32, %c0_i32_0, %c0_i32_1, %c0_i32_2 : i32, i32, i32, i32
  }
  func.func @transform_3(%arg0: i32) -> (i32, i32, i32, i32) {
    %c0_i32 = arith.constant 0 : i32
    %c0_i32_0 = arith.constant 0 : i32
    %c0_i32_1 = arith.constant 0 : i32
    %c0_i32_2 = arith.constant 0 : i32
    %c0_i32_3 = arith.constant 0 : i32
    return %c0_i32, %c0_i32_0, %c0_i32_1, %c0_i32_2 : i32, i32, i32, i32
  }
  func.func @transform_4(%arg0: i32) -> (i32, i32, i32) {
    %c0_i32 = arith.constant 0 : i32
    %c0_i32_0 = arith.constant 0 : i32
    %c0_i32_1 = arith.constant 0 : i32
    %c0_i32_2 = arith.constant 0 : i32
    return %c0_i32, %c0_i32_0, %c0_i32_1 : i32, i32, i32
  }
  func.func @transform_5(%arg0: i32) -> (i32, i32, i32) {
    %c0_i32 = arith.constant 0 : i32
    %c0_i32_0 = arith.constant 0 : i32
    %c0_i32_1 = arith.constant 0 : i32
    %c0_i32_2 = arith.constant 0 : i32
    return %c0_i32, %c0_i32_0, %c0_i32_1 : i32, i32, i32
  }
  func.func @transform_6(%arg0: i32) -> (i32, i32) {
    %c0_i32 = arith.constant 0 : i32
    %c0_i32_0 = arith.constant 0 : i32
    return %c0_i32, %arg0 : i32, i32
  }
}

</mosaic_0001>

<llo_original>
// kernel: tpu_custom_call.1
$region0: #{tpu_custom_call.1}
  #allocation0 [shape = 'u32[]', space=smem, size = 0x4, offset = 0x4, fixed_abs, tag = 'smem constant byte address 0x4 - core index']
  #allocation1 [shape = 'u32[144,128]{1,0:T(1,128)}', space=vmem, size = 0x12000, scoped, tag = 'internal scratch']
  %s0 = inlined_call_operand.hbm [shape: f32[3,256], index: 0, kind: input, shape index: {}]
  %s1 = inlined_call_operand.vmem [shape: f32[16,512], index: 1, kind: input, shape index: {}]
  %s2 = inlined_call_operand.hbm [shape: f32[2,3,16,16], index: 2, kind: input, shape index: {}]
  %s3 = inlined_call_operand.hbm [shape: f32[2,3,16,16], index: 3, kind: input, shape index: {}]
  %s4 = inlined_call_operand.vmem [shape: f32[2,16,1], index: 4, kind: input, shape index: {}]
  %s5 = inlined_call_operand.vmem [shape: f32[2,16,1], index: 5, kind: input, shape index: {}]
  %s6 = inlined_call_operand.hbm [shape: f32[16,512], index: 6, kind: output, shape index: {}]
  %s7 = sld [smem:[#allocation0]]
  $region92: #{tpu_custom_call.1} parent=0
    _
  %s9 = ssub.s32 1, %s7
  %s10 = scalar_select 0, %s9, %s7
  $region1: #{tpu_custom_call.1} parent=0
    #allocation2 [shape = 'u8[4096]{0}', space=vmem, size = 0x1000, scoped, tag = 'input window, operand 0, single buffered']
    #allocation3 [shape = 's32[2]{0}', space=sflag, size = 0x8, scoped, tag = 'scoped memory for tpu_custom_call.1']
    #allocation4 [shape = 's32[2]{0}', space=sflag, size = 0x8, scoped, tag = 'scoped memory for tpu_custom_call.1']
    #allocation5 [shape = 'u8[32768]{0}', space=vmem, size = 0x8000, scoped, tag = 'input window, operand 1']
    #allocation6 [shape = 'u8[49152]{0}', space=vmem, size = 0xc000, scoped, tag = 'input window, operand 2, single buffered']
    #allocation7 [shape = 's32[1]{0}', space=sflag, size = 0x4, scoped, tag = 'scoped memory for tpu_custom_call.1']
    #allocation8 [shape = 'u8[49152]{0}', space=vmem, size = 0xc000, scoped, tag = 'input window, operand 3, single buffered']
    #allocation9 [shape = 'u8[32768]{0}', space=vmem, size = 0x8000, scoped, tag = 'output window, operand 0']
    %11 = vsyncpa [#allocation3], 0
    %12 = vsyncpa [#allocation7], 0
    %13 = vsyncpa [#allocation4], 0
    %s14 = scalar_lea.sflag [#allocation4], 1
    %15 = vsyncpa %s14, 0
    loop: start=0, step=1, limit=4
    $region2: #{tpu_custom_call.1} parent=1 // loop_pre_header
      _
    $region3: #{tpu_custom_call.1} parent=1 // loop_header
      %s17 = sphi 0, %s21
      %p18 = scmp.ge.s32.totalorder %s17, 4
      %s25 = sphi 0, %s25
      %s27 = sphi 0, %s25
      %s28 = sphi 0, %s27
      %s42 = sphi 0, %s28
      %s48 = sphi 0, %s50
      %s51 = sphi 0, %s48
      %s52 = sphi 0, %s51
      %s68 = sphi 0, %s52
      %s72 = sphi 0, %s72
      %s74 = sphi 0, %s72
      %s75 = sphi 0, %s74
      %s89 = sphi 0, %s75
      %s93 = sphi 0, %s93
      %s95 = sphi 0, %s93
      %s96 = sphi 0, %s95
      %s110 = sphi 0, %s96
      %s114 = sphi 0, %s114
      %s116 = sphi 0, %s114
      %s117 = sphi 0, %s116
      %s131 = sphi 0, %s117
      %s135 = sphi 0, %s135
      %s137 = sphi 0, %s135
      %s138 = sphi 0, %s137
      %s152 = sphi 0, %s138
      %s158 = sphi 0, %s160
      %s161 = sphi 0, %s158
      %s162 = sphi 0, %s161
      %s178 = sphi 0, %s162
    $region4: #{tpu_custom_call.1} parent=1 // loop_header_branch
      %20 = sbr.rel (%p18) target = $region8
    $region5: #{tpu_custom_call.1} parent=1 // loop_body
      %s22 = ssub.s32 %s17, 1
      %s23 = ssub.s32 %s17, 2
      %s24 = sadd.s32 %s17, 1
      %s26 = sadd.s32 %s25, 1
      %p29 = scmp.eq.s32.totalorder %s17, 1
      %p30 = scmp.ne.s32.totalorder %s25, %s27
      %p31 = scmp.eq.s32.totalorder %s17, 0
      %p32 = por %p30, %p31
      %p33 = scmp.ne.s32.totalorder %s25, %s27
      %p34 = scmp.eq.s32.totalorder %s22, 1
      %p35 = por %p33, %p34
      %p36 = scmp.ne.s32.totalorder %s27, %s28
      %p37 = scmp.eq.s32.totalorder %s22, 0
      %p38 = por %p36, %p37
      %p39 = scmp.ne.s32.totalorder %s27, %s28
      %p40 = scmp.eq.s32.totalorder %s23, 1
      %p41 = por %p39, %p40
      %p43 = scmp.ne.s32.totalorder %s28, %s42
      %p44 = scmp.eq.s32.totalorder %s23, 0
      %p45 = por %p43, %p44
      %s46 = ssub.s32 %s17, %s24
      %p47 = scmp.eq.s32.totalorder %s46, 0
      %s49 = sadd.s32 %s48, 1
      %s50 = scalar_select %p47, %s48, %s49
      %p53 = pneg %p47
      %p54 = scmp.eq.s32.totalorder %s17, 1
      %p55 = por %p53, %p54
      %p56 = scmp.ne.s32.totalorder %s48, %s51
      %p57 = scmp.eq.s32.totalorder %s17, 0
      %p58 = por %p56, %p57
      %p59 = scmp.ne.s32.totalorder %s48, %s51
      %p60 = scmp.eq.s32.totalorder %s22, 1
      %p61 = por %p59, %p60
      %p62 = scmp.ne.s32.totalorder %s51, %s52
      %p63 = scmp.eq.s32.totalorder %s22, 0
      %p64 = por %p62, %p63
      %p65 = scmp.ne.s32.totalorder %s51, %s52
      %p66 = scmp.eq.s32.totalorder %s23, 1
      %p67 = por %p65, %p66
      %p69 = scmp.ne.s32.totalorder %s52, %s68
      %p70 = scmp.eq.s32.totalorder %s23, 0
      %p71 = por %p69, %p70
      %s73 = sadd.s32 %s72, 1
      %p76 = scmp.eq.s32.totalorder %s17, 1
      %p77 = scmp.ne.s32.totalorder %s72, %s74
      %p78 = scmp.eq.s32.totalorder %s17, 0
      %p79 = por %p77, %p78
      %p80 = scmp.ne.s32.totalorder %s72, %s74
      %p81 = scmp.eq.s32.totalorder %s22, 1
      %p82 = por %p80, %p81
      %p83 = scmp.ne.s32.totalorder %s74, %s75
      %p84 = scmp.eq.s32.totalorder %s22, 0
      %p85 = por %p83, %p84
      %p86 = scmp.ne.s32.totalorder %s74, %s75
      %p87 = scmp.eq.s32.totalorder %s23, 1
      %p88 = por %p86, %p87
      %p90 = scmp.ne.s32.totalorder %s75, %s89
      %p91 = scmp.eq.s32.totalorder %s23, 0
      %p92 = por %p90, %p91
      %s94 = sadd.s32 %s93, 1
      %p97 = scmp.eq.s32.totalorder %s17, 1
      %p98 = scmp.ne.s32.totalorder %s93, %s95
      %p99 = scmp.eq.s32.totalorder %s17, 0
      %p100 = por %p98, %p99
      %p101 = scmp.ne.s32.totalorder %s93, %s95
      %p102 = scmp.eq.s32.totalorder %s22, 1
      %p103 = por %p101, %p102
      %p104 = scmp.ne.s32.totalorder %s95, %s96
      %p105 = scmp.eq.s32.totalorder %s22, 0
      %p106 = por %p104, %p105
      %p107 = scmp.ne.s32.totalorder %s95, %s96
      %p108 = scmp.eq.s32.totalorder %s23, 1
      %p109 = por %p107, %p108
      %p111 = scmp.ne.s32.totalorder %s96, %s110
      %p112 = scmp.eq.s32.totalorder %s23, 0
      %p113 = por %p111, %p112
      %s115 = sadd.s32 %s114, 1
      %p118 = scmp.eq.s32.totalorder %s17, 1
      %p119 = scmp.ne.s32.totalorder %s114, %s116
      %p120 = scmp.eq.s32.totalorder %s17, 0
      %p121 = por %p119, %p120
      %p122 = scmp.ne.s32.totalorder %s114, %s116
      %p123 = scmp.eq.s32.totalorder %s22, 1
      %p124 = por %p122, %p123
      %p125 = scmp.ne.s32.totalorder %s116, %s117
      %p126 = scmp.eq.s32.totalorder %s22, 0
      %p127 = por %p125, %p126
      %p128 = scmp.ne.s32.totalorder %s116, %s117
      %p129 = scmp.eq.s32.totalorder %s23, 1
      %p130 = por %p128, %p129
      %p132 = scmp.ne.s32.totalorder %s117, %s131
      %p133 = scmp.eq.s32.totalorder %s23, 0
      %p134 = por %p132, %p133
      %s136 = sadd.s32 %s135, 1
      %p139 = scmp.eq.s32.totalorder %s17, 1
      %p140 = scmp.ne.s32.totalorder %s135, %s137
      %p141 = scmp.eq.s32.totalorder %s17, 0
      %p142 = por %p140, %p141
      %p143 = scmp.ne.s32.totalorder %s135, %s137
      %p144 = scmp.eq.s32.totalorder %s22, 1
      %p145 = por %p143, %p144
      %p146 = scmp.ne.s32.totalorder %s137, %s138
      %p147 = scmp.eq.s32.totalorder %s22, 0
      %p148 = por %p146, %p147
      %p149 = scmp.ne.s32.totalorder %s137, %s138
      %p150 = scmp.eq.s32.totalorder %s23, 1
      %p151 = por %p149, %p150
      %p153 = scmp.ne.s32.totalorder %s138, %s152
      %p154 = scmp.eq.s32.totalorder %s23, 0
      %p155 = por %p153, %p154
      %s156 = ssub.s32 %s17, %s24
      %p157 = scmp.eq.s32.totalorder %s156, 0
      %s159 = sadd.s32 %s158, 1
      %s160 = scalar_select %p157, %s158, %s159
      %p163 = pneg %p157
      %p164 = scmp.eq.s32.totalorder %s17, 1
      %p165 = por %p163, %p164
      %p166 = scmp.ne.s32.totalorder %s158, %s161
      %p167 = scmp.eq.s32.totalorder %s17, 0
      %p168 = por %p166, %p167
      %p169 = scmp.ne.s32.totalorder %s158, %s161
      %p170 = scmp.eq.s32.totalorder %s22, 1
      %p171 = por %p169, %p170
      %p172 = scmp.ne.s32.totalorder %s161, %s162
      %p173 = scmp.eq.s32.totalorder %s22, 0
      %p174 = por %p172, %p173
      %p175 = scmp.ne.s32.totalorder %s161, %s162
      %p176 = scmp.eq.s32.totalorder %s23, 1
      %p177 = por %p175, %p176
      %p179 = scmp.ne.s32.totalorder %s162, %s178
      %p180 = scmp.eq.s32.totalorder %s23, 0
      %p181 = por %p179, %p180
      %p182 = scmp.le.s32.totalorder 1, %s17
      %p183 = scmp.lt.s32.totalorder %s17, 3
      %p184 = pnand %p182, %p183
      %p185 = pneg %p184
      // Predicated region
      $region9: #{tpu_custom_call.1} parent=5 // pred_check
        _
      $region10: #{tpu_custom_call.1} parent=5 // pred_check_branch
        %187 = sbr.rel (%p184) target = $region12
      $region11: #{tpu_custom_call.1} parent=5 // pred_region
        %s188 = ssub.s32 %s17, 1
        // Predicated region
        $region13: #{tpu_custom_call.1} parent=11 // pred_check
          %p189 = pneg %p38
        $region14: #{tpu_custom_call.1} parent=11 // pred_check_branch
          %191 = sbr.rel (%p189) target = $region16
        $region15: #{tpu_custom_call.1} parent=11 // pred_region
          %s193 = ssub.s32 128, 128
          %194 = vsyncadd [#allocation3], %s193
          %s196 = sshll.u32 [#allocation2], 4
          %s197 = int_to_ptr.vmem [resolvable:$true] %s196
          %199 = dma.hbm_to_vmem [thread:$0]  %s0, 128, %s197, [#allocation3]
        $region16: #{tpu_custom_call.1} parent=11 // pred_fallthru
          _
        // Predicated region
        $region17: #{tpu_custom_call.1} parent=11 // pred_check
          %p200 = pneg %p85
        $region18: #{tpu_custom_call.1} parent=11 // pred_check_branch
          %202 = sbr.rel (%p200) target = $region20
        $region19: #{tpu_custom_call.1} parent=11 // pred_region
          %s204 = ssub.s32 1536, 1536
          %205 = vsyncadd [#allocation7], %s204
          %s206 = sshll.u32 [#allocation6], 4
          %s207 = int_to_ptr.vmem [resolvable:$true] %s206
          %212 = dma.hbm_to_vmem [thread:$0]  %s2, 1536, %s207, [#allocation7], 128, 128, 8
        $region20: #{tpu_custom_call.1} parent=11 // pred_fallthru
          _
        // Predicated region
        $region21: #{tpu_custom_call.1} parent=11 // pred_check
          %p213 = pneg %p106
        $region22: #{tpu_custom_call.1} parent=11 // pred_check_branch
          %215 = sbr.rel (%p213) target = $region24
        $region23: #{tpu_custom_call.1} parent=11 // pred_region
          %s217 = ssub.s32 1536, 1536
          %218 = vsyncadd [#allocation7], %s217
          %s219 = sshll.u32 [#allocation8], 4
          %s220 = int_to_ptr.vmem [resolvable:$true] %s219
          %225 = dma.hbm_to_vmem [thread:$0]  %s3, 1536, %s220, [#allocation7], 128, 128, 8
        $region24: #{tpu_custom_call.1} parent=11 // pred_fallthru
          _
        // Predicated region
        $region25: #{tpu_custom_call.1} parent=11 // pred_check
          %p226 = pneg %p127
        $region26: #{tpu_custom_call.1} parent=11 // pred_check_branch
          %228 = sbr.rel (%p226) target = $region28
        $region27: #{tpu_custom_call.1} parent=11 // pred_region
          _
        $region28: #{tpu_custom_call.1} parent=11 // pred_fallthru
          _
        // Predicated region
        $region29: #{tpu_custom_call.1} parent=11 // pred_check
          %p229 = pneg %p148
        $region30: #{tpu_custom_call.1} parent=11 // pred_check_branch
          %231 = sbr.rel (%p229) target = $region32
        $region31: #{tpu_custom_call.1} parent=11 // pred_region
          _
        $region32: #{tpu_custom_call.1} parent=11 // pred_fallthru
          _
      $region12: #{tpu_custom_call.1} parent=5 // pred_fallthru
        _
      %p232 = scmp.lt.s32.totalorder %s17, 2
      // Predicated region
      $region33: #{tpu_custom_call.1} parent=5 // pred_check
        %p233 = pneg %p232
      $region34: #{tpu_custom_call.1} parent=5 // pred_check_branch
        %235 = sbr.rel (%p233) target = $region36
      $region35: #{tpu_custom_call.1} parent=5 // pred_region
        // Predicated region
        $region37: #{tpu_custom_call.1} parent=35 // pred_check
          %p236 = pneg %p58
        $region38: #{tpu_custom_call.1} parent=35 // pred_check_branch
          %238 = sbr.rel (%p236) target = $region40
        $region39: #{tpu_custom_call.1} parent=35 // pred_region
          %s239 = sand.u32 %s48, 1
          %s240 = sand.u32 %s48, 1
          %s241 = smul.addr %s240, 32
          %s242 = scalar_lea.vmem [#allocation5], %s241
          %s243 = smul.u32 2, %s17
          %s244 = smul.addr %s243, 8
          %s245 = scalar_lea.vmem %s1, %s244
          // Predicated region
          $region41: #{tpu_custom_call.1} parent=39 // pred_check
            _
          $region42: #{tpu_custom_call.1} parent=39 // pred_check_branch
            %247 = sbr.rel (0) target = $region44
          $region43: #{tpu_custom_call.1} parent=39 // pred_region
            // Predicated region
            $region45: #{tpu_custom_call.1} parent=43 // pred_check
              _
            $region46: #{tpu_custom_call.1} parent=43 // pred_check_branch
              %249 = sbr.rel (0) target = $region48
            $region47: #{tpu_custom_call.1} parent=43 // pred_region
              loop: start=0, step=1, limit=1
              $region49: #{tpu_custom_call.1} parent=47 // loop_pre_header
                _
              $region50: #{tpu_custom_call.1} parent=47 // loop_header
                %s251 = sphi 0, %s255
                %p252 = scmp.ge.s32.totalorder %s251, 1
                %s256 = sphi %s245, %s245
                %s257 = sphi %s242, %s242
              $region51: #{tpu_custom_call.1} parent=47 // loop_header_branch
                %254 = sbr.rel (%p252) target = $region55
              $region52: #{tpu_custom_call.1} parent=47 // loop_body
                %v258 = vld [vmem:[%s256] sm:$0xff]
                %259 = vst [vmem:[%s257] sm:$0xff] %v258
                %v260 = vld [vmem:[%s256 + $0x8] sm:$0xff]
                %261 = vst [vmem:[%s257 + $0x8] sm:$0xff] %v260
                %v262 = vld [vmem:[%s256 + $0x20] sm:$0xff]
                %263 = vst [vmem:[%s257 + $0x10] sm:$0xff] %v262
                %v264 = vld [vmem:[%s256 + $0x28] sm:$0xff]
                %265 = vst [vmem:[%s257 + $0x18] sm:$0xff] %v264
              $region53: #{tpu_custom_call.1} parent=47 // loop_footer
                %s255 = sadd.s32 1, %s251
              $region54: #{tpu_custom_call.1} parent=47 // loop_footer_branch
                %250 = sbr.rel target = $region50
              $region55: #{tpu_custom_call.1} parent=47 // loop_exit
                _
            $region48: #{tpu_custom_call.1} parent=43 // pred_fallthru
              _
            // Predicated region
            $region56: #{tpu_custom_call.1} parent=43 // pred_check
              _
            $region57: #{tpu_custom_call.1} parent=43 // pred_check_branch
              %267 = sbr.rel target = $region59
            $region58: #{tpu_custom_call.1} parent=43 // pred_region
              _
            $region59: #{tpu_custom_call.1} parent=43 // pred_fallthru
              _
          $region44: #{tpu_custom_call.1} parent=39 // pred_fallthru
            _
          %268 = vnop
        $region40: #{tpu_custom_call.1} parent=35 // pred_fallthru
          _
      $region36: #{tpu_custom_call.1} parent=5 // pred_fallthru
        _
      %p269 = scmp.le.s32.totalorder 1, %s17
      %p270 = scmp.lt.s32.totalorder %s17, 3
      %p271 = pnand %p269, %p270
      %p272 = pneg %p271
      // Predicated region
      $region60: #{tpu_custom_call.1} parent=5 // pred_check
        _
      $region61: #{tpu_custom_call.1} parent=5 // pred_check_branch
        %274 = sbr.rel (%p271) target = $region63
      $region62: #{tpu_custom_call.1} parent=5 // pred_region
        %s275 = ssub.s32 %s17, 1
        // Predicated region
        $region64: #{tpu_custom_call.1} parent=62 // pred_check
          %p276 = pneg %p38
        $region65: #{tpu_custom_call.1} parent=62 // pred_check_branch
          %278 = sbr.rel (%p276) target = $region67
        $region66: #{tpu_custom_call.1} parent=62 // pred_region
          %279 = dma.done [#allocation3], 128
        $region67: #{tpu_custom_call.1} parent=62 // pred_fallthru
          _
        %s280 = sand.u32 %s51, 1
        %s281 = sand.u32 %s51, 1
        %s282 = smul.addr %s281, 32
        %s283 = scalar_lea.vmem [#allocation5], %s282
        // Predicated region
        $region68: #{tpu_custom_call.1} parent=62 // pred_check
          %p284 = pneg %p64
        $region69: #{tpu_custom_call.1} parent=62 // pred_check_branch
          %286 = sbr.rel (%p284) target = $region71
        $region70: #{tpu_custom_call.1} parent=62 // pred_region
          _
        $region71: #{tpu_custom_call.1} parent=62 // pred_fallthru
          _
        // Predicated region
        $region72: #{tpu_custom_call.1} parent=62 // pred_check
          %p287 = pneg %p85
        $region73: #{tpu_custom_call.1} parent=62 // pred_check_branch
          %289 = sbr.rel (%p287) target = $region75
        $region74: #{tpu_custom_call.1} parent=62 // pred_region
          %290 = dma.done [#allocation7], 1536
        $region75: #{tpu_custom_call.1} parent=62 // pred_fallthru
          _
        // Predicated region
        $region76: #{tpu_custom_call.1} parent=62 // pred_check
          %p291 = pneg %p106
        $region77: #{tpu_custom_call.1} parent=62 // pred_check_branch
          %293 = sbr.rel (%p291) target = $region79
        $region78: #{tpu_custom_call.1} parent=62 // pred_region
          %294 = dma.done [#allocation7], 1536
        $region79: #{tpu_custom_call.1} parent=62 // pred_fallthru
          _
        %p295 = pneg %p38
        %p296 = pneg %p35
        %s297 = sand.u32 %s51, 1
        %s298 = sand.u32 %s51, 1
        %s299 = smul.addr %s298, 32
        %s300 = scalar_lea.vmem [#allocation5], %s299
        %p301 = pneg %p64
        %p302 = pneg %p61
        %p303 = pneg %p85
        %p304 = pneg %p82
        %p305 = pneg %p106
        %p306 = pneg %p103
        %p307 = pneg %p127
        %p308 = pneg %p124
        %p309 = pneg %p148
        %p310 = pneg %p145
        %p311 = pneg %p174
        %p312 = pneg %p171
        %s313 = sand.u32 %s161, 1
        %s314 = scalar_lea.sflag [#allocation4], %s313
        %s315 = sand.u32 %s161, 1
        %s316 = smul.addr %s315, 32
        %s317 = scalar_lea.vmem [#allocation9], %s316
        %s318 = smul.u32 2, %s22
        %s319 = smul.u32 2, %s22
        %v320 = vld [vmem:[#allocation2] sm:$0x77]
        %v321 = vld [vmem:[%s283] sm:$0xff]
        %v322 = vld [vmem:[%s283 + $0x8] sm:$0xff]
        %v323 = vld [vmem:[%s283 + $0x10] sm:$0xff]
        %v324 = vld [vmem:[%s283 + $0x18] sm:$0xff]
        %325 = vrot.lane.b32.xlu0 %v321, 1
        %v326 = vpop.permute.xlu0 %325
        %327 = vrot.lane.b32.xlu0 %v323, 1
        %v328 = vpop.permute.xlu0 %327
        %329 = vrot.lane.b32.xlu0 %v322, 1
        %v330 = vpop.permute.xlu0 %329
        %331 = vrot.lane.b32.xlu0 %v324, 1
        %v332 = vpop.permute.xlu0 %331
        %v333 = vlaneseq
        %v334 = vand.u32 %v333, 127
        %vm335 = vcmp.lt.s32.totalorder %v334, 1
        %v336 = vsel %vm335, %v326, %v330
        %v337 = vsel %vm335, %v328, %v332
        %v338 = vsel %vm335, %v330, %v326
        %v339 = vsel %vm335, %v332, %v328
        %v341 = vlaneseq
        %v342 = vshrl.u32 %v341, 7
        %v343 = vsub.s32 0, %v342
        %v344 = vrot.slane %v320, %v343
        %v345 = vlaneseq
        %v346 = vshrl.u32 %v345, 7
        %v347 = vsub.s32 4, %v346
        %v348 = vrot.slane %v320, %v347
        %v351 = vlaneseq
        %v352 = vshrl.u32 %v351, 7
        %v353 = vsub.s32 0, %v352
        %v354 = vrot.slane %v344, %v353
        %v355 = vlaneseq
        %v356 = vshrl.u32 %v355, 7
        %v357 = vsub.s32 0, %v356
        %v358 = vrot.slane %v348, %v357
        %v359 = vmul.f32 %v338, %v354
        %v360 = vmul.f32 %v336, %v358
        %v361 = vmul.f32 %v339, %v354
        %v362 = vmul.f32 %v337, %v358
        %363 = vrot.lane.b32.xlu0 %v321, 127
        %v364 = vpop.permute.xlu0 %363
        %365 = vrot.lane.b32.xlu0 %v323, 127
        %v366 = vpop.permute.xlu0 %365
        %367 = vrot.lane.b32.xlu0 %v322, 127
        %v368 = vpop.permute.xlu0 %367
        %369 = vrot.lane.b32.xlu0 %v324, 127
        %v370 = vpop.permute.xlu0 %369
        %vm371 = vcmp.lt.s32.totalorder %v334, 127
        %v372 = vsel %vm371, %v364, %v368
        %v373 = vsel %vm371, %v366, %v370
        %v374 = vsel %vm371, %v368, %v364
        %v375 = vsel %vm371, %v370, %v366
        %v376 = vlaneseq
        %v377 = vshrl.u32 %v376, 7
        %v378 = vsub.s32 1, %v377
        %v379 = vrot.slane %v320, %v378
        %v380 = vlaneseq
        %v381 = vshrl.u32 %v380, 7
        %v382 = vsub.s32 5, %v381
        %v383 = vrot.slane %v320, %v382
        %v386 = vlaneseq
        %v387 = vshrl.u32 %v386, 7
        %v388 = vsub.s32 1, %v387
        %v389 = vrot.slane %v379, %v388
        %v390 = vlaneseq
        %v391 = vshrl.u32 %v390, 7
        %v392 = vsub.s32 1, %v391
        %v393 = vrot.slane %v383, %v392
        %v394 = vmul.f32 %v372, %v389
        %v395 = vmul.f32 %v374, %v393
        %v396 = vmul.f32 %v373, %v389
        %v397 = vmul.f32 %v375, %v393
        %s398 = scalar_lea.vmem [#allocation6], 16
        %v399 = vld [vmem:[%s398] sm:$0xff]
        %v400 = vld [vmem:[%s398 + $0x8] sm:$0xff]
        %v401 = vld [vmem:[#allocation6] sm:$0xff]
        %v402 = vld [vmem:[#allocation6 + $0x8] sm:$0xff]
        %vm403 = vcmask 130048
        %v405 = vsel %vm403, %v401, 0
        %v408 = vsel %vm403, %v402, 0
        %410 = vmatprep.subr.mxu0 %v360
        %411 = vmatpush1.msra.mxu0 %v359
        %412 = vmatprep.subr.mxu0 %v362
        %413 = vmatpush1.msra.mxu0 %v361
        %414 = vmatprep.subr.mxu0 0.0
        %415 = vmatpush1.msra.mxu0 0.0
        %416 = vmatprep.subr.mxu0 0.0
        %417 = vmatpush1.msra.mxu0 0.0
        %418 = vmatprep.subr.mxu0 0.0
        %419 = vmatpush1.msra.mxu0 0.0
        %420 = vmatprep.subr.mxu0 0.0
        %421 = vmatpush1.msra.mxu0 0.0
        %422 = vmatprep.subr.mxu0 0.0
        %423 = vmatpush1.msra.mxu0 0.0
        %424 = vmatprep.subr.mxu0 0.0
        %425 = vmatpush1.msra.mxu0 0.0
        %426 = vmatprep.subr.mxu0 0.0
        %427 = vmatpush1.msra.mxu0 0.0
        %428 = vmatprep.subr.mxu0 0.0
        %429 = vmatpush1.msra.mxu0 0.0
        %430 = vmatprep.subr.mxu0 0.0
        %431 = vmatpush1.msra.mxu0 0.0
        %432 = vmatprep.subr.mxu0 0.0
        %433 = vmatpush1.msra.mxu0 0.0
        %434 = vmatprep.subr.mxu0 0.0
        %435 = vmatpush1.msra.mxu0 0.0
        %436 = vmatprep.subr.mxu0 0.0
        %437 = vmatpush1.msra.mxu0 0.0
        %438 = vmatprep.subr.mxu0 0.0
        %439 = vmatpush1.msra.mxu0 0.0
        %440 = vmatprep.subr.mxu0 0.0
        %441 = vmatpush1.msra.mxu0 0.0
        %442 = vmatprep.subr.mxu0 0.0
        %443 = vmatpush1.msra.mxu0 0.0
        %444 = vmatprep.subr.mxu0 0.0
        %445 = vmatpush1.msra.mxu0 0.0
        %446 = vmatprep.subr.mxu0 0.0
        %447 = vmatpush1.msra.mxu0 0.0
        %448 = vmatprep.subr.mxu0 0.0
        %449 = vmatpush1.msra.mxu0 0.0
        %450 = vmatprep.subr.mxu0 0.0
        %451 = vmatpush1.msra.mxu0 0.0
        %452 = vmatprep.subr.mxu0 0.0
        %453 = vmatpush1.msra.mxu0 0.0
        %454 = vmatprep.subr.mxu0 0.0
        %455 = vmatpush1.msra.mxu0 0.0
        %456 = vmatprep.subr.mxu0 0.0
        %457 = vmatpush1.msra.mxu0 0.0
        %458 = vmatprep.subr.mxu0 0.0
        %459 = vmatpush1.msra.mxu0 0.0
        %460 = vmatprep.subr.mxu0 0.0
        %461 = vmatpush1.msra.mxu0 0.0
        %462 = vmatprep.subr.mxu0 0.0
        %463 = vmatpush1.msra.mxu0 0.0
        %464 = vmatprep.subr.mxu0 0.0
        %465 = vmatpush1.msra.mxu0 0.0
        %466 = vmatprep.subr.mxu0 0.0
        %467 = vmatpush1.msra.mxu0 0.0
        %468 = vmatprep.subr.mxu0 0.0
        %469 = vmatpush1.msra.mxu0 0.0
        %470 = vmatprep.subr.mxu0 0.0
        %471 = vmatpush1.msra.mxu0 0.0
        %472 = vmatprep.subr.mxu0 0.0
        %473 = vmatpush1.msra.mxu0 0.0
        %474 = vmatprep.mubr.f32.mxu0 0.0
        %475 = vmatmul.mubr.f32.gmra.mrb[0].mxu0 %v405
        %v476 = vpop.f32.mrb[0].mxu0
        %v477 = vadd.f32 0.0, %v476
        %v478 = vpop.f32.mrb[0].mxu0
        %v479 = vadd.f32 0.0, %v478
        %480 = vmatprep.mubr.f32.mxu0 0.0
        %481 = vmatmul.mubr.f32.gmra.mrb[0].mxu0 %v408
        %v482 = vpop.f32.mrb[0].mxu0
        %v483 = vadd.f32 0.0, %v482
        %v484 = vpop.f32.mrb[0].mxu0
        %v485 = vadd.f32 0.0, %v484
        %486 = vdwg.mxu0
        %v488 = vsel %vm403, %v399, 0
        %v491 = vsel %vm403, %v400, 0
        %493 = vmatprep.subr.mxu0 %v322
        %494 = vmatpush1.msra.mxu0 %v321
        %495 = vmatprep.subr.mxu0 %v324
        %496 = vmatpush1.msra.mxu0 %v323
        %497 = vmatprep.subr.mxu0 0.0
        %498 = vmatpush1.msra.mxu0 0.0
        %499 = vmatprep.subr.mxu0 0.0
        %500 = vmatpush1.msra.mxu0 0.0
        %501 = vmatprep.subr.mxu0 0.0
        %502 = vmatpush1.msra.mxu0 0.0
        %503 = vmatprep.subr.mxu0 0.0
        %504 = vmatpush1.msra.mxu0 0.0
        %505 = vmatprep.subr.mxu0 0.0
        %506 = vmatpush1.msra.mxu0 0.0
        %507 = vmatprep.subr.mxu0 0.0
        %508 = vmatpush1.msra.mxu0 0.0
        %509 = vmatprep.subr.mxu0 0.0
        %510 = vmatpush1.msra.mxu0 0.0
        %511 = vmatprep.subr.mxu0 0.0
        %512 = vmatpush1.msra.mxu0 0.0
        %513 = vmatprep.subr.mxu0 0.0
        %514 = vmatpush1.msra.mxu0 0.0
        %515 = vmatprep.subr.mxu0 0.0
        %516 = vmatpush1.msra.mxu0 0.0
        %517 = vmatprep.subr.mxu0 0.0
        %518 = vmatpush1.msra.mxu0 0.0
        %519 = vmatprep.subr.mxu0 0.0
        %520 = vmatpush1.msra.mxu0 0.0
        %521 = vmatprep.subr.mxu0 0.0
        %522 = vmatpush1.msra.mxu0 0.0
        %523 = vmatprep.subr.mxu0 0.0
        %524 = vmatpush1.msra.mxu0 0.0
        %525 = vmatprep.subr.mxu0 0.0
        %526 = vmatpush1.msra.mxu0 0.0
        %527 = vmatprep.subr.mxu0 0.0
        %528 = vmatpush1.msra.mxu0 0.0
        %529 = vmatprep.subr.mxu0 0.0
        %530 = vmatpush1.msra.mxu0 0.0
        %531 = vmatprep.subr.mxu0 0.0
        %532 = vmatpush1.msra.mxu0 0.0
        %533 = vmatprep.subr.mxu0 0.0
        %534 = vmatpush1.msra.mxu0 0.0
        %535 = vmatprep.subr.mxu0 0.0
        %536 = vmatpush1.msra.mxu0 0.0
        %537 = vmatprep.subr.mxu0 0.0
        %538 = vmatpush1.msra.mxu0 0.0
        %539 = vmatprep.subr.mxu0 0.0
        %540 = vmatpush1.msra.mxu0 0.0
        %541 = vmatprep.subr.mxu0 0.0
        %542 = vmatpush1.msra.mxu0 0.0
        %543 = vmatprep.subr.mxu0 0.0
        %544 = vmatpush1.msra.mxu0 0.0
        %545 = vmatprep.subr.mxu0 0.0
        %546 = vmatpush1.msra.mxu0 0.0
        %547 = vmatprep.subr.mxu0 0.0
        %548 = vmatpush1.msra.mxu0 0.0
        %549 = vmatprep.subr.mxu0 0.0
        %550 = vmatpush1.msra.mxu0 0.0
        %551 = vmatprep.subr.mxu0 0.0
        %552 = vmatpush1.msra.mxu0 0.0
        %553 = vmatprep.subr.mxu0 0.0
        %554 = vmatpush1.msra.mxu0 0.0
        %555 = vmatprep.subr.mxu0 0.0
        %556 = vmatpush1.msra.mxu0 0.0
        %557 = vmatprep.mubr.f32.mxu0 0.0
        %558 = vmatmul.mubr.f32.gmra.mrb[0].mxu0 %v488
        %v559 = vpop.f32.mrb[0].mxu0
        %v560 = vadd.f32 %v477, %v559
        %v561 = vpop.f32.mrb[0].mxu0
        %v562 = vadd.f32 %v479, %v561
        %563 = vmatprep.mubr.f32.mxu0 0.0
        %564 = vmatmul.mubr.f32.gmra.mrb[0].mxu0 %v491
        %v565 = vpop.f32.mrb[0].mxu0
        %v566 = vadd.f32 %v483, %v565
        %v567 = vpop.f32.mrb[0].mxu0
        %v568 = vadd.f32 %v485, %v567
        %569 = vdwg.mxu0
        %s570 = scalar_lea.vmem [#allocation6], 32
        %v571 = vld [vmem:[%s570] sm:$0xff]
        %v572 = vld [vmem:[%s570 + $0x8] sm:$0xff]
        %v574 = vsel %vm403, %v571, 0
        %v577 = vsel %vm403, %v572, 0
        %579 = vmatprep.subr.mxu0 %v395
        %580 = vmatpush1.msra.mxu0 %v394
        %581 = vmatprep.subr.mxu0 %v397
        %582 = vmatpush1.msra.mxu0 %v396
        %583 = vmatprep.subr.mxu0 0.0
        %584 = vmatpush1.msra.mxu0 0.0
        %585 = vmatprep.subr.mxu0 0.0
        %586 = vmatpush1.msra.mxu0 0.0
        %587 = vmatprep.subr.mxu0 0.0
        %588 = vmatpush1.msra.mxu0 0.0
        %589 = vmatprep.subr.mxu0 0.0
        %590 = vmatpush1.msra.mxu0 0.0
        %591 = vmatprep.subr.mxu0 0.0
        %592 = vmatpush1.msra.mxu0 0.0
        %593 = vmatprep.subr.mxu0 0.0
        %594 = vmatpush1.msra.mxu0 0.0
        %595 = vmatprep.subr.mxu0 0.0
        %596 = vmatpush1.msra.mxu0 0.0
        %597 = vmatprep.subr.mxu0 0.0
        %598 = vmatpush1.msra.mxu0 0.0
        %599 = vmatprep.subr.mxu0 0.0
        %600 = vmatpush1.msra.mxu0 0.0
        %601 = vmatprep.subr.mxu0 0.0
        %602 = vmatpush1.msra.mxu0 0.0
        %603 = vmatprep.subr.mxu0 0.0
        %604 = vmatpush1.msra.mxu0 0.0
        %605 = vmatprep.subr.mxu0 0.0
        %606 = vmatpush1.msra.mxu0 0.0
        %607 = vmatprep.subr.mxu0 0.0
        %608 = vmatpush1.msra.mxu0 0.0
        %609 = vmatprep.subr.mxu0 0.0
        %610 = vmatpush1.msra.mxu0 0.0
        %611 = vmatprep.subr.mxu0 0.0
        %612 = vmatpush1.msra.mxu0 0.0
        %613 = vmatprep.subr.mxu0 0.0
        %614 = vmatpush1.msra.mxu0 0.0
        %615 = vmatprep.subr.mxu0 0.0
        %616 = vmatpush1.msra.mxu0 0.0
        %617 = vmatprep.subr.mxu0 0.0
        %618 = vmatpush1.msra.mxu0 0.0
        %619 = vmatprep.subr.mxu0 0.0
        %620 = vmatpush1.msra.mxu0 0.0
        %621 = vmatprep.subr.mxu0 0.0
        %622 = vmatpush1.msra.mxu0 0.0
        %623 = vmatprep.subr.mxu0 0.0
        %624 = vmatpush1.msra.mxu0 0.0
        %625 = vmatprep.subr.mxu0 0.0
        %626 = vmatpush1.msra.mxu0 0.0
        %627 = vmatprep.subr.mxu0 0.0
        %628 = vmatpush1.msra.mxu0 0.0
        %629 = vmatprep.subr.mxu0 0.0
        %630 = vmatpush1.msra.mxu0 0.0
        %631 = vmatprep.subr.mxu0 0.0
        %632 = vmatpush1.msra.mxu0 0.0
        %633 = vmatprep.subr.mxu0 0.0
        %634 = vmatpush1.msra.mxu0 0.0
        %635 = vmatprep.subr.mxu0 0.0
        %636 = vmatpush1.msra.mxu0 0.0
        %637 = vmatprep.subr.mxu0 0.0
        %638 = vmatpush1.msra.mxu0 0.0
        %639 = vmatprep.subr.mxu0 0.0
        %640 = vmatpush1.msra.mxu0 0.0
        %641 = vmatprep.subr.mxu0 0.0
        %642 = vmatpush1.msra.mxu0 0.0
        %643 = vmatprep.mubr.f32.mxu0 0.0
        %644 = vmatmul.mubr.f32.gmra.mrb[0].mxu0 %v574
        %v645 = vpop.f32.mrb[0].mxu0
        %v646 = vadd.f32 0.0, %v645
        %v647 = vpop.f32.mrb[0].mxu0
        %v648 = vadd.f32 0.0, %v647
        %649 = vmatprep.mubr.f32.mxu0 0.0
        %650 = vmatmul.mubr.f32.gmra.mrb[0].mxu0 %v577
        %v651 = vpop.f32.mrb[0].mxu0
        %v652 = vadd.f32 0.0, %v651
        %v653 = vpop.f32.mrb[0].mxu0
        %v654 = vadd.f32 0.0, %v653
        %655 = vdwg.mxu0
        %v656 = vadd.f32 %v560, %v646
        %v657 = vadd.f32 %v562, %v648
        %v658 = vadd.f32 %v566, %v652
        %v659 = vadd.f32 %v568, %v654
        %v660 = vld [vmem:[%s4] sm:$0xff]
        %v661 = vld [vmem:[%s4 + $0x8] sm:$0xff]
        %663 = vset.pattern.permute.xlu0 0
        %664 = vperm.xlu0 %663, %v660
        %v665 = vpop.permute.xlu0 %664
        %668 = vset.pattern.permute.xlu0 0
        %669 = vperm.xlu0 %668, %v661
        %v670 = vpop.permute.xlu0 %669
        %v672 = vadd.f32 %v656, %v665
        %v673 = vadd.f32 %v657, %v665
        %v674 = vadd.f32 %v658, %v670
        %v675 = vadd.f32 %v659, %v670
        %v676 = vmax.f32 %v672, 0.0
        %v677 = vmax.f32 %v673, 0.0
        %v678 = vmax.f32 %v674, 0.0
        %v679 = vmax.f32 %v675, 0.0
        %680 = vrot.lane.b32.xlu0 %v676, 1
        %v681 = vpop.permute.xlu0 %680
        %682 = vrot.lane.b32.xlu0 %v678, 1
        %v683 = vpop.permute.xlu0 %682
        %684 = vrot.lane.b32.xlu0 %v677, 1
        %v685 = vpop.permute.xlu0 %684
        %686 = vrot.lane.b32.xlu0 %v679, 1
        %v687 = vpop.permute.xlu0 %686
        %v688 = vsel %vm335, %v681, %v685
        %v689 = vsel %vm335, %v683, %v687
        %v690 = vsel %vm335, %v685, %v681
        %v691 = vsel %vm335, %v687, %v683
        %v692 = vmul.f32 %v690, %v354
        %v693 = vmul.f32 %v688, %v358
        %v694 = vmul.f32 %v691, %v354
        %v695 = vmul.f32 %v689, %v358
        %696 = vrot.lane.b32.xlu0 %v676, 127
        %v697 = vpop.permute.xlu0 %696
        %698 = vrot.lane.b32.xlu0 %v678, 127
        %v699 = vpop.permute.xlu0 %698
        %700 = vrot.lane.b32.xlu0 %v677, 127
        %v701 = vpop.permute.xlu0 %700
        %702 = vrot.lane.b32.xlu0 %v679, 127
        %v703 = vpop.permute.xlu0 %702
        %v704 = vsel %vm371, %v697, %v701
        %v705 = vsel %vm371, %v699, %v703
        %v706 = vsel %vm371, %v701, %v697
        %v707 = vsel %vm371, %v703, %v699
        %v708 = vmul.f32 %v704, %v389
        %v709 = vmul.f32 %v706, %v393
        %v710 = vmul.f32 %v705, %v389
        %v711 = vmul.f32 %v707, %v393
        %s712 = scalar_lea.vmem [#allocation8], 16
        %v713 = vld [vmem:[%s712] sm:$0xff]
        %v714 = vld [vmem:[%s712 + $0x8] sm:$0xff]
        %v715 = vld [vmem:[#allocation8] sm:$0xff]
        %v716 = vld [vmem:[#allocation8 + $0x8] sm:$0xff]
        %v718 = vsel %vm403, %v715, 0
        %v721 = vsel %vm403, %v716, 0
        %723 = vmatprep.subr.mxu0 %v693
        %724 = vmatpush1.msra.mxu0 %v692
        %725 = vmatprep.subr.mxu0 %v695
        %726 = vmatpush1.msra.mxu0 %v694
        %727 = vmatprep.subr.mxu0 0.0
        %728 = vmatpush1.msra.mxu0 0.0
        %729 = vmatprep.subr.mxu0 0.0
        %730 = vmatpush1.msra.mxu0 0.0
        %731 = vmatprep.subr.mxu0 0.0
        %732 = vmatpush1.msra.mxu0 0.0
        %733 = vmatprep.subr.mxu0 0.0
        %734 = vmatpush1.msra.mxu0 0.0
        %735 = vmatprep.subr.mxu0 0.0
        %736 = vmatpush1.msra.mxu0 0.0
        %737 = vmatprep.subr.mxu0 0.0
        %738 = vmatpush1.msra.mxu0 0.0
        %739 = vmatprep.subr.mxu0 0.0
        %740 = vmatpush1.msra.mxu0 0.0
        %741 = vmatprep.subr.mxu0 0.0
        %742 = vmatpush1.msra.mxu0 0.0
        %743 = vmatprep.subr.mxu0 0.0
        %744 = vmatpush1.msra.mxu0 0.0
        %745 = vmatprep.subr.mxu0 0.0
        %746 = vmatpush1.msra.mxu0 0.0
        %747 = vmatprep.subr.mxu0 0.0
        %748 = vmatpush1.msra.mxu0 0.0
        %749 = vmatprep.subr.mxu0 0.0
        %750 = vmatpush1.msra.mxu0 0.0
        %751 = vmatprep.subr.mxu0 0.0
        %752 = vmatpush1.msra.mxu0 0.0
        %753 = vmatprep.subr.mxu0 0.0
        %754 = vmatpush1.msra.mxu0 0.0
        %755 = vmatprep.subr.mxu0 0.0
        %756 = vmatpush1.msra.mxu0 0.0
        %757 = vmatprep.subr.mxu0 0.0
        %758 = vmatpush1.msra.mxu0 0.0
        %759 = vmatprep.subr.mxu0 0.0
        %760 = vmatpush1.msra.mxu0 0.0
        %761 = vmatprep.subr.mxu0 0.0
        %762 = vmatpush1.msra.mxu0 0.0
        %763 = vmatprep.subr.mxu0 0.0
        %764 = vmatpush1.msra.mxu0 0.0
        %765 = vmatprep.subr.mxu0 0.0
        %766 = vmatpush1.msra.mxu0 0.0
        %767 = vmatprep.subr.mxu0 0.0
        %768 = vmatpush1.msra.mxu0 0.0
        %769 = vmatprep.subr.mxu0 0.0
        %770 = vmatpush1.msra.mxu0 0.0
        %771 = vmatprep.subr.mxu0 0.0
        %772 = vmatpush1.msra.mxu0 0.0
        %773 = vmatprep.subr.mxu0 0.0
        %774 = vmatpush1.msra.mxu0 0.0
        %775 = vmatprep.subr.mxu0 0.0
        %776 = vmatpush1.msra.mxu0 0.0
        %777 = vmatprep.subr.mxu0 0.0
        %778 = vmatpush1.msra.mxu0 0.0
        %779 = vmatprep.subr.mxu0 0.0
        %780 = vmatpush1.msra.mxu0 0.0
        %781 = vmatprep.subr.mxu0 0.0
        %782 = vmatpush1.msra.mxu0 0.0
        %783 = vmatprep.subr.mxu0 0.0
        %784 = vmatpush1.msra.mxu0 0.0
        %785 = vmatprep.subr.mxu0 0.0
        %786 = vmatpush1.msra.mxu0 0.0
        %787 = vmatprep.mubr.f32.mxu0 0.0
        %788 = vmatmul.mubr.f32.gmra.mrb[0].mxu0 %v718
        %v789 = vpop.f32.mrb[0].mxu0
        %v790 = vadd.f32 0.0, %v789
        %v791 = vpop.f32.mrb[0].mxu0
        %v792 = vadd.f32 0.0, %v791
        %793 = vmatprep.mubr.f32.mxu0 0.0
        %794 = vmatmul.mubr.f32.gmra.mrb[0].mxu0 %v721
        %v795 = vpop.f32.mrb[0].mxu0
        %v796 = vadd.f32 0.0, %v795
        %v797 = vpop.f32.mrb[0].mxu0
        %v798 = vadd.f32 0.0, %v797
        %799 = vdwg.mxu0
        %v801 = vsel %vm403, %v713, 0
        %v804 = vsel %vm403, %v714, 0
        %806 = vmatprep.subr.mxu0 %v677
        %807 = vmatpush1.msra.mxu0 %v676
        %808 = vmatprep.subr.mxu0 %v679
        %809 = vmatpush1.msra.mxu0 %v678
        %810 = vmatprep.subr.mxu0 0.0
        %811 = vmatpush1.msra.mxu0 0.0
        %812 = vmatprep.subr.mxu0 0.0
        %813 = vmatpush1.msra.mxu0 0.0
        %814 = vmatprep.subr.mxu0 0.0
        %815 = vmatpush1.msra.mxu0 0.0
        %816 = vmatprep.subr.mxu0 0.0
        %817 = vmatpush1.msra.mxu0 0.0
        %818 = vmatprep.subr.mxu0 0.0
        %819 = vmatpush1.msra.mxu0 0.0
        %820 = vmatprep.subr.mxu0 0.0
        %821 = vmatpush1.msra.mxu0 0.0
        %822 = vmatprep.subr.mxu0 0.0
        %823 = vmatpush1.msra.mxu0 0.0
        %824 = vmatprep.subr.mxu0 0.0
        %825 = vmatpush1.msra.mxu0 0.0
        %826 = vmatprep.subr.mxu0 0.0
        %827 = vmatpush1.msra.mxu0 0.0
        %828 = vmatprep.subr.mxu0 0.0
        %829 = vmatpush1.msra.mxu0 0.0
        %830 = vmatprep.subr.mxu0 0.0
        %831 = vmatpush1.msra.mxu0 0.0
        %832 = vmatprep.subr.mxu0 0.0
        %833 = vmatpush1.msra.mxu0 0.0
        %834 = vmatprep.subr.mxu0 0.0
        %835 = vmatpush1.msra.mxu0 0.0
        %836 = vmatprep.subr.mxu0 0.0
        %837 = vmatpush1.msra.mxu0 0.0
        %838 = vmatprep.subr.mxu0 0.0
        %839 = vmatpush1.msra.mxu0 0.0
        %840 = vmatprep.subr.mxu0 0.0
        %841 = vmatpush1.msra.mxu0 0.0
        %842 = vmatprep.subr.mxu0 0.0
        %843 = vmatpush1.msra.mxu0 0.0
        %844 = vmatprep.subr.mxu0 0.0
        %845 = vmatpush1.msra.mxu0 0.0
        %846 = vmatprep.subr.mxu0 0.0
        %847 = vmatpush1.msra.mxu0 0.0
        %848 = vmatprep.subr.mxu0 0.0
        %849 = vmatpush1.msra.mxu0 0.0
        %850 = vmatprep.subr.mxu0 0.0
        %851 = vmatpush1.msra.mxu0 0.0
        %852 = vmatprep.subr.mxu0 0.0
        %853 = vmatpush1.msra.mxu0 0.0
        %854 = vmatprep.subr.mxu0 0.0
        %855 = vmatpush1.msra.mxu0 0.0
        %856 = vmatprep.subr.mxu0 0.0
        %857 = vmatpush1.msra.mxu0 0.0
        %858 = vmatprep.subr.mxu0 0.0
        %859 = vmatpush1.msra.mxu0 0.0
        %860 = vmatprep.subr.mxu0 0.0
        %861 = vmatpush1.msra.mxu0 0.0
        %862 = vmatprep.subr.mxu0 0.0
        %863 = vmatpush1.msra.mxu0 0.0
        %864 = vmatprep.subr.mxu0 0.0
        %865 = vmatpush1.msra.mxu0 0.0
        %866 = vmatprep.subr.mxu0 0.0
        %867 = vmatpush1.msra.mxu0 0.0
        %868 = vmatprep.subr.mxu0 0.0
        %869 = vmatpush1.msra.mxu0 0.0
        %870 = vmatprep.mubr.f32.mxu0 0.0
        %871 = vmatmul.mubr.f32.gmra.mrb[0].mxu0 %v801
        %v872 = vpop.f32.mrb[0].mxu0
        %v873 = vadd.f32 %v790, %v872
        %v874 = vpop.f32.mrb[0].mxu0
        %v875 = vadd.f32 %v792, %v874
        %876 = vmatprep.mubr.f32.mxu0 0.0
        %877 = vmatmul.mubr.f32.gmra.mrb[0].mxu0 %v804
        %v878 = vpop.f32.mrb[0].mxu0
        %v879 = vadd.f32 %v796, %v878
        %v880 = vpop.f32.mrb[0].mxu0
        %v881 = vadd.f32 %v798, %v880
        %882 = vdwg.mxu0
        %s883 = scalar_lea.vmem [#allocation8], 32
        %v884 = vld [vmem:[%s883] sm:$0xff]
        %v885 = vld [vmem:[%s883 + $0x8] sm:$0xff]
        %v887 = vsel %vm403, %v884, 0
        %v890 = vsel %vm403, %v885, 0
        %892 = vmatprep.subr.mxu0 %v709
        %893 = vmatpush1.msra.mxu0 %v708
        %894 = vmatprep.subr.mxu0 %v711
        %895 = vmatpush1.msra.mxu0 %v710
        %896 = vmatprep.subr.mxu0 0.0
        %897 = vmatpush1.msra.mxu0 0.0
        %898 = vmatprep.subr.mxu0 0.0
        %899 = vmatpush1.msra.mxu0 0.0
        %900 = vmatprep.subr.mxu0 0.0
        %901 = vmatpush1.msra.mxu0 0.0
        %902 = vmatprep.subr.mxu0 0.0
        %903 = vmatpush1.msra.mxu0 0.0
        %904 = vmatprep.subr.mxu0 0.0
        %905 = vmatpush1.msra.mxu0 0.0
        %906 = vmatprep.subr.mxu0 0.0
        %907 = vmatpush1.msra.mxu0 0.0
        %908 = vmatprep.subr.mxu0 0.0
        %909 = vmatpush1.msra.mxu0 0.0
        %910 = vmatprep.subr.mxu0 0.0
        %911 = vmatpush1.msra.mxu0 0.0
        %912 = vmatprep.subr.mxu0 0.0
        %913 = vmatpush1.msra.mxu0 0.0
        %914 = vmatprep.subr.mxu0 0.0
        %915 = vmatpush1.msra.mxu0 0.0
        %916 = vmatprep.subr.mxu0 0.0
        %917 = vmatpush1.msra.mxu0 0.0
        %918 = vmatprep.subr.mxu0 0.0
        %919 = vmatpush1.msra.mxu0 0.0
        %920 = vmatprep.subr.mxu0 0.0
        %921 = vmatpush1.msra.mxu0 0.0
        %922 = vmatprep.subr.mxu0 0.0
        %923 = vmatpush1.msra.mxu0 0.0
        %924 = vmatprep.subr.mxu0 0.0
        %925 = vmatpush1.msra.mxu0 0.0
        %926 = vmatprep.subr.mxu0 0.0
        %927 = vmatpush1.msra.mxu0 0.0
        %928 = vmatprep.subr.mxu0 0.0
        %929 = vmatpush1.msra.mxu0 0.0
        %930 = vmatprep.subr.mxu0 0.0
        %931 = vmatpush1.msra.mxu0 0.0
        %932 = vmatprep.subr.mxu0 0.0
        %933 = vmatpush1.msra.mxu0 0.0
        %934 = vmatprep.subr.mxu0 0.0
        %935 = vmatpush1.msra.mxu0 0.0
        %936 = vmatprep.subr.mxu0 0.0
        %937 = vmatpush1.msra.mxu0 0.0
        %938 = vmatprep.subr.mxu0 0.0
        %939 = vmatpush1.msra.mxu0 0.0
        %940 = vmatprep.subr.mxu0 0.0
        %941 = vmatpush1.msra.mxu0 0.0
        %942 = vmatprep.subr.mxu0 0.0
        %943 = vmatpush1.msra.mxu0 0.0
        %944 = vmatprep.subr.mxu0 0.0
        %945 = vmatpush1.msra.mxu0 0.0
        %946 = vmatprep.subr.mxu0 0.0
        %947 = vmatpush1.msra.mxu0 0.0
        %948 = vmatprep.subr.mxu0 0.0
        %949 = vmatpush1.msra.mxu0 0.0
        %950 = vmatprep.subr.mxu0 0.0
        %951 = vmatpush1.msra.mxu0 0.0
        %952 = vmatprep.subr.mxu0 0.0
        %953 = vmatpush1.msra.mxu0 0.0
        %954 = vmatprep.subr.mxu0 0.0
        %955 = vmatpush1.msra.mxu0 0.0
        %956 = vmatprep.mubr.f32.mxu0 0.0
        %957 = vmatmul.mubr.f32.gmra.mrb[0].mxu0 %v887
        %v958 = vpop.f32.mrb[0].mxu0
        %v959 = vadd.f32 0.0, %v958
        %v960 = vpop.f32.mrb[0].mxu0
        %v961 = vadd.f32 0.0, %v960
        %962 = vmatprep.mubr.f32.mxu0 0.0
        %963 = vmatmul.mubr.f32.gmra.mrb[0].mxu0 %v890
        %v964 = vpop.f32.mrb[0].mxu0
        %v965 = vadd.f32 0.0, %v964
        %v966 = vpop.f32.mrb[0].mxu0
        %v967 = vadd.f32 0.0, %v966
        %968 = vdwg.mxu0
        %v969 = vadd.f32 %v873, %v959
        %v970 = vadd.f32 %v875, %v961
        %v971 = vadd.f32 %v879, %v965
        %v972 = vadd.f32 %v881, %v967
        %v973 = vld [vmem:[%s5] sm:$0xff]
        %v974 = vld [vmem:[%s5 + $0x8] sm:$0xff]
        %976 = vset.pattern.permute.xlu0 0
        %977 = vperm.xlu0 %976, %v973
        %v978 = vpop.permute.xlu0 %977
        %981 = vset.pattern.permute.xlu0 0
        %982 = vperm.xlu0 %981, %v974
        %v983 = vpop.permute.xlu0 %982
        %v985 = vadd.f32 %v969, %v978
        %v986 = vadd.f32 %v970, %v978
        %v987 = vadd.f32 %v971, %v983
        %v988 = vadd.f32 %v972, %v983
        %v989 = vadd.f32 %v985, %v321
        %v990 = vadd.f32 %v986, %v322
        %v991 = vadd.f32 %v987, %v323
        %v992 = vadd.f32 %v988, %v324
        %v993 = vmax.f32 %v989, 0.0
        %v994 = vmax.f32 %v990, 0.0
        %v995 = vmax.f32 %v991, 0.0
        %v996 = vmax.f32 %v992, 0.0
        %997 = vrot.lane.b32.xlu0 %v993, 1
        %v998 = vpop.permute.xlu0 %997
        %999 = vrot.lane.b32.xlu0 %v995, 1
        %v1000 = vpop.permute.xlu0 %999
        %1001 = vrot.lane.b32.xlu0 %v994, 1
        %v1002 = vpop.permute.xlu0 %1001
        %1003 = vrot.lane.b32.xlu0 %v996, 1
        %v1004 = vpop.permute.xlu0 %1003
        %v1005 = vsel %vm335, %v998, %v1002
        %v1006 = vsel %vm335, %v1000, %v1004
        %v1007 = vsel %vm335, %v1002, %v998
        %v1008 = vsel %vm335, %v1004, %v1000
        %v1009 = vmul.f32 %v1007, %v354
        %v1010 = vmul.f32 %v1005, %v358
        %v1011 = vmul.f32 %v1008, %v354
        %v1012 = vmul.f32 %v1006, %v358
        %1013 = vrot.lane.b32.xlu0 %v993, 127
        %v1014 = vpop.permute.xlu0 %1013
        %1015 = vrot.lane.b32.xlu0 %v995, 127
        %v1016 = vpop.permute.xlu0 %1015
        %1017 = vrot.lane.b32.xlu0 %v994, 127
        %v1018 = vpop.permute.xlu0 %1017
        %1019 = vrot.lane.b32.xlu0 %v996, 127
        %v1020 = vpop.permute.xlu0 %1019
        %v1021 = vsel %vm371, %v1014, %v1018
        %v1022 = vsel %vm371, %v1016, %v1020
        %v1023 = vsel %vm371, %v1018, %v1014
        %v1024 = vsel %vm371, %v1020, %v1016
        %v1025 = vmul.f32 %v1021, %v389
        %v1026 = vmul.f32 %v1023, %v393
        %v1027 = vmul.f32 %v1022, %v389
        %v1028 = vmul.f32 %v1024, %v393
        %s1029 = scalar_lea.vmem [#allocation6], 64
        %v1030 = vld [vmem:[%s1029] sm:$0xff]
        %v1031 = vld [vmem:[%s1029 + $0x8] sm:$0xff]
        %s1032 = scalar_lea.vmem [#allocation6], 48
        %v1033 = vld [vmem:[%s1032] sm:$0xff]
        %v1034 = vld [vmem:[%s1032 + $0x8] sm:$0xff]
        %v1036 = vsel %vm403, %v1033, 0
        %v1039 = vsel %vm403, %v1034, 0
        %1041 = vmatprep.subr.mxu0 %v1010
        %1042 = vmatpush1.msra.mxu0 %v1009
        %1043 = vmatprep.subr.mxu0 %v1012
        %1044 = vmatpush1.msra.mxu0 %v1011
        %1045 = vmatprep.subr.mxu0 0.0
        %1046 = vmatpush1.msra.mxu0 0.0
        %1047 = vmatprep.subr.mxu0 0.0
        %1048 = vmatpush1.msra.mxu0 0.0
        %1049 = vmatprep.subr.mxu0 0.0
        %1050 = vmatpush1.msra.mxu0 0.0
        %1051 = vmatprep.subr.mxu0 0.0
        %1052 = vmatpush1.msra.mxu0 0.0
        %1053 = vmatprep.subr.mxu0 0.0
        %1054 = vmatpush1.msra.mxu0 0.0
        %1055 = vmatprep.subr.mxu0 0.0
        %1056 = vmatpush1.msra.mxu0 0.0
        %1057 = vmatprep.subr.mxu0 0.0
        %1058 = vmatpush1.msra.mxu0 0.0
        %1059 = vmatprep.subr.mxu0 0.0
        %1060 = vmatpush1.msra.mxu0 0.0
        %1061 = vmatprep.subr.mxu0 0.0
        %1062 = vmatpush1.msra.mxu0 0.0
        %1063 = vmatprep.subr.mxu0 0.0
        %1064 = vmatpush1.msra.mxu0 0.0
        %1065 = vmatprep.subr.mxu0 0.0
        %1066 = vmatpush1.msra.mxu0 0.0
        %1067 = vmatprep.subr.mxu0 0.0
        %1068 = vmatpush1.msra.mxu0 0.0
        %1069 = vmatprep.subr.mxu0 0.0
        %1070 = vmatpush1.msra.mxu0 0.0
        %1071 = vmatprep.subr.mxu0 0.0
        %1072 = vmatpush1.msra.mxu0 0.0
        %1073 = vmatprep.subr.mxu0 0.0
        %1074 = vmatpush1.msra.mxu0 0.0
        %1075 = vmatprep.subr.mxu0 0.0
        %1076 = vmatpush1.msra.mxu0 0.0
        %1077 = vmatprep.subr.mxu0 0.0
        %1078 = vmatpush1.msra.mxu0 0.0
        %1079 = vmatprep.subr.mxu0 0.0
        %1080 = vmatpush1.msra.mxu0 0.0
        %1081 = vmatprep.subr.mxu0 0.0
        %1082 = vmatpush1.msra.mxu0 0.0
        %1083 = vmatprep.subr.mxu0 0.0
        %1084 = vmatpush1.msra.mxu0 0.0
        %1085 = vmatprep.subr.mxu0 0.0
        %1086 = vmatpush1.msra.mxu0 0.0
        %1087 = vmatprep.subr.mxu0 0.0
        %1088 = vmatpush1.msra.mxu0 0.0
        %1089 = vmatprep.subr.mxu0 0.0
        %1090 = vmatpush1.msra.mxu0 0.0
        %1091 = vmatprep.subr.mxu0 0.0
        %1092 = vmatpush1.msra.mxu0 0.0
        %1093 = vmatprep.subr.mxu0 0.0
        %1094 = vmatpush1.msra.mxu0 0.0
        %1095 = vmatprep.subr.mxu0 0.0
        %1096 = vmatpush1.msra.mxu0 0.0
        %1097 = vmatprep.subr.mxu0 0.0
        %1098 = vmatpush1.msra.mxu0 0.0
        %1099 = vmatprep.subr.mxu0 0.0
        %1100 = vmatpush1.msra.mxu0 0.0
        %1101 = vmatprep.subr.mxu0 0.0
        %1102 = vmatpush1.msra.mxu0 0.0
        %1103 = vmatprep.subr.mxu0 0.0
        %1104 = vmatpush1.msra.mxu0 0.0
        %1105 = vmatprep.mubr.f32.mxu0 0.0
        %1106 = vmatmul.mubr.f32.gmra.mrb[0].mxu0 %v1036
        %v1107 = vpop.f32.mrb[0].mxu0
        %v1108 = vadd.f32 0.0, %v1107
        %v1109 = vpop.f32.mrb[0].mxu0
        %v1110 = vadd.f32 0.0, %v1109
        %1111 = vmatprep.mubr.f32.mxu0 0.0
        %1112 = vmatmul.mubr.f32.gmra.mrb[0].mxu0 %v1039
        %v1113 = vpop.f32.mrb[0].mxu0
        %v1114 = vadd.f32 0.0, %v1113
        %v1115 = vpop.f32.mrb[0].mxu0
        %v1116 = vadd.f32 0.0, %v1115
        %1117 = vdwg.mxu0
        %v1119 = vsel %vm403, %v1030, 0
        %v1122 = vsel %vm403, %v1031, 0
        %1124 = vmatprep.subr.mxu0 %v994
        %1125 = vmatpush1.msra.mxu0 %v993
        %1126 = vmatprep.subr.mxu0 %v996
        %1127 = vmatpush1.msra.mxu0 %v995
        %1128 = vmatprep.subr.mxu0 0.0
        %1129 = vmatpush1.msra.mxu0 0.0
        %1130 = vmatprep.subr.mxu0 0.0
        %1131 = vmatpush1.msra.mxu0 0.0
        %1132 = vmatprep.subr.mxu0 0.0
        %1133 = vmatpush1.msra.mxu0 0.0
        %1134 = vmatprep.subr.mxu0 0.0
        %1135 = vmatpush1.msra.mxu0 0.0
        %1136 = vmatprep.subr.mxu0 0.0
        %1137 = vmatpush1.msra.mxu0 0.0
        %1138 = vmatprep.subr.mxu0 0.0
        %1139 = vmatpush1.msra.mxu0 0.0
        %1140 = vmatprep.subr.mxu0 0.0
        %1141 = vmatpush1.msra.mxu0 0.0
        %1142 = vmatprep.subr.mxu0 0.0
        %1143 = vmatpush1.msra.mxu0 0.0
        %1144 = vmatprep.subr.mxu0 0.0
        %1145 = vmatpush1.msra.mxu0 0.0
        %1146 = vmatprep.subr.mxu0 0.0
        %1147 = vmatpush1.msra.mxu0 0.0
        %1148 = vmatprep.subr.mxu0 0.0
        %1149 = vmatpush1.msra.mxu0 0.0
        %1150 = vmatprep.subr.mxu0 0.0
        %1151 = vmatpush1.msra.mxu0 0.0
        %1152 = vmatprep.subr.mxu0 0.0
        %1153 = vmatpush1.msra.mxu0 0.0
        %1154 = vmatprep.subr.mxu0 0.0
        %1155 = vmatpush1.msra.mxu0 0.0
        %1156 = vmatprep.subr.mxu0 0.0
        %1157 = vmatpush1.msra.mxu0 0.0
        %1158 = vmatprep.subr.mxu0 0.0
        %1159 = vmatpush1.msra.mxu0 0.0
        %1160 = vmatprep.subr.mxu0 0.0
        %1161 = vmatpush1.msra.mxu0 0.0
        %1162 = vmatprep.subr.mxu0 0.0
        %1163 = vmatpush1.msra.mxu0 0.0
        %1164 = vmatprep.subr.mxu0 0.0
        %1165 = vmatpush1.msra.mxu0 0.0
        %1166 = vmatprep.subr.mxu0 0.0
        %1167 = vmatpush1.msra.mxu0 0.0
        %1168 = vmatprep.subr.mxu0 0.0
        %1169 = vmatpush1.msra.mxu0 0.0
        %1170 = vmatprep.subr.mxu0 0.0
        %1171 = vmatpush1.msra.mxu0 0.0
        %1172 = vmatprep.subr.mxu0 0.0
        %1173 = vmatpush1.msra.mxu0 0.0
        %1174 = vmatprep.subr.mxu0 0.0
        %1175 = vmatpush1.msra.mxu0 0.0
        %1176 = vmatprep.subr.mxu0 0.0
        %1177 = vmatpush1.msra.mxu0 0.0
        %1178 = vmatprep.subr.mxu0 0.0
        %1179 = vmatpush1.msra.mxu0 0.0
        %1180 = vmatprep.subr.mxu0 0.0
        %1181 = vmatpush1.msra.mxu0 0.0
        %1182 = vmatprep.subr.mxu0 0.0
        %1183 = vmatpush1.msra.mxu0 0.0
        %1184 = vmatprep.subr.mxu0 0.0
        %1185 = vmatpush1.msra.mxu0 0.0
        %1186 = vmatprep.subr.mxu0 0.0
        %1187 = vmatpush1.msra.mxu0 0.0
        %1188 = vmatprep.mubr.f32.mxu0 0.0
        %1189 = vmatmul.mubr.f32.gmra.mrb[0].mxu0 %v1119
        %v1190 = vpop.f32.mrb[0].mxu0
        %v1191 = vadd.f32 %v1108, %v1190
        %v1192 = vpop.f32.mrb[0].mxu0
        %v1193 = vadd.f32 %v1110, %v1192
        %1194 = vmatprep.mubr.f32.mxu0 0.0
        %1195 = vmatmul.mubr.f32.gmra.mrb[0].mxu0 %v1122
        %v1196 = vpop.f32.mrb[0].mxu0
        %v1197 = vadd.f32 %v1114, %v1196
        %v1198 = vpop.f32.mrb[0].mxu0
        %v1199 = vadd.f32 %v1116, %v1198
        %1200 = vdwg.mxu0
        %s1201 = scalar_lea.vmem [#allocation6], 80
        %v1202 = vld [vmem:[%s1201] sm:$0xff]
        %v1203 = vld [vmem:[%s1201 + $0x8] sm:$0xff]
        %v1205 = vsel %vm403, %v1202, 0
        %v1208 = vsel %vm403, %v1203, 0
        %1210 = vmatprep.subr.mxu0 %v1026
        %1211 = vmatpush1.msra.mxu0 %v1025
        %1212 = vmatprep.subr.mxu0 %v1028
        %1213 = vmatpush1.msra.mxu0 %v1027
        %1214 = vmatprep.subr.mxu0 0.0
        %1215 = vmatpush1.msra.mxu0 0.0
        %1216 = vmatprep.subr.mxu0 0.0
        %1217 = vmatpush1.msra.mxu0 0.0
        %1218 = vmatprep.subr.mxu0 0.0
        %1219 = vmatpush1.msra.mxu0 0.0
        %1220 = vmatprep.subr.mxu0 0.0
        %1221 = vmatpush1.msra.mxu0 0.0
        %1222 = vmatprep.subr.mxu0 0.0
        %1223 = vmatpush1.msra.mxu0 0.0
        %1224 = vmatprep.subr.mxu0 0.0
        %1225 = vmatpush1.msra.mxu0 0.0
        %1226 = vmatprep.subr.mxu0 0.0
        %1227 = vmatpush1.msra.mxu0 0.0
        %1228 = vmatprep.subr.mxu0 0.0
        %1229 = vmatpush1.msra.mxu0 0.0
        %1230 = vmatprep.subr.mxu0 0.0
        %1231 = vmatpush1.msra.mxu0 0.0
        %1232 = vmatprep.subr.mxu0 0.0
        %1233 = vmatpush1.msra.mxu0 0.0
        %1234 = vmatprep.subr.mxu0 0.0
        %1235 = vmatpush1.msra.mxu0 0.0
        %1236 = vmatprep.subr.mxu0 0.0
        %1237 = vmatpush1.msra.mxu0 0.0
        %1238 = vmatprep.subr.mxu0 0.0
        %1239 = vmatpush1.msra.mxu0 0.0
        %1240 = vmatprep.subr.mxu0 0.0
        %1241 = vmatpush1.msra.mxu0 0.0
        %1242 = vmatprep.subr.mxu0 0.0
        %1243 = vmatpush1.msra.mxu0 0.0
        %1244 = vmatprep.subr.mxu0 0.0
        %1245 = vmatpush1.msra.mxu0 0.0
        %1246 = vmatprep.subr.mxu0 0.0
        %1247 = vmatpush1.msra.mxu0 0.0
        %1248 = vmatprep.subr.mxu0 0.0
        %1249 = vmatpush1.msra.mxu0 0.0
        %1250 = vmatprep.subr.mxu0 0.0
        %1251 = vmatpush1.msra.mxu0 0.0
        %1252 = vmatprep.subr.mxu0 0.0
        %1253 = vmatpush1.msra.mxu0 0.0
        %1254 = vmatprep.subr.mxu0 0.0
        %1255 = vmatpush1.msra.mxu0 0.0
        %1256 = vmatprep.subr.mxu0 0.0
        %1257 = vmatpush1.msra.mxu0 0.0
        %1258 = vmatprep.subr.mxu0 0.0
        %1259 = vmatpush1.msra.mxu0 0.0
        %1260 = vmatprep.subr.mxu0 0.0
        %1261 = vmatpush1.msra.mxu0 0.0
        %1262 = vmatprep.subr.mxu0 0.0
        %1263 = vmatpush1.msra.mxu0 0.0
        %1264 = vmatprep.subr.mxu0 0.0
        %1265 = vmatpush1.msra.mxu0 0.0
        %1266 = vmatprep.subr.mxu0 0.0
        %1267 = vmatpush1.msra.mxu0 0.0
        %1268 = vmatprep.subr.mxu0 0.0
        %1269 = vmatpush1.msra.mxu0 0.0
        %1270 = vmatprep.subr.mxu0 0.0
        %1271 = vmatpush1.msra.mxu0 0.0
        %1272 = vmatprep.subr.mxu0 0.0
        %1273 = vmatpush1.msra.mxu0 0.0
        %1274 = vmatprep.mubr.f32.mxu0 0.0
        %1275 = vmatmul.mubr.f32.gmra.mrb[0].mxu0 %v1205
        %v1276 = vpop.f32.mrb[0].mxu0
        %v1277 = vadd.f32 0.0, %v1276
        %v1278 = vpop.f32.mrb[0].mxu0
        %v1279 = vadd.f32 0.0, %v1278
        %1280 = vmatprep.mubr.f32.mxu0 0.0
        %1281 = vmatmul.mubr.f32.gmra.mrb[0].mxu0 %v1208
        %v1282 = vpop.f32.mrb[0].mxu0
        %v1283 = vadd.f32 0.0, %v1282
        %v1284 = vpop.f32.mrb[0].mxu0
        %v1285 = vadd.f32 0.0, %v1284
        %1286 = vdwg.mxu0
        %v1287 = vadd.f32 %v1191, %v1277
        %v1288 = vadd.f32 %v1193, %v1279
        %v1289 = vadd.f32 %v1197, %v1283
        %v1290 = vadd.f32 %v1199, %v1285
        %s1291 = scalar_lea.vmem %s4, 16
        %v1292 = vld [vmem:[%s1291] sm:$0xff]
        %v1293 = vld [vmem:[%s1291 + $0x8] sm:$0xff]
        %1295 = vset.pattern.permute.xlu0 0
        %1296 = vperm.xlu0 %1295, %v1292
        %v1297 = vpop.permute.xlu0 %1296
        %1300 = vset.pattern.permute.xlu0 0
        %1301 = vperm.xlu0 %1300, %v1293
        %v1302 = vpop.permute.xlu0 %1301
        %v1304 = vadd.f32 %v1287, %v1297
        %v1305 = vadd.f32 %v1288, %v1297
        %v1306 = vadd.f32 %v1289, %v1302
        %v1307 = vadd.f32 %v1290, %v1302
        %v1308 = vmax.f32 %v1304, 0.0
        %v1309 = vmax.f32 %v1305, 0.0
        %v1310 = vmax.f32 %v1306, 0.0
        %v1311 = vmax.f32 %v1307, 0.0
        %1312 = vrot.lane.b32.xlu0 %v1308, 1
        %v1313 = vpop.permute.xlu0 %1312
        %1314 = vrot.lane.b32.xlu0 %v1310, 1
        %v1315 = vpop.permute.xlu0 %1314
        %1316 = vrot.lane.b32.xlu0 %v1309, 1
        %v1317 = vpop.permute.xlu0 %1316
        %1318 = vrot.lane.b32.xlu0 %v1311, 1
        %v1319 = vpop.permute.xlu0 %1318
        %v1320 = vsel %vm335, %v1313, %v1317
        %v1321 = vsel %vm335, %v1315, %v1319
        %v1322 = vsel %vm335, %v1317, %v1313
        %v1323 = vsel %vm335, %v1319, %v1315
        %v1324 = vmul.f32 %v1322, %v354
        %v1325 = vmul.f32 %v1320, %v358
        %v1326 = vmul.f32 %v1323, %v354
        %v1327 = vmul.f32 %v1321, %v358
        %1328 = vrot.lane.b32.xlu0 %v1308, 127
        %v1329 = vpop.permute.xlu0 %1328
        %1330 = vrot.lane.b32.xlu0 %v1310, 127
        %v1331 = vpop.permute.xlu0 %1330
        %1332 = vrot.lane.b32.xlu0 %v1309, 127
        %v1333 = vpop.permute.xlu0 %1332
        %1334 = vrot.lane.b32.xlu0 %v1311, 127
        %v1335 = vpop.permute.xlu0 %1334
        %v1336 = vsel %vm371, %v1329, %v1333
        %v1337 = vsel %vm371, %v1331, %v1335
        %v1338 = vsel %vm371, %v1333, %v1329
        %v1339 = vsel %vm371, %v1335, %v1331
        %v1340 = vmul.f32 %v1336, %v389
        %v1341 = vmul.f32 %v1338, %v393
        %v1342 = vmul.f32 %v1337, %v389
        %v1343 = vmul.f32 %v1339, %v393
        %s1344 = scalar_lea.vmem [#allocation8], 64
        %v1345 = vld [vmem:[%s1344] sm:$0xff]
        %v1346 = vld [vmem:[%s1344 + $0x8] sm:$0xff]
        %s1347 = scalar_lea.vmem [#allocation8], 48
        %v1348 = vld [vmem:[%s1347] sm:$0xff]
        %v1349 = vld [vmem:[%s1347 + $0x8] sm:$0xff]
        %v1351 = vsel %vm403, %v1348, 0
        %v1354 = vsel %vm403, %v1349, 0
        %1356 = vmatprep.subr.mxu0 %v1325
        %1357 = vmatpush1.msra.mxu0 %v1324
        %1358 = vmatprep.subr.mxu0 %v1327
        %1359 = vmatpush1.msra.mxu0 %v1326
        %1360 = vmatprep.subr.mxu0 0.0
        %1361 = vmatpush1.msra.mxu0 0.0
        %1362 = vmatprep.subr.mxu0 0.0
        %1363 = vmatpush1.msra.mxu0 0.0
        %1364 = vmatprep.subr.mxu0 0.0
        %1365 = vmatpush1.msra.mxu0 0.0
        %1366 = vmatprep.subr.mxu0 0.0
        %1367 = vmatpush1.msra.mxu0 0.0
        %1368 = vmatprep.subr.mxu0 0.0
        %1369 = vmatpush1.msra.mxu0 0.0
        %1370 = vmatprep.subr.mxu0 0.0
        %1371 = vmatpush1.msra.mxu0 0.0
        %1372 = vmatprep.subr.mxu0 0.0
        %1373 = vmatpush1.msra.mxu0 0.0
        %1374 = vmatprep.subr.mxu0 0.0
        %1375 = vmatpush1.msra.mxu0 0.0
        %1376 = vmatprep.subr.mxu0 0.0
        %1377 = vmatpush1.msra.mxu0 0.0
        %1378 = vmatprep.subr.mxu0 0.0
        %1379 = vmatpush1.msra.mxu0 0.0
        %1380 = vmatprep.subr.mxu0 0.0
        %1381 = vmatpush1.msra.mxu0 0.0
        %1382 = vmatprep.subr.mxu0 0.0
        %1383 = vmatpush1.msra.mxu0 0.0
        %1384 = vmatprep.subr.mxu0 0.0
        %1385 = vmatpush1.msra.mxu0 0.0
        %1386 = vmatprep.subr.mxu0 0.0
        %1387 = vmatpush1.msra.mxu0 0.0
        %1388 = vmatprep.subr.mxu0 0.0
        %1389 = vmatpush1.msra.mxu0 0.0
        %1390 = vmatprep.subr.mxu0 0.0
        %1391 = vmatpush1.msra.mxu0 0.0
        %1392 = vmatprep.subr.mxu0 0.0
        %1393 = vmatpush1.msra.mxu0 0.0
        %1394 = vmatprep.subr.mxu0 0.0
        %1395 = vmatpush1.msra.mxu0 0.0
        %1396 = vmatprep.subr.mxu0 0.0
        %1397 = vmatpush1.msra.mxu0 0.0
        %1398 = vmatprep.subr.mxu0 0.0
        %1399 = vmatpush1.msra.mxu0 0.0
        %1400 = vmatprep.subr.mxu0 0.0
        %1401 = vmatpush1.msra.mxu0 0.0
        %1402 = vmatprep.subr.mxu0 0.0
        %1403 = vmatpush1.msra.mxu0 0.0
        %1404 = vmatprep.subr.mxu0 0.0
        %1405 = vmatpush1.msra.mxu0 0.0
        %1406 = vmatprep.subr.mxu0 0.0
        %1407 = vmatpush1.msra.mxu0 0.0
        %1408 = vmatprep.subr.mxu0 0.0
        %1409 = vmatpush1.msra.mxu0 0.0
        %1410 = vmatprep.subr.mxu0 0.0
        %1411 = vmatpush1.msra.mxu0 0.0
        %1412 = vmatprep.subr.mxu0 0.0
        %1413 = vmatpush1.msra.mxu0 0.0
        %1414 = vmatprep.subr.mxu0 0.0
        %1415 = vmatpush1.msra.mxu0 0.0
        %1416 = vmatprep.subr.mxu0 0.0
        %1417 = vmatpush1.msra.mxu0 0.0
        %1418 = vmatprep.subr.mxu0 0.0
        %1419 = vmatpush1.msra.mxu0 0.0
        %1420 = vmatprep.mubr.f32.mxu0 0.0
        %1421 = vmatmul.mubr.f32.gmra.mrb[0].mxu0 %v1351
        %v1422 = vpop.f32.mrb[0].mxu0
        %v1423 = vadd.f32 0.0, %v1422
        %v1424 = vpop.f32.mrb[0].mxu0
        %v1425 = vadd.f32 0.0, %v1424
        %1426 = vmatprep.mubr.f32.mxu0 0.0
        %1427 = vmatmul.mubr.f32.gmra.mrb[0].mxu0 %v1354
        %v1428 = vpop.f32.mrb[0].mxu0
        %v1429 = vadd.f32 0.0, %v1428
        %v1430 = vpop.f32.mrb[0].mxu0
        %v1431 = vadd.f32 0.0, %v1430
        %1432 = vdwg.mxu0
        %v1434 = vsel %vm403, %v1345, 0
        %v1437 = vsel %vm403, %v1346, 0
        %1439 = vmatprep.subr.mxu0 %v1309
        %1440 = vmatpush1.msra.mxu0 %v1308
        %1441 = vmatprep.subr.mxu0 %v1311
        %1442 = vmatpush1.msra.mxu0 %v1310
        %1443 = vmatprep.subr.mxu0 0.0
        %1444 = vmatpush1.msra.mxu0 0.0
        %1445 = vmatprep.subr.mxu0 0.0
        %1446 = vmatpush1.msra.mxu0 0.0
        %1447 = vmatprep.subr.mxu0 0.0
        %1448 = vmatpush1.msra.mxu0 0.0
        %1449 = vmatprep.subr.mxu0 0.0
        %1450 = vmatpush1.msra.mxu0 0.0
        %1451 = vmatprep.subr.mxu0 0.0
        %1452 = vmatpush1.msra.mxu0 0.0
        %1453 = vmatprep.subr.mxu0 0.0
        %1454 = vmatpush1.msra.mxu0 0.0
        %1455 = vmatprep.subr.mxu0 0.0
        %1456 = vmatpush1.msra.mxu0 0.0
        %1457 = vmatprep.subr.mxu0 0.0
        %1458 = vmatpush1.msra.mxu0 0.0
        %1459 = vmatprep.subr.mxu0 0.0
        %1460 = vmatpush1.msra.mxu0 0.0
        %1461 = vmatprep.subr.mxu0 0.0
        %1462 = vmatpush1.msra.mxu0 0.0
        %1463 = vmatprep.subr.mxu0 0.0
        %1464 = vmatpush1.msra.mxu0 0.0
        %1465 = vmatprep.subr.mxu0 0.0
        %1466 = vmatpush1.msra.mxu0 0.0
        %1467 = vmatprep.subr.mxu0 0.0
        %1468 = vmatpush1.msra.mxu0 0.0
        %1469 = vmatprep.subr.mxu0 0.0
        %1470 = vmatpush1.msra.mxu0 0.0
        %1471 = vmatprep.subr.mxu0 0.0
        %1472 = vmatpush1.msra.mxu0 0.0
        %1473 = vmatprep.subr.mxu0 0.0
        %1474 = vmatpush1.msra.mxu0 0.0
        %1475 = vmatprep.subr.mxu0 0.0
        %1476 = vmatpush1.msra.mxu0 0.0
        %1477 = vmatprep.subr.mxu0 0.0
        %1478 = vmatpush1.msra.mxu0 0.0
        %1479 = vmatprep.subr.mxu0 0.0
        %1480 = vmatpush1.msra.mxu0 0.0
        %1481 = vmatprep.subr.mxu0 0.0
        %1482 = vmatpush1.msra.mxu0 0.0
        %1483 = vmatprep.subr.mxu0 0.0
        %1484 = vmatpush1.msra.mxu0 0.0
        %1485 = vmatprep.subr.mxu0 0.0
        %1486 = vmatpush1.msra.mxu0 0.0
        %1487 = vmatprep.subr.mxu0 0.0
        %1488 = vmatpush1.msra.mxu0 0.0
        %1489 = vmatprep.subr.mxu0 0.0
        %1490 = vmatpush1.msra.mxu0 0.0
        %1491 = vmatprep.subr.mxu0 0.0
        %1492 = vmatpush1.msra.mxu0 0.0
        %1493 = vmatprep.subr.mxu0 0.0
        %1494 = vmatpush1.msra.mxu0 0.0
        %1495 = vmatprep.subr.mxu0 0.0
        %1496 = vmatpush1.msra.mxu0 0.0
        %1497 = vmatprep.subr.mxu0 0.0
        %1498 = vmatpush1.msra.mxu0 0.0
        %1499 = vmatprep.subr.mxu0 0.0
        %1500 = vmatpush1.msra.mxu0 0.0
        %1501 = vmatprep.subr.mxu0 0.0
        %1502 = vmatpush1.msra.mxu0 0.0
        %1503 = vmatprep.mubr.f32.mxu0 0.0
        %1504 = vmatmul.mubr.f32.gmra.mrb[0].mxu0 %v1434
        %v1505 = vpop.f32.mrb[0].mxu0
        %v1506 = vadd.f32 %v1423, %v1505
        %v1507 = vpop.f32.mrb[0].mxu0
        %v1508 = vadd.f32 %v1425, %v1507
        %1509 = vmatprep.mubr.f32.mxu0 0.0
        %1510 = vmatmul.mubr.f32.gmra.mrb[0].mxu0 %v1437
        %v1511 = vpop.f32.mrb[0].mxu0
        %v1512 = vadd.f32 %v1429, %v1511
        %v1513 = vpop.f32.mrb[0].mxu0
        %v1514 = vadd.f32 %v1431, %v1513
        %1515 = vdwg.mxu0
        %s1516 = scalar_lea.vmem [#allocation8], 80
        %v1517 = vld [vmem:[%s1516] sm:$0xff]
        %v1518 = vld [vmem:[%s1516 + $0x8] sm:$0xff]
        %v1520 = vsel %vm403, %v1517, 0
        %v1523 = vsel %vm403, %v1518, 0
        %1525 = vmatprep.subr.mxu0 %v1341
        %1526 = vmatpush1.msra.mxu0 %v1340
        %1527 = vmatprep.subr.mxu0 %v1343
        %1528 = vmatpush1.msra.mxu0 %v1342
        %1529 = vmatprep.subr.mxu0 0.0
        %1530 = vmatpush1.msra.mxu0 0.0
        %1531 = vmatprep.subr.mxu0 0.0
        %1532 = vmatpush1.msra.mxu0 0.0
        %1533 = vmatprep.subr.mxu0 0.0
        %1534 = vmatpush1.msra.mxu0 0.0
        %1535 = vmatprep.subr.mxu0 0.0
        %1536 = vmatpush1.msra.mxu0 0.0
        %1537 = vmatprep.subr.mxu0 0.0
        %1538 = vmatpush1.msra.mxu0 0.0
        %1539 = vmatprep.subr.mxu0 0.0
        %1540 = vmatpush1.msra.mxu0 0.0
        %1541 = vmatprep.subr.mxu0 0.0
        %1542 = vmatpush1.msra.mxu0 0.0
        %1543 = vmatprep.subr.mxu0 0.0
        %1544 = vmatpush1.msra.mxu0 0.0
        %1545 = vmatprep.subr.mxu0 0.0
        %1546 = vmatpush1.msra.mxu0 0.0
        %1547 = vmatprep.subr.mxu0 0.0
        %1548 = vmatpush1.msra.mxu0 0.0
        %1549 = vmatprep.subr.mxu0 0.0
        %1550 = vmatpush1.msra.mxu0 0.0
        %1551 = vmatprep.subr.mxu0 0.0
        %1552 = vmatpush1.msra.mxu0 0.0
        %1553 = vmatprep.subr.mxu0 0.0
        %1554 = vmatpush1.msra.mxu0 0.0
        %1555 = vmatprep.subr.mxu0 0.0
        %1556 = vmatpush1.msra.mxu0 0.0
        %1557 = vmatprep.subr.mxu0 0.0
        %1558 = vmatpush1.msra.mxu0 0.0
        %1559 = vmatprep.subr.mxu0 0.0
        %1560 = vmatpush1.msra.mxu0 0.0
        %1561 = vmatprep.subr.mxu0 0.0
        %1562 = vmatpush1.msra.mxu0 0.0
        %1563 = vmatprep.subr.mxu0 0.0
        %1564 = vmatpush1.msra.mxu0 0.0
        %1565 = vmatprep.subr.mxu0 0.0
        %1566 = vmatpush1.msra.mxu0 0.0
        %1567 = vmatprep.subr.mxu0 0.0
        %1568 = vmatpush1.msra.mxu0 0.0
        %1569 = vmatprep.subr.mxu0 0.0
        %1570 = vmatpush1.msra.mxu0 0.0
        %1571 = vmatprep.subr.mxu0 0.0
        %1572 = vmatpush1.msra.mxu0 0.0
        %1573 = vmatprep.subr.mxu0 0.0
        %1574 = vmatpush1.msra.mxu0 0.0
        %1575 = vmatprep.subr.mxu0 0.0
        %1576 = vmatpush1.msra.mxu0 0.0
        %1577 = vmatprep.subr.mxu0 0.0
        %1578 = vmatpush1.msra.mxu0 0.0
        %1579 = vmatprep.subr.mxu0 0.0
        %1580 = vmatpush1.msra.mxu0 0.0
        %1581 = vmatprep.subr.mxu0 0.0
        %1582 = vmatpush1.msra.mxu0 0.0
        %1583 = vmatprep.subr.mxu0 0.0
        %1584 = vmatpush1.msra.mxu0 0.0
        %1585 = vmatprep.subr.mxu0 0.0
        %1586 = vmatpush1.msra.mxu0 0.0
        %1587 = vmatprep.subr.mxu0 0.0
        %1588 = vmatpush1.msra.mxu0 0.0
        %1589 = vmatprep.mubr.f32.mxu0 0.0
        %1590 = vmatmul.mubr.f32.gmra.mrb[0].mxu0 %v1520
        %v1591 = vpop.f32.mrb[0].mxu0
        %v1592 = vadd.f32 0.0, %v1591
        %v1593 = vpop.f32.mrb[0].mxu0
        %v1594 = vadd.f32 0.0, %v1593
        %1595 = vmatprep.mubr.f32.mxu0 0.0
        %1596 = vmatmul.mubr.f32.gmra.mrb[0].mxu0 %v1523
        %v1597 = vpop.f32.mrb[0].mxu0
        %v1598 = vadd.f32 0.0, %v1597
        %v1599 = vpop.f32.mrb[0].mxu0
        %v1600 = vadd.f32 0.0, %v1599
        %1601 = vdwg.mxu0
        %v1602 = vadd.f32 %v1506, %v1592
        %v1603 = vadd.f32 %v1508, %v1594
        %v1604 = vadd.f32 %v1512, %v1598
        %v1605 = vadd.f32 %v1514, %v1600
        %s1606 = scalar_lea.vmem %s5, 16
        %v1607 = vld [vmem:[%s1606] sm:$0xff]
        %v1608 = vld [vmem:[%s1606 + $0x8] sm:$0xff]
        %1610 = vset.pattern.permute.xlu0 0
        %1611 = vperm.xlu0 %1610, %v1607
        %v1612 = vpop.permute.xlu0 %1611
        %1615 = vset.pattern.permute.xlu0 0
        %1616 = vperm.xlu0 %1615, %v1608
        %v1617 = vpop.permute.xlu0 %1616
        %v1619 = vadd.f32 %v1602, %v1612
        %v1620 = vadd.f32 %v1603, %v1612
        %v1621 = vadd.f32 %v1604, %v1617
        %v1622 = vadd.f32 %v1605, %v1617
        %v1623 = vadd.f32 %v1619, %v993
        %v1624 = vadd.f32 %v1620, %v994
        %v1625 = vadd.f32 %v1621, %v995
        %v1626 = vadd.f32 %v1622, %v996
        %v1627 = vmax.f32 %v1623, 0.0
        %v1628 = vmax.f32 %v1624, 0.0
        %v1629 = vmax.f32 %v1625, 0.0
        %v1630 = vmax.f32 %v1626, 0.0
        %v1631 = vlaneseq
        %v1632 = vshrl.u32 %v1631, 7
        %v1633 = vsub.s32 2, %v1632
        %v1634 = vrot.slane %v320, %v1633
        %v1635 = vlaneseq
        %v1636 = vshrl.u32 %v1635, 7
        %v1637 = vsub.s32 6, %v1636
        %v1638 = vrot.slane %v320, %v1637
        %v1641 = vlaneseq
        %v1642 = vshrl.u32 %v1641, 7
        %v1643 = vsub.s32 2, %v1642
        %v1644 = vrot.slane %v1634, %v1643
        %v1645 = vlaneseq
        %v1646 = vshrl.u32 %v1645, 7
        %v1647 = vsub.s32 2, %v1646
        %v1648 = vrot.slane %v1638, %v1647
        %v1649 = vmul.f32 %v1627, %v1644
        %v1650 = vmul.f32 %v1628, %v1648
        %v1651 = vmul.f32 %v1629, %v1644
        %v1652 = vmul.f32 %v1630, %v1648
        %1653 = vst [vmem:[%s317] sm:$0xff] %v1649
        %1654 = vst [vmem:[%s317 + $0x8] sm:$0xff] %v1650
        %1655 = vst [vmem:[%s317 + $0x10] sm:$0xff] %v1651
        %1656 = vst [vmem:[%s317 + $0x18] sm:$0xff] %v1652
        %s1657 = sand.u32 %s161, 1
        %s1658 = scalar_lea.sflag [#allocation4], %s1657
        %s1659 = sand.u32 %s161, 1
        %s1660 = smul.addr %s1659, 32
        %s1661 = scalar_lea.vmem [#allocation9], %s1660
        // Predicated region
        $region80: #{tpu_custom_call.1} parent=62 // pred_check
          %p1662 = pneg %p171
        $region81: #{tpu_custom_call.1} parent=62 // pred_check_branch
          %1664 = sbr.rel (%p1662) target = $region83
        $region82: #{tpu_custom_call.1} parent=62 // pred_region
          %s1665 = smul.u32 2, %s22
          %s1667 = ssub.s32 512, 512
          %1668 = vsyncadd %s1658, %s1667
          %s1669 = smul.addr %s1665, 128
          %s1670 = scalar_lea.hbm %s6, %s1669
          %s1671 = sshll.u32 %s1661, 4
          %s1672 = int_to_ptr.vmem [resolvable:$true] %s1671
          %1677 = dma.vmem_to_hbm [thread:$0]  %s1672, 512, %s1670, %s1658, 256, 512, 16
        $region83: #{tpu_custom_call.1} parent=62 // pred_fallthru
          _
      $region63: #{tpu_custom_call.1} parent=5 // pred_fallthru
        _
      %p1678 = scmp.le.s32.totalorder 2, %s17
      // Predicated region
      $region84: #{tpu_custom_call.1} parent=5 // pred_check
        %p1679 = pneg %p1678
      $region85: #{tpu_custom_call.1} parent=5 // pred_check_branch
        %1681 = sbr.rel (%p1679) target = $region87
      $region86: #{tpu_custom_call.1} parent=5 // pred_region
        %s1682 = ssub.s32 %s17, 2
        // Predicated region
        $region88: #{tpu_custom_call.1} parent=86 // pred_check
          %p1683 = pneg %p177
        $region89: #{tpu_custom_call.1} parent=86 // pred_check_branch
          %1685 = sbr.rel (%p1683) target = $region91
        $region90: #{tpu_custom_call.1} parent=86 // pred_region
          %s1686 = sand.u32 %s162, 1
          %s1687 = scalar_lea.sflag [#allocation4], %s1686
          %s1688 = sand.u32 %s162, 1
          %s1689 = smul.addr %s1688, 32
          %s1690 = scalar_lea.vmem [#allocation9], %s1689
          %1691 = dma.done %s1687, 512
        $region91: #{tpu_custom_call.1} parent=86 // pred_fallthru
          _
      $region87: #{tpu_custom_call.1} parent=5 // pred_fallthru
        _
    $region6: #{tpu_custom_call.1} parent=1 // loop_footer
      %s21 = sadd.s32 1, %s17
    $region7: #{tpu_custom_call.1} parent=1 // loop_footer_branch
      %16 = sbr.rel target = $region3
    $region8: #{tpu_custom_call.1} parent=1 // loop_exit
      _
    %1692 = vsyncpa [#allocation3], 1
    %s1693 = scalar_lea.sflag [#allocation3], 1
    %1694 = vsyncpa %s1693, 1
    %1695 = vsyncpa [#allocation7], 1
    %1696 = vsyncpa [#allocation4], 1
    %s1697 = scalar_lea.sflag [#allocation4], 1
    %1698 = vsyncpa %s1697, 1

// kernel: tpu_custom_call.1
$region0: #{tpu_custom_call.1}
  #allocation0 [shape = 'u32[]', space=smem, size = 0x4, offset = 0x4, fixed_abs, tag = 'smem constant byte address 0x4 - core index']
  #allocation1 [shape = 'u32[144,128]{1,0:T(1,128)}', space=vmem, size = 0x12000, scoped, tag = 'internal scratch']
  %s0 = inlined_call_operand.hbm [shape: f32[3,256], index: 0, kind: input, shape index: {}]
  %s1 = inlined_call_operand.vmem [shape: f32[16,512], index: 1, kind: input, shape index: {}]
  %s2 = inlined_call_operand.hbm [shape: f32[2,3,16,16], index: 2, kind: input, shape index: {}]
  %s3 = inlined_call_operand.hbm [shape: f32[2,3,16,16], index: 3, kind: input, shape index: {}]
  %s4 = inlined_call_operand.vmem [shape: f32[2,16,1], index: 4, kind: input, shape index: {}]
  %s5 = inlined_call_operand.vmem [shape: f32[2,16,1], index: 5, kind: input, shape index: {}]
  %s6 = inlined_call_operand.hbm [shape: f32[16,512], index: 6, kind: output, shape index: {}]
  %s7 = sld [smem:[#allocation0]]
  $region92: #{tpu_custom_call.1} parent=0
    _
  %s9 = ssub.s32 1, %s7
  %s10 = scalar_select 0, %s9, %s7
  $region1: #{tpu_custom_call.1} parent=0
    #allocation2 [shape = 'u8[4096]{0}', space=vmem, size = 0x1000, scoped, tag = 'input window, operand 0, single buffered']
    #allocation3 [shape = 's32[2]{0}', space=sflag, size = 0x8, scoped, tag = 'scoped memory for tpu_custom_call.1']
    #allocation4 [shape = 's32[2]{0}', space=sflag, size = 0x8, scoped, tag = 'scoped memory for tpu_custom_call.1']
    #allocation5 [shape = 'u8[32768]{0}', space=vmem, size = 0x8000, scoped, tag = 'input window, operand 1']
    #allocation6 [shape = 'u8[49152]{0}', space=vmem, size = 0xc000, scoped, tag = 'input window, operand 2, single buffered']
    #allocation7 [shape = 's32[1]{0}', space=sflag, size = 0x4, scoped, tag = 'scoped memory for tpu_custom_call.1']
    #allocation8 [shape = 'u8[49152]{0}', space=vmem, size = 0xc000, scoped, tag = 'input window, operand 3, single buffered']
    #allocation9 [shape = 'u8[32768]{0}', space=vmem, size = 0x8000, scoped, tag = 'output window, operand 0']
    %11 = vsyncpa [#allocation3], 0
    %12 = vsyncpa [#allocation7], 0
    %13 = vsyncpa [#allocation4], 0
    %s14 = scalar_lea.sflag [#allocation4], 1
    %15 = vsyncpa %s14, 0
    loop: start=0, step=1, limit=4
    $region2: #{tpu_custom_call.1} parent=1 // loop_pre_header
      _
    $region3: #{tpu_custom_call.1} parent=1 // loop_header
      %s17 = sphi 0, %s21
      %p18 = scmp.ge.s32.totalorder %s17, 4
      %s25 = sphi 0, %s25
      %s27 = sphi 0, %s25
      %s28 = sphi 0, %s27
      %s42 = sphi 0, %s28
      %s48 = sphi 0, %s50
      %s51 = sphi 0, %s48
      %s52 = sphi 0, %s51
      %s68 = sphi 0, %s52
      %s72 = sphi 0, %s72
      %s74 = sphi 0, %s72
      %s75 = sphi 0, %s74
      %s89 = sphi 0, %s75
      %s93 = sphi 0, %s93
      %s95 = sphi 0, %s93
      %s96 = sphi 0, %s95
      %s110 = sphi 0, %s96
      %s114 = sphi 0, %s114
      %s116 = sphi 0, %s114
      %s117 = sphi 0, %s116
      %s131 = sphi 0, %s117
      %s135 = sphi 0, %s135
      %s137 = sphi 0, %s135
      %s138 = sphi 0, %s137
      %s152 = sphi 0, %s138
      %s158 = sphi 0, %s160
      %s161 = sphi 0, %s158
      %s162 = sphi 0, %s161
      %s178 = sphi 0, %s162
    $region4: #{tpu_custom_call.1} parent=1 // loop_header_branch
      %20 = sbr.rel (%p18) target = $region8
    $region5: #{tpu_custom_call.1} parent=1 // loop_body
      %s22 = ssub.s32 %s17, 1
      %s23 = ssub.s32 %s17, 2
      %s24 = sadd.s32 %s17, 1
      %s26 = sadd.s32 %s25, 1
      %p29 = scmp.eq.s32.totalorder %s17, 1
      %p30 = scmp.ne.s32.totalorder %s25, %s27
      %p31 = scmp.eq.s32.totalorder %s17, 0
      %p32 = por %p30, %p31
      %p33 = scmp.ne.s32.totalorder %s25, %s27
      %p34 = scmp.eq.s32.totalorder %s22, 1
      %p35 = por %p33, %p34
      %p36 = scmp.ne.s32.totalorder %s27, %s28
      %p37 = scmp.eq.s32.totalorder %s22, 0
      %p38 = por %p36, %p37
      %p39 = scmp.ne.s32.totalorder %s27, %s28
      %p40 = scmp.eq.s32.totalorder %s23, 1
      %p41 = por %p39, %p40
      %p43 = scmp.ne.s32.totalorder %s28, %s42
      %p44 = scmp.eq.s32.totalorder %s23, 0
      %p45 = por %p43, %p44
      %s46 = ssub.s32 %s17, %s24
      %p47 = scmp.eq.s32.totalorder %s46, 0
      %s49 = sadd.s32 %s48, 1
      %s50 = scalar_select %p47, %s48, %s49
      %p53 = pneg %p47
      %p54 = scmp.eq.s32.totalorder %s17, 1
      %p55 = por %p53, %p54
      %p56 = scmp.ne.s32.totalorder %s48, %s51
      %p57 = scmp.eq.s32.totalorder %s17, 0
      %p58 = por %p56, %p57
      %p59 = scmp.ne.s32.totalorder %s48, %s51
      %p60 = scmp.eq.s32.totalorder %s22, 1
      %p61 = por %p59, %p60
      %p62 = scmp.ne.s32.totalorder %s51, %s52
      %p63 = scmp.eq.s32.totalorder %s22, 0
      %p64 = por %p62, %p63
      %p65 = scmp.ne.s32.totalorder %s51, %s52
      %p66 = scmp.eq.s32.totalorder %s23, 1
      %p67 = por %p65, %p66
      %p69 = scmp.ne.s32.totalorder %s52, %s68
      %p70 = scmp.eq.s32.totalorder %s23, 0
      %p71 = por %p69, %p70
      %s73 = sadd.s32 %s72, 1
      %p76 = scmp.eq.s32.totalorder %s17, 1
      %p77 = scmp.ne.s32.totalorder %s72, %s74
      %p78 = scmp.eq.s32.totalorder %s17, 0
      %p79 = por %p77, %p78
      %p80 = scmp.ne.s32.totalorder %s72, %s74
      %p81 = scmp.eq.s32.totalorder %s22, 1
      %p82 = por %p80, %p81
      %p83 = scmp.ne.s32.totalorder %s74, %s75
      %p84 = scmp.eq.s32.totalorder %s22, 0
      %p85 = por %p83, %p84
      %p86 = scmp.ne.s32.totalorder %s74, %s75
      %p87 = scmp.eq.s32.totalorder %s23, 1
      %p88 = por %p86, %p87
      %p90 = scmp.ne.s32.totalorder %s75, %s89
      %p91 = scmp.eq.s32.totalorder %s23, 0
      %p92 = por %p90, %p91
      %s94 = sadd.s32 %s93, 1
      %p97 = scmp.eq.s32.totalorder %s17, 1
      %p98 = scmp.ne.s32.totalorder %s93, %s95
      %p99 = scmp.eq.s32.totalorder %s17, 0
      %p100 = por %p98, %p99
      %p101 = scmp.ne.s32.totalorder %s93, %s95
      %p102 = scmp.eq.s32.totalorder %s22, 1
      %p103 = por %p101, %p102
      %p104 = scmp.ne.s32.totalorder %s95, %s96
      %p105 = scmp.eq.s32.totalorder %s22, 0
      %p106 = por %p104, %p105
      %p107 = scmp.ne.s32.totalorder %s95, %s96
      %p108 = scmp.eq.s32.totalorder %s23, 1
      %p109 = por %p107, %p108
      %p111 = scmp.ne.s32.totalorder %s96, %s110
      %p112 = scmp.eq.s32.totalorder %s23, 0
      %p113 = por %p111, %p112
      %s115 = sadd.s32 %s114, 1
      %p118 = scmp.eq.s32.totalorder %s17, 1
      %p119 = scmp.ne.s32.totalorder %s114, %s116
      %p120 = scmp.eq.s32.totalorder %s17, 0
      %p121 = por %p119, %p120
      %p122 = scmp.ne.s32.totalorder %s114, %s116
      %p123 = scmp.eq.s32.totalorder %s22, 1
      %p124 = por %p122, %p123
      %p125 = scmp.ne.s32.totalorder %s116, %s117
      %p126 = scmp.eq.s32.totalorder %s22, 0
      %p127 = por %p125, %p126
      %p128 = scmp.ne.s32.totalorder %s116, %s117
      %p129 = scmp.eq.s32.totalorder %s23, 1
      %p130 = por %p128, %p129
      %p132 = scmp.ne.s32.totalorder %s117, %s131
      %p133 = scmp.eq.s32.totalorder %s23, 0
      %p134 = por %p132, %p133
      %s136 = sadd.s32 %s135, 1
      %p139 = scmp.eq.s32.totalorder %s17, 1
      %p140 = scmp.ne.s32.totalorder %s135, %s137
      %p141 = scmp.eq.s32.totalorder %s17, 0
      %p142 = por %p140, %p141
      %p143 = scmp.ne.s32.totalorder %s135, %s137
      %p144 = scmp.eq.s32.totalorder %s22, 1
      %p145 = por %p143, %p144
      %p146 = scmp.ne.s32.totalorder %s137, %s138
      %p147 = scmp.eq.s32.totalorder %s22, 0
      %p148 = por %p146, %p147
      %p149 = scmp.ne.s32.totalorder %s137, %s138
      %p150 = scmp.eq.s32.totalorder %s23, 1
      %p151 = por %p149, %p150
      %p153 = scmp.ne.s32.totalorder %s138, %s152
      %p154 = scmp.eq.s32.totalorder %s23, 0
      %p155 = por %p153, %p154
      %s156 = ssub.s32 %s17, %s24
      %p157 = scmp.eq.s32.totalorder %s156, 0
      %s159 = sadd.s32 %s158, 1
      %s160 = scalar_select %p157, %s158, %s159
      %p163 = pneg %p157
      %p164 = scmp.eq.s32.totalorder %s17, 1
      %p165 = por %p163, %p164
      %p166 = scmp.ne.s32.totalorder %s158, %s161
      %p167 = scmp.eq.s32.totalorder %s17, 0
      %p168 = por %p166, %p167
      %p169 = scmp.ne.s32.totalorder %s158, %s161
      %p170 = scmp.eq.s32.totalorder %s22, 1
      %p171 = por %p169, %p170
      %p172 = scmp.ne.s32.totalorder %s161, %s162
      %p173 = scmp.eq.s32.totalorder %s22, 0
      %p174 = por %p172, %p173
      %p175 = scmp.ne.s32.totalorder %s161, %s162
      %p176 = scmp.eq.s32.totalorder %s23, 1
      %p177 = por %p175, %p176
      %p179 = scmp.ne.s32.totalorder %s162, %s178
      %p180 = scmp.eq.s32.totalorder %s23, 0
      %p181 = por %p179, %p180
      %p182 = scmp.le.s32.totalorder 1, %s17
      %p183 = scmp.lt.s32.totalorder %s17, 3
      %p184 = pnand %p182, %p183
      %p185 = pneg %p184
      // Predicated region
      $region9: #{tpu_custom_call.1} parent=5 // pred_check
        _
      $region10: #{tpu_custom_call.1} parent=5 // pred_check_branch
        %187 = sbr.rel (%p184) target = $region12
      $region11: #{tpu_custom_call.1} parent=5 // pred_region
        %s188 = ssub.s32 %s17, 1
        // Predicated region
        $region13: #{tpu_custom_call.1} parent=11 // pred_check
          %p189 = pneg %p38
        $region14: #{tpu_custom_call.1} parent=11 // pred_check_branch
          %191 = sbr.rel (%p189) target = $region16
        $region15: #{tpu_custom_call.1} parent=11 // pred_region
          %s193 = ssub.s32 128, 128
          %194 = vsyncadd [#allocation3], %s193
          %s196 = sshll.u32 [#allocation2], 4
          %s197 = int_to_ptr.vmem [resolvable:$true] %s196
          %199 = dma.hbm_to_vmem [thread:$0]  %s0, 128, %s197, [#allocation3]
        $region16: #{tpu_custom_call.1} parent=11 // pred_fallthru
          _
        // Predicated region
        $region17: #{tpu_custom_call.1} parent=11 // pred_check
          %p200 = pneg %p85
        $region18: #{tpu_custom_call.1} parent=11 // pred_check_branch
          %202 = sbr.rel (%p200) target = $region20
        $region19: #{tpu_custom_call.1} parent=11 // pred_region
          %s204 = ssub.s32 1536, 1536
          %205 = vsyncadd [#allocation7], %s204
          %s206 = sshll.u32 [#allocation6], 4
          %s207 = int_to_ptr.vmem [resolvable:$true] %s206
          %212 = dma.hbm_to_vmem [thread:$0]  %s2, 1536, %s207, [#allocation7], 128, 128, 8
        $region20: #{tpu_custom_call.1} parent=11 // pred_fallthru
          _
        // Predicated region
        $region21: #{tpu_custom_call.1} parent=11 // pred_check
          %p213 = pneg %p106
        $region22: #{tpu_custom_call.1} parent=11 // pred_check_branch
          %215 = sbr.rel (%p213) target = $region24
        $region23: #{tpu_custom_call.1} parent=11 // pred_region
          %s217 = ssub.s32 1536, 1536
          %218 = vsyncadd [#allocation7], %s217
          %s219 = sshll.u32 [#allocation8], 4
          %s220 = int_to_ptr.vmem [resolvable:$true] %s219
          %225 = dma.hbm_to_vmem [thread:$0]  %s3, 1536, %s220, [#allocation7], 128, 128, 8
        $region24: #{tpu_custom_call.1} parent=11 // pred_fallthru
          _
        // Predicated region
        $region25: #{tpu_custom_call.1} parent=11 // pred_check
          %p226 = pneg %p127
        $region26: #{tpu_custom_call.1} parent=11 // pred_check_branch
          %228 = sbr.rel (%p226) target = $region28
        $region27: #{tpu_custom_call.1} parent=11 // pred_region
          _
        $region28: #{tpu_custom_call.1} parent=11 // pred_fallthru
          _
        // Predicated region
        $region29: #{tpu_custom_call.1} parent=11 // pred_check
          %p229 = pneg %p148
        $region30: #{tpu_custom_call.1} parent=11 // pred_check_branch
          %231 = sbr.rel (%p229) target = $region32
        $region31: #{tpu_custom_call.1} parent=11 // pred_region
          _
        $region32: #{tpu_custom_call.1} parent=11 // pred_fallthru
          _
      $region12: #{tpu_custom_call.1} parent=5 // pred_fallthru
        _
      %p232 = scmp.lt.s32.totalorder %s17, 2
      // Predicated region
      $region33: #{tpu_custom_call.1} parent=5 // pred_check
        %p233 = pneg %p232
      $region34: #{tpu_custom_call.1} parent=5 // pred_check_branch
        %235 = sbr.rel (%p233) target = $region36
      $region35: #{tpu_custom_call.1} parent=5 // pred_region
        // Predicated region
        $region37: #{tpu_custom_call.1} parent=35 // pred_check
          %p236 = pneg %p58
        $region38: #{tpu_custom_call.1} parent=35 // pred_check_branch
          %238 = sbr.rel (%p236) target = $region40
        $region39: #{tpu_custom_call.1} parent=35 // pred_region
          %s239 = sand.u32 %s48, 1
          %s240 = sand.u32 %s48, 1
          %s241 = smul.addr %s240, 32
          %s242 = scalar_lea.vmem [#allocation5], %s241
          %s243 = smul.u32 2, %s17
          %s244 = smul.addr %s243, 8
          %s245 = scalar_lea.vmem %s1, %s244
          // Predicated region
          $region41: #{tpu_custom_call.1} parent=39 // pred_check
            _
          $region42: #{tpu_custom_call.1} parent=39 // pred_check_branch
            %247 = sbr.rel (0) target = $region44
          $region43: #{tpu_custom_call.1} parent=39 // pred_region
            // Predicated region
            $region45: #{tpu_custom_call.1} parent=43 // pred_check
              _
            $region46: #{tpu_custom_call.1} parent=43 // pred_check_branch
              %249 = sbr.rel (0) target = $region48
            $region47: #{tpu_custom_call.1} parent=43 // pred_region
              loop: start=0, step=1, limit=1
              $region49: #{tpu_custom_call.1} parent=47 // loop_pre_header
                _
              $region50: #{tpu_custom_call.1} parent=47 // loop_header
                %s251 = sphi 0, %s255
                %p252 = scmp.ge.s32.totalorder %s251, 1
                %s256 = sphi %s245, %s245
                %s257 = sphi %s242, %s242
              $region51: #{tpu_custom_call.1} parent=47 // loop_header_branch
                %254 = sbr.rel (%p252) target = $region55
              $region52: #{tpu_custom_call.1} parent=47 // loop_body
                %v258 = vld [vmem:[%s256] sm:$0xff]
                %259 = vst [vmem:[%s257] sm:$0xff] %v258
                %v260 = vld [vmem:[%s256 + $0x8] sm:$0xff]
                %261 = vst [vmem:[%s257 + $0x8] sm:$0xff] %v260
                %v262 = vld [vmem:[%s256 + $0x20] sm:$0xff]
                %263 = vst [vmem:[%s257 + $0x10] sm:$0xff] %v262
                %v264 = vld [vmem:[%s256 + $0x28] sm:$0xff]
                %265 = vst [vmem:[%s257 + $0x18] sm:$0xff] %v264
              $region53: #{tpu_custom_call.1} parent=47 // loop_footer
                %s255 = sadd.s32 1, %s251
              $region54: #{tpu_custom_call.1} parent=47 // loop_footer_branch
                %250 = sbr.rel target = $region50
              $region55: #{tpu_custom_call.1} parent=47 // loop_exit
                _
            $region48: #{tpu_custom_call.1} parent=43 // pred_fallthru
              _
            // Predicated region
            $region56: #{tpu_custom_call.1} parent=43 // pred_check
              _
            $region57: #{tpu_custom_call.1} parent=43 // pred_check_branch
              %267 = sbr.rel target = $region59
            $region58: #{tpu_custom_call.1} parent=43 // pred_region
              _
            $region59: #{tpu_custom_call.1} parent=43 // pred_fallthru
              _
          $region44: #{tpu_custom_call.1} parent=39 // pred_fallthru
            _
          %268 = vnop
        $region40: #{tpu_custom_call.1} parent=35 // pred_fallthru
          _
      $region36: #{tpu_custom_call.1} parent=5 // pred_fallthru
        _
      %p269 = scmp.le.s32.totalorder 1, %s17
      %p270 = scmp.lt.s32.totalorder %s17, 3
      %p271 = pnand %p269, %p270
      %p272 = pneg %p271
      // Predicated region
      $region60: #{tpu_custom_call.1} parent=5 // pred_check
        _
      $region61: #{tpu_custom_call.1} parent=5 // pred_check_branch
        %274 = sbr.rel (%p271) target = $region63
      $region62: #{tpu_custom_call.1} parent=5 // pred_region
        %s275 = ssub.s32 %s17, 1
        // Predicated region
        $region64: #{tpu_custom_call.1} parent=62 // pred_check
          %p276 = pneg %p38
        $region65: #{tpu_custom_call.1} parent=62 // pred_check_branch
          %278 = sbr.rel (%p276) target = $region67
        $region66: #{tpu_custom_call.1} parent=62 // pred_region
          %279 = dma.done [#allocation3], 128
        $region67: #{tpu_custom_call.1} parent=62 // pred_fallthru
          _
        %s280 = sand.u32 %s51, 1
        %s281 = sand.u32 %s51, 1
        %s282 = smul.addr %s281, 32
        %s283 = scalar_lea.vmem [#allocation5], %s282
        // Predicated region
        $region68: #{tpu_custom_call.1} parent=62 // pred_check
          %p284 = pneg %p64
        $region69: #{tpu_custom_call.1} parent=62 // pred_check_branch
          %286 = sbr.rel (%p284) target = $region71
        $region70: #{tpu_custom_call.1} parent=62 // pred_region
          _
        $region71: #{tpu_custom_call.1} parent=62 // pred_fallthru
          _
        // Predicated region
        $region72: #{tpu_custom_call.1} parent=62 // pred_check
          %p287 = pneg %p85
        $region73: #{tpu_custom_call.1} parent=62 // pred_check_branch
          %289 = sbr.rel (%p287) target = $region75
        $region74: #{tpu_custom_call.1} parent=62 // pred_region
          %290 = dma.done [#allocation7], 1536
        $region75: #{tpu_custom_call.1} parent=62 // pred_fallthru
          _
        // Predicated region
        $region76: #{tpu_custom_call.1} parent=62 // pred_check
          %p291 = pneg %p106
        $region77: #{tpu_custom_call.1} parent=62 // pred_check_branch
          %293 = sbr.rel (%p291) target = $region79
        $region78: #{tpu_custom_call.1} parent=62 // pred_region
          %294 = dma.done [#allocation7], 1536
        $region79: #{tpu_custom_call.1} parent=62 // pred_fallthru
          _
        %p295 = pneg %p38
        %p296 = pneg %p35
        %s297 = sand.u32 %s51, 1
        %s298 = sand.u32 %s51, 1
        %s299 = smul.addr %s298, 32
        %s300 = scalar_lea.vmem [#allocation5], %s299
        %p301 = pneg %p64
        %p302 = pneg %p61
        %p303 = pneg %p85
        %p304 = pneg %p82
        %p305 = pneg %p106
        %p306 = pneg %p103
        %p307 = pneg %p127
        %p308 = pneg %p124
        %p309 = pneg %p148
        %p310 = pneg %p145
        %p311 = pneg %p174
        %p312 = pneg %p171
        %s313 = sand.u32 %s161, 1
        %s314 = scalar_lea.sflag [#allocation4], %s313
        %s315 = sand.u32 %s161, 1
        %s316 = smul.addr %s315, 32
        %s317 = scalar_lea.vmem [#allocation9], %s316
        %s318 = smul.u32 2, %s22
        %s319 = smul.u32 2, %s22
        %v320 = vld [vmem:[#allocation2] sm:$0x77]
        %v321 = vld [vmem:[%s283] sm:$0xff]
        %v322 = vld [vmem:[%s283 + $0x8] sm:$0xff]
        %v323 = vld [vmem:[%s283 + $0x10] sm:$0xff]
        %v324 = vld [vmem:[%s283 + $0x18] sm:$0xff]
        %325 = vrot.lane.b32.xlu0 %v321, 1
        %v326 = vpop.permute.xlu0 %325
        %327 = vrot.lane.b32.xlu0 %v323, 1
        %v328 = vpop.permute.xlu0 %327
        %329 = vrot.lane.b32.xlu0 %v322, 1
        %v330 = vpop.permute.xlu0 %329
        %331 = vrot.lane.b32.xlu0 %v324, 1
        %v332 = vpop.permute.xlu0 %331
        %v333 = vlaneseq
        %v334 = vand.u32 %v333, 127
        %vm335 = vcmp.lt.s32.totalorder %v334, 1
        %v336 = vsel %vm335, %v326, %v330
        %v337 = vsel %vm335, %v328, %v332
        %v338 = vsel %vm335, %v330, %v326
        %v339 = vsel %vm335, %v332, %v328
        %v341 = vlaneseq
        %v342 = vshrl.u32 %v341, 7
        %v343 = vsub.s32 0, %v342
        %v344 = vrot.slane %v320, %v343
        %v345 = vlaneseq
        %v346 = vshrl.u32 %v345, 7
        %v347 = vsub.s32 4, %v346
        %v348 = vrot.slane %v320, %v347
        %v351 = vlaneseq
        %v352 = vshrl.u32 %v351, 7
        %v353 = vsub.s32 0, %v352
        %v354 = vrot.slane %v344, %v353
        %v355 = vlaneseq
        %v356 = vshrl.u32 %v355, 7
        %v357 = vsub.s32 0, %v356
        %v358 = vrot.slane %v348, %v357
        %v359 = vmul.f32 %v338, %v354
        %v360 = vmul.f32 %v336, %v358
        %v361 = vmul.f32 %v339, %v354
        %v362 = vmul.f32 %v337, %v358
        %363 = vrot.lane.b32.xlu0 %v321, 127
        %v364 = vpop.permute.xlu0 %363
        %365 = vrot.lane.b32.xlu0 %v323, 127
        %v366 = vpop.permute.xlu0 %365
        %367 = vrot.lane.b32.xlu0 %v322, 127
        %v368 = vpop.permute.xlu0 %367
        %369 = vrot.lane.b32.xlu0 %v324, 127
        %v370 = vpop.permute.xlu0 %369
        %vm371 = vcmp.lt.s32.totalorder %v334, 127
        %v372 = vsel %vm371, %v364, %v368
        %v373 = vsel %vm371, %v366, %v370
        %v374 = vsel %vm371, %v368, %v364
        %v375 = vsel %vm371, %v370, %v366
        %v376 = vlaneseq
        %v377 = vshrl.u32 %v376, 7
        %v378 = vsub.s32 1, %v377
        %v379 = vrot.slane %v320, %v378
        %v380 = vlaneseq
        %v381 = vshrl.u32 %v380, 7
        %v382 = vsub.s32 5, %v381
        %v383 = vrot.slane %v320, %v382
        %v386 = vlaneseq
        %v387 = vshrl.u32 %v386, 7
        %v388 = vsub.s32 1, %v387
        %v389 = vrot.slane %v379, %v388
        %v390 = vlaneseq
        %v391 = vshrl.u32 %v390, 7
        %v392 = vsub.s32 1, %v391
        %v393 = vrot.slane %v383, %v392
        %v394 = vmul.f32 %v372, %v389
        %v395 = vmul.f32 %v374, %v393
        %v396 = vmul.f32 %v373, %v389
        %v397 = vmul.f32 %v375, %v393
        %s398 = scalar_lea.vmem [#allocation6], 16
        %v399 = vld [vmem:[%s398] sm:$0xff]
        %v400 = vld [vmem:[%s398 + $0x8] sm:$0xff]
        %v401 = vld [vmem:[#allocation6] sm:$0xff]
        %v402 = vld [vmem:[#allocation6 + $0x8] sm:$0xff]
        %vm403 = vcmask 130048
        %v405 = vsel %vm403, %v401, 0
        %v408 = vsel %vm403, %v402, 0
        %410 = vmatprep.subr.mxu0 %v360
        %411 = vmatpush1.msra.mxu0 %v359
        %412 = vmatprep.subr.mxu0 %v362
        %413 = vmatpush1.msra.mxu0 %v361
        %414 = vmatprep.subr.mxu0 0.0
        %415 = vmatpush1.msra.mxu0 0.0
        %416 = vmatprep.subr.mxu0 0.0
        %417 = vmatpush1.msra.mxu0 0.0
        %418 = vmatprep.subr.mxu0 0.0
        %419 = vmatpush1.msra.mxu0 0.0
        %420 = vmatprep.subr.mxu0 0.0
        %421 = vmatpush1.msra.mxu0 0.0
        %422 = vmatprep.subr.mxu0 0.0
        %423 = vmatpush1.msra.mxu0 0.0
        %424 = vmatprep.subr.mxu0 0.0
        %425 = vmatpush1.msra.mxu0 0.0
        %426 = vmatprep.subr.mxu0 0.0
        %427 = vmatpush1.msra.mxu0 0.0
        %428 = vmatprep.subr.mxu0 0.0
        %429 = vmatpush1.msra.mxu0 0.0
        %430 = vmatprep.subr.mxu0 0.0
        %431 = vmatpush1.msra.mxu0 0.0
        %432 = vmatprep.subr.mxu0 0.0
        %433 = vmatpush1.msra.mxu0 0.0
        %434 = vmatprep.subr.mxu0 0.0
        %435 = vmatpush1.msra.mxu0 0.0
        %436 = vmatprep.subr.mxu0 0.0
        %437 = vmatpush1.msra.mxu0 0.0
        %438 = vmatprep.subr.mxu0 0.0
        %439 = vmatpush1.msra.mxu0 0.0
        %440 = vmatprep.subr.mxu0 0.0
        %441 = vmatpush1.msra.mxu0 0.0
        %442 = vmatprep.subr.mxu0 0.0
        %443 = vmatpush1.msra.mxu0 0.0
        %444 = vmatprep.subr.mxu0 0.0
        %445 = vmatpush1.msra.mxu0 0.0
        %446 = vmatprep.subr.mxu0 0.0
        %447 = vmatpush1.msra.mxu0 0.0
        %448 = vmatprep.subr.mxu0 0.0
        %449 = vmatpush1.msra.mxu0 0.0
        %450 = vmatprep.subr.mxu0 0.0
        %451 = vmatpush1.msra.mxu0 0.0
        %452 = vmatprep.subr.mxu0 0.0
        %453 = vmatpush1.msra.mxu0 0.0
        %454 = vmatprep.subr.mxu0 0.0
        %455 = vmatpush1.msra.mxu0 0.0
        %456 = vmatprep.subr.mxu0 0.0
        %457 = vmatpush1.msra.mxu0 0.0
        %458 = vmatprep.subr.mxu0 0.0
        %459 = vmatpush1.msra.mxu0 0.0
        %460 = vmatprep.subr.mxu0 0.0
        %461 = vmatpush1.msra.mxu0 0.0
        %462 = vmatprep.subr.mxu0 0.0
        %463 = vmatpush1.msra.mxu0 0.0
        %464 = vmatprep.subr.mxu0 0.0
        %465 = vmatpush1.msra.mxu0 0.0
        %466 = vmatprep.subr.mxu0 0.0
        %467 = vmatpush1.msra.mxu0 0.0
        %468 = vmatprep.subr.mxu0 0.0
        %469 = vmatpush1.msra.mxu0 0.0
        %470 = vmatprep.subr.mxu0 0.0
        %471 = vmatpush1.msra.mxu0 0.0
        %472 = vmatprep.subr.mxu0 0.0
        %473 = vmatpush1.msra.mxu0 0.0
        %474 = vmatprep.mubr.f32.mxu0 0.0
        %475 = vmatmul.mubr.f32.gmra.mrb[0].mxu0 %v405
        %v476 = vpop.f32.mrb[0].mxu0
        %v477 = vadd.f32 0.0, %v476
        %v478 = vpop.f32.mrb[0].mxu0
        %v479 = vadd.f32 0.0, %v478
        %480 = vmatprep.mubr.f32.mxu0 0.0
        %481 = vmatmul.mubr.f32.gmra.mrb[0].mxu0 %v408
        %v482 = vpop.f32.mrb[0].mxu0
        %v483 = vadd.f32 0.0, %v482
        %v484 = vpop.f32.mrb[0].mxu0
        %v485 = vadd.f32 0.0, %v484
        %486 = vdwg.mxu0
        %v488 = vsel %vm403, %v399, 0
        %v491 = vsel %vm403, %v400, 0
        %493 = vmatprep.subr.mxu0 %v322
        %494 = vmatpush1.msra.mxu0 %v321
        %495 = vmatprep.subr.mxu0 %v324
        %496 = vmatpush1.msra.mxu0 %v323
        %497 = vmatprep.subr.mxu0 0.0
        %498 = vmatpush1.msra.mxu0 0.0
        %499 = vmatprep.subr.mxu0 0.0
        %500 = vmatpush1.msra.mxu0 0.0
        %501 = vmatprep.subr.mxu0 0.0
        %502 = vmatpush1.msra.mxu0 0.0
        %503 = vmatprep.subr.mxu0 0.0
        %504 = vmatpush1.msra.mxu0 0.0
        %505 = vmatprep.subr.mxu0 0.0
        %506 = vmatpush1.msra.mxu0 0.0
        %507 = vmatprep.subr.mxu0 0.0
        %508 = vmatpush1.msra.mxu0 0.0
        %509 = vmatprep.subr.mxu0 0.0
        %510 = vmatpush1.msra.mxu0 0.0
        %511 = vmatprep.subr.mxu0 0.0
        %512 = vmatpush1.msra.mxu0 0.0
        %513 = vmatprep.subr.mxu0 0.0
        %514 = vmatpush1.msra.mxu0 0.0
        %515 = vmatprep.subr.mxu0 0.0
        %516 = vmatpush1.msra.mxu0 0.0
        %517 = vmatprep.subr.mxu0 0.0
        %518 = vmatpush1.msra.mxu0 0.0
        %519 = vmatprep.subr.mxu0 0.0
        %520 = vmatpush1.msra.mxu0 0.0
        %521 = vmatprep.subr.mxu0 0.0
        %522 = vmatpush1.msra.mxu0 0.0
        %523 = vmatprep.subr.mxu0 0.0
        %524 = vmatpush1.msra.mxu0 0.0
        %525 = vmatprep.subr.mxu0 0.0
        %526 = vmatpush1.msra.mxu0 0.0
        %527 = vmatprep.subr.mxu0 0.0
        %528 = vmatpush1.msra.mxu0 0.0
        %529 = vmatprep.subr.mxu0 0.0
        %530 = vmatpush1.msra.mxu0 0.0
        %531 = vmatprep.subr.mxu0 0.0
        %532 = vmatpush1.msra.mxu0 0.0
        %533 = vmatprep.subr.mxu0 0.0
        %534 = vmatpush1.msra.mxu0 0.0
        %535 = vmatprep.subr.mxu0 0.0
        %536 = vmatpush1.msra.mxu0 0.0
        %537 = vmatprep.subr.mxu0 0.0
        %538 = vmatpush1.msra.mxu0 0.0
        %539 = vmatprep.subr.mxu0 0.0
        %540 = vmatpush1.msra.mxu0 0.0
        %541 = vmatprep.subr.mxu0 0.0
        %542 = vmatpush1.msra.mxu0 0.0
        %543 = vmatprep.subr.mxu0 0.0
        %544 = vmatpush1.msra.mxu0 0.0
        %545 = vmatprep.subr.mxu0 0.0
        %546 = vmatpush1.msra.mxu0 0.0
        %547 = vmatprep.subr.mxu0 0.0
        %548 = vmatpush1.msra.mxu0 0.0
        %549 = vmatprep.subr.mxu0 0.0
        %550 = vmatpush1.msra.mxu0 0.0
        %551 = vmatprep.subr.mxu0 0.0
        %552 = vmatpush1.msra.mxu0 0.0
        %553 = vmatprep.subr.mxu0 0.0
        %554 = vmatpush1.msra.mxu0 0.0
        %555 = vmatprep.subr.mxu0 0.0
        %556 = vmatpush1.msra.mxu0 0.0
        %557 = vmatprep.mubr.f32.mxu0 0.0
        %558 = vmatmul.mubr.f32.gmra.mrb[0].mxu0 %v488
        %v559 = vpop.f32.mrb[0].mxu0
        %v560 = vadd.f32 %v477, %v559
        %v561 = vpop.f32.mrb[0].mxu0
        %v562 = vadd.f32 %v479, %v561
        %563 = vmatprep.mubr.f32.mxu0 0.0
        %564 = vmatmul.mubr.f32.gmra.mrb[0].mxu0 %v491
        %v565 = vpop.f32.mrb[0].mxu0
        %v566 = vadd.f32 %v483, %v565
        %v567 = vpop.f32.mrb[0].mxu0
        %v568 = vadd.f32 %v485, %v567
        %569 = vdwg.mxu0
        %s570 = scalar_lea.vmem [#allocation6], 32
        %v571 = vld [vmem:[%s570] sm:$0xff]
        %v572 = vld [vmem:[%s570 + $0x8] sm:$0xff]
        %v574 = vsel %vm403, %v571, 0
        %v577 = vsel %vm403, %v572, 0
        %579 = vmatprep.subr.mxu0 %v395
        %580 = vmatpush1.msra.mxu0 %v394
        %581 = vmatprep.subr.mxu0 %v397
        %582 = vmatpush1.msra.mxu0 %v396
        %583 = vmatprep.subr.mxu0 0.0
        %584 = vmatpush1.msra.mxu0 0.0
        %585 = vmatprep.subr.mxu0 0.0
        %586 = vmatpush1.msra.mxu0 0.0
        %587 = vmatprep.subr.mxu0 0.0
        %588 = vmatpush1.msra.mxu0 0.0
        %589 = vmatprep.subr.mxu0 0.0
        %590 = vmatpush1.msra.mxu0 0.0
        %591 = vmatprep.subr.mxu0 0.0
        %592 = vmatpush1.msra.mxu0 0.0
        %593 = vmatprep.subr.mxu0 0.0
        %594 = vmatpush1.msra.mxu0 0.0
        %595 = vmatprep.subr.mxu0 0.0
        %596 = vmatpush1.msra.mxu0 0.0
        %597 = vmatprep.subr.mxu0 0.0
        %598 = vmatpush1.msra.mxu0 0.0
        %599 = vmatprep.subr.mxu0 0.0
        %600 = vmatpush1.msra.mxu0 0.0
        %601 = vmatprep.subr.mxu0 0.0
        %602 = vmatpush1.msra.mxu0 0.0
        %603 = vmatprep.subr.mxu0 0.0
        %604 = vmatpush1.msra.mxu0 0.0
        %605 = vmatprep.subr.mxu0 0.0
        %606 = vmatpush1.msra.mxu0 0.0
        %607 = vmatprep.subr.mxu0 0.0
        %608 = vmatpush1.msra.mxu0 0.0
        %609 = vmatprep.subr.mxu0 0.0
        %610 = vmatpush1.msra.mxu0 0.0
        %611 = vmatprep.subr.mxu0 0.0
        %612 = vmatpush1.msra.mxu0 0.0
        %613 = vmatprep.subr.mxu0 0.0
        %614 = vmatpush1.msra.mxu0 0.0
        %615 = vmatprep.subr.mxu0 0.0
        %616 = vmatpush1.msra.mxu0 0.0
        %617 = vmatprep.subr.mxu0 0.0
        %618 = vmatpush1.msra.mxu0 0.0
        %619 = vmatprep.subr.mxu0 0.0
        %620 = vmatpush1.msra.mxu0 0.0
        %621 = vmatprep.subr.mxu0 0.0
        %622 = vmatpush1.msra.mxu0 0.0
        %623 = vmatprep.subr.mxu0 0.0
        %624 = vmatpush1.msra.mxu0 0.0
        %625 = vmatprep.subr.mxu0 0.0
        %626 = vmatpush1.msra.mxu0 0.0
        %627 = vmatprep.subr.mxu0 0.0
        %628 = vmatpush1.msra.mxu0 0.0
        %629 = vmatprep.subr.mxu0 0.0
        %630 = vmatpush1.msra.mxu0 0.0
        %631 = vmatprep.subr.mxu0 0.0
        %632 = vmatpush1.msra.mxu0 0.0
        %633 = vmatprep.subr.mxu0 0.0
        %634 = vmatpush1.msra.mxu0 0.0
        %635 = vmatprep.subr.mxu0 0.0
        %636 = vmatpush1.msra.mxu0 0.0
        %637 = vmatprep.subr.mxu0 0.0
        %638 = vmatpush1.msra.mxu0 0.0
        %639 = vmatprep.subr.mxu0 0.0
        %640 = vmatpush1.msra.mxu0 0.0
        %641 = vmatprep.subr.mxu0 0.0
        %642 = vmatpush1.msra.mxu0 0.0
        %643 = vmatprep.mubr.f32.mxu0 0.0
        %644 = vmatmul.mubr.f32.gmra.mrb[0].mxu0 %v574
        %v645 = vpop.f32.mrb[0].mxu0
        %v646 = vadd.f32 0.0, %v645
        %v647 = vpop.f32.mrb[0].mxu0
        %v648 = vadd.f32 0.0, %v647
        %649 = vmatprep.mubr.f32.mxu0 0.0
        %650 = vmatmul.mubr.f32.gmra.mrb[0].mxu0 %v577
        %v651 = vpop.f32.mrb[0].mxu0
        %v652 = vadd.f32 0.0, %v651
        %v653 = vpop.f32.mrb[0].mxu0
        %v654 = vadd.f32 0.0, %v653
        %655 = vdwg.mxu0
        %v656 = vadd.f32 %v560, %v646
        %v657 = vadd.f32 %v562, %v648
        %v658 = vadd.f32 %v566, %v652
        %v659 = vadd.f32 %v568, %v654
        %v660 = vld [vmem:[%s4] sm:$0xff]
        %v661 = vld [vmem:[%s4 + $0x8] sm:$0xff]
        %663 = vset.pattern.permute.xlu0 0
        %664 = vperm.xlu0 %663, %v660
        %v665 = vpop.permute.xlu0 %664
        %668 = vset.pattern.permute.xlu0 0
        %669 = vperm.xlu0 %668, %v661
        %v670 = vpop.permute.xlu0 %669
        %v672 = vadd.f32 %v656, %v665
        %v673 = vadd.f32 %v657, %v665
        %v674 = vadd.f32 %v658, %v670
        %v675 = vadd.f32 %v659, %v670
        %v676 = vmax.f32 %v672, 0.0
        %v677 = vmax.f32 %v673, 0.0
        %v678 = vmax.f32 %v674, 0.0
        %v679 = vmax.f32 %v675, 0.0
        %680 = vrot.lane.b32.xlu0 %v676, 1
        %v681 = vpop.permute.xlu0 %680
        %682 = vrot.lane.b32.xlu0 %v678, 1
        %v683 = vpop.permute.xlu0 %682
        %684 = vrot.lane.b32.xlu0 %v677, 1
        %v685 = vpop.permute.xlu0 %684
        %686 = vrot.lane.b32.xlu0 %v679, 1
        %v687 = vpop.permute.xlu0 %686
        %v688 = vsel %vm335, %v681, %v685
        %v689 = vsel %vm335, %v683, %v687
        %v690 = vsel %vm335, %v685, %v681
        %v691 = vsel %vm335, %v687, %v683
        %v692 = vmul.f32 %v690, %v354
        %v693 = vmul.f32 %v688, %v358
        %v694 = vmul.f32 %v691, %v354
        %v695 = vmul.f32 %v689, %v358
        %696 = vrot.lane.b32.xlu0 %v676, 127
        %v697 = vpop.permute.xlu0 %696
        %698 = vrot.lane.b32.xlu0 %v678, 127
        %v699 = vpop.permute.xlu0 %698
        %700 = vrot.lane.b32.xlu0 %v677, 127
        %v701 = vpop.permute.xlu0 %700
        %702 = vrot.lane.b32.xlu0 %v679, 127
        %v703 = vpop.permute.xlu0 %702
        %v704 = vsel %vm371, %v697, %v701
        %v705 = vsel %vm371, %v699, %v703
        %v706 = vsel %vm371, %v701, %v697
        %v707 = vsel %vm371, %v703, %v699
        %v708 = vmul.f32 %v704, %v389
        %v709 = vmul.f32 %v706, %v393
        %v710 = vmul.f32 %v705, %v389
        %v711 = vmul.f32 %v707, %v393
        %s712 = scalar_lea.vmem [#allocation8], 16
        %v713 = vld [vmem:[%s712] sm:$0xff]
        %v714 = vld [vmem:[%s712 + $0x8] sm:$0xff]
        %v715 = vld [vmem:[#allocation8] sm:$0xff]
        %v716 = vld [vmem:[#allocation8 + $0x8] sm:$0xff]
        %v718 = vsel %vm403, %v715, 0
        %v721 = vsel %vm403, %v716, 0
        %723 = vmatprep.subr.mxu0 %v693
        %724 = vmatpush1.msra.mxu0 %v692
        %725 = vmatprep.subr.mxu0 %v695
        %726 = vmatpush1.msra.mxu0 %v694
        %727 = vmatprep.subr.mxu0 0.0
        %728 = vmatpush1.msra.mxu0 0.0
        %729 = vmatprep.subr.mxu0 0.0
        %730 = vmatpush1.msra.mxu0 0.0
        %731 = vmatprep.subr.mxu0 0.0
        %732 = vmatpush1.msra.mxu0 0.0
        %733 = vmatprep.subr.mxu0 0.0
        %734 = vmatpush1.msra.mxu0 0.0
        %735 = vmatprep.subr.mxu0 0.0
        %736 = vmatpush1.msra.mxu0 0.0
        %737 = vmatprep.subr.mxu0 0.0
        %738 = vmatpush1.msra.mxu0 0.0
        %739 = vmatprep.subr.mxu0 0.0
        %740 = vmatpush1.msra.mxu0 0.0
        %741 = vmatprep.subr.mxu0 0.0
        %742 = vmatpush1.msra.mxu0 0.0
        %743 = vmatprep.subr.mxu0 0.0
        %744 = vmatpush1.msra.mxu0 0.0
        %745 = vmatprep.subr.mxu0 0.0
        %746 = vmatpush1.msra.mxu0 0.0
        %747 = vmatprep.subr.mxu0 0.0
        %748 = vmatpush1.msra.mxu0 0.0
        %749 = vmatprep.subr.mxu0 0.0
        %750 = vmatpush1.msra.mxu0 0.0
        %751 = vmatprep.subr.mxu0 0.0
        %752 = vmatpush1.msra.mxu0 0.0
        %753 = vmatprep.subr.mxu0 0.0
        %754 = vmatpush1.msra.mxu0 0.0
        %755 = vmatprep.subr.mxu0 0.0
        %756 = vmatpush1.msra.mxu0 0.0
        %757 = vmatprep.subr.mxu0 0.0
        %758 = vmatpush1.msra.mxu0 0.0
        %759 = vmatprep.subr.mxu0 0.0
        %760 = vmatpush1.msra.mxu0 0.0
        %761 = vmatprep.subr.mxu0 0.0
        %762 = vmatpush1.msra.mxu0 0.0
        %763 = vmatprep.subr.mxu0 0.0
        %764 = vmatpush1.msra.mxu0 0.0
        %765 = vmatprep.subr.mxu0 0.0
        %766 = vmatpush1.msra.mxu0 0.0
        %767 = vmatprep.subr.mxu0 0.0
        %768 = vmatpush1.msra.mxu0 0.0
        %769 = vmatprep.subr.mxu0 0.0
        %770 = vmatpush1.msra.mxu0 0.0
        %771 = vmatprep.subr.mxu0 0.0
        %772 = vmatpush1.msra.mxu0 0.0
        %773 = vmatprep.subr.mxu0 0.0
        %774 = vmatpush1.msra.mxu0 0.0
        %775 = vmatprep.subr.mxu0 0.0
        %776 = vmatpush1.msra.mxu0 0.0
        %777 = vmatprep.subr.mxu0 0.0
        %778 = vmatpush1.msra.mxu0 0.0
        %779 = vmatprep.subr.mxu0 0.0
        %780 = vmatpush1.msra.mxu0 0.0
        %781 = vmatprep.subr.mxu0 0.0
        %782 = vmatpush1.msra.mxu0 0.0
        %783 = vmatprep.subr.mxu0 0.0
        %784 = vmatpush1.msra.mxu0 0.0
        %785 = vmatprep.subr.mxu0 0.0
        %786 = vmatpush1.msra.mxu0 0.0
        %787 = vmatprep.mubr.f32.mxu0 0.0
        %788 = vmatmul.mubr.f32.gmra.mrb[0].mxu0 %v718
        %v789 = vpop.f32.mrb[0].mxu0
        %v790 = vadd.f32 0.0, %v789
        %v791 = vpop.f32.mrb[0].mxu0
        %v792 = vadd.f32 0.0, %v791
        %793 = vmatprep.mubr.f32.mxu0 0.0
        %794 = vmatmul.mubr.f32.gmra.mrb[0].mxu0 %v721
        %v795 = vpop.f32.mrb[0].mxu0
        %v796 = vadd.f32 0.0, %v795
        %v797 = vpop.f32.mrb[0].mxu0
        %v798 = vadd.f32 0.0, %v797
        %799 = vdwg.mxu0
        %v801 = vsel %vm403, %v713, 0
        %v804 = vsel %vm403, %v714, 0
        %806 = vmatprep.subr.mxu0 %v677
        %807 = vmatpush1.msra.mxu0 %v676
        %808 = vmatprep.subr.mxu0 %v679
        %809 = vmatpush1.msra.mxu0 %v678
        %810 = vmatprep.subr.mxu0 0.0
        %811 = vmatpush1.msra.mxu0 0.0
        %812 = vmatprep.subr.mxu0 0.0
        %813 = vmatpush1.msra.mxu0 0.0
        %814 = vmatprep.subr.mxu0 0.0
        %815 = vmatpush1.msra.mxu0 0.0
        %816 = vmatprep.subr.mxu0 0.0
        %817 = vmatpush1.msra.mxu0 0.0
        %818 = vmatprep.subr.mxu0 0.0
        %819 = vmatpush1.msra.mxu0 0.0
        %820 = vmatprep.subr.mxu0 0.0
        %821 = vmatpush1.msra.mxu0 0.0
        %822 = vmatprep.subr.mxu0 0.0
        %823 = vmatpush1.msra.mxu0 0.0
        %824 = vmatprep.subr.mxu0 0.0
        %825 = vmatpush1.msra.mxu0 0.0
        %826 = vmatprep.subr.mxu0 0.0
        %827 = vmatpush1.msra.mxu0 0.0
        %828 = vmatprep.subr.mxu0 0.0
        %829 = vmatpush1.msra.mxu0 0.0
        %830 = vmatprep.subr.mxu0 0.0
        %831 = vmatpush1.msra.mxu0 0.0
        %832 = vmatprep.subr.mxu0 0.0
        %833 = vmatpush1.msra.mxu0 0.0
        %834 = vmatprep.subr.mxu0 0.0
        %835 = vmatpush1.msra.mxu0 0.0
        %836 = vmatprep.subr.mxu0 0.0
        %837 = vmatpush1.msra.mxu0 0.0
        %838 = vmatprep.subr.mxu0 0.0
        %839 = vmatpush1.msra.mxu0 0.0
        %840 = vmatprep.subr.mxu0 0.0
        %841 = vmatpush1.msra.mxu0 0.0
        %842 = vmatprep.subr.mxu0 0.0
        %843 = vmatpush1.msra.mxu0 0.0
        %844 = vmatprep.subr.mxu0 0.0
        %845 = vmatpush1.msra.mxu0 0.0
        %846 = vmatprep.subr.mxu0 0.0
        %847 = vmatpush1.msra.mxu0 0.0
        %848 = vmatprep.subr.mxu0 0.0
        %849 = vmatpush1.msra.mxu0 0.0
        %850 = vmatprep.subr.mxu0 0.0
        %851 = vmatpush1.msra.mxu0 0.0
        %852 = vmatprep.subr.mxu0 0.0
        %853 = vmatpush1.msra.mxu0 0.0
        %854 = vmatprep.subr.mxu0 0.0
        %855 = vmatpush1.msra.mxu0 0.0
        %856 = vmatprep.subr.mxu0 0.0
        %857 = vmatpush1.msra.mxu0 0.0
        %858 = vmatprep.subr.mxu0 0.0
        %859 = vmatpush1.msra.mxu0 0.0
        %860 = vmatprep.subr.mxu0 0.0
        %861 = vmatpush1.msra.mxu0 0.0
        %862 = vmatprep.subr.mxu0 0.0
        %863 = vmatpush1.msra.mxu0 0.0
        %864 = vmatprep.subr.mxu0 0.0
        %865 = vmatpush1.msra.mxu0 0.0
        %866 = vmatprep.subr.mxu0 0.0
        %867 = vmatpush1.msra.mxu0 0.0
        %868 = vmatprep.subr.mxu0 0.0
        %869 = vmatpush1.msra.mxu0 0.0
        %870 = vmatprep.mubr.f32.mxu0 0.0
        %871 = vmatmul.mubr.f32.gmra.mrb[0].mxu0 %v801
        %v872 = vpop.f32.mrb[0].mxu0
        %v873 = vadd.f32 %v790, %v872
        %v874 = vpop.f32.mrb[0].mxu0
        %v875 = vadd.f32 %v792, %v874
        %876 = vmatprep.mubr.f32.mxu0 0.0
        %877 = vmatmul.mubr.f32.gmra.mrb[0].mxu0 %v804
        %v878 = vpop.f32.mrb[0].mxu0
        %v879 = vadd.f32 %v796, %v878
        %v880 = vpop.f32.mrb[0].mxu0
        %v881 = vadd.f32 %v798, %v880
        %882 = vdwg.mxu0
        %s883 = scalar_lea.vmem [#allocation8], 32
        %v884 = vld [vmem:[%s883] sm:$0xff]
        %v885 = vld [vmem:[%s883 + $0x8] sm:$0xff]
        %v887 = vsel %vm403, %v884, 0
        %v890 = vsel %vm403, %v885, 0
        %892 = vmatprep.subr.mxu0 %v709
        %893 = vmatpush1.msra.mxu0 %v708
        %894 = vmatprep.subr.mxu0 %v711
        %895 = vmatpush1.msra.mxu0 %v710
        %896 = vmatprep.subr.mxu0 0.0
        %897 = vmatpush1.msra.mxu0 0.0
        %898 = vmatprep.subr.mxu0 0.0
        %899 = vmatpush1.msra.mxu0 0.0
        %900 = vmatprep.subr.mxu0 0.0
        %901 = vmatpush1.msra.mxu0 0.0
        %902 = vmatprep.subr.mxu0 0.0
        %903 = vmatpush1.msra.mxu0 0.0
        %904 = vmatprep.subr.mxu0 0.0
        %905 = vmatpush1.msra.mxu0 0.0
        %906 = vmatprep.subr.mxu0 0.0
        %907 = vmatpush1.msra.mxu0 0.0
        %908 = vmatprep.subr.mxu0 0.0
        %909 = vmatpush1.msra.mxu0 0.0
        %910 = vmatprep.subr.mxu0 0.0
        %911 = vmatpush1.msra.mxu0 0.0
        %912 = vmatprep.subr.mxu0 0.0
        %913 = vmatpush1.msra.mxu0 0.0
        %914 = vmatprep.subr.mxu0 0.0
        %915 = vmatpush1.msra.mxu0 0.0
        %916 = vmatprep.subr.mxu0 0.0
        %917 = vmatpush1.msra.mxu0 0.0
        %918 = vmatprep.subr.mxu0 0.0
        %919 = vmatpush1.msra.mxu0 0.0
        %920 = vmatprep.subr.mxu0 0.0
        %921 = vmatpush1.msra.mxu0 0.0
        %922 = vmatprep.subr.mxu0 0.0
        %923 = vmatpush1.msra.mxu0 0.0
        %924 = vmatprep.subr.mxu0 0.0
        %925 = vmatpush1.msra.mxu0 0.0
        %926 = vmatprep.subr.mxu0 0.0
        %927 = vmatpush1.msra.mxu0 0.0
        %928 = vmatprep.subr.mxu0 0.0
        %929 = vmatpush1.msra.mxu0 0.0
        %930 = vmatprep.subr.mxu0 0.0
        %931 = vmatpush1.msra.mxu0 0.0
        %932 = vmatprep.subr.mxu0 0.0
        %933 = vmatpush1.msra.mxu0 0.0
        %934 = vmatprep.subr.mxu0 0.0
        %935 = vmatpush1.msra.mxu0 0.0
        %936 = vmatprep.subr.mxu0 0.0
        %937 = vmatpush1.msra.mxu0 0.0
        %938 = vmatprep.subr.mxu0 0.0
        %939 = vmatpush1.msra.mxu0 0.0
        %940 = vmatprep.subr.mxu0 0.0
        %941 = vmatpush1.msra.mxu0 0.0
        %942 = vmatprep.subr.mxu0 0.0
        %943 = vmatpush1.msra.mxu0 0.0
        %944 = vmatprep.subr.mxu0 0.0
        %945 = vmatpush1.msra.mxu0 0.0
        %946 = vmatprep.subr.mxu0 0.0
        %947 = vmatpush1.msra.mxu0 0.0
        %948 = vmatprep.subr.mxu0 0.0
        %949 = vmatpush1.msra.mxu0 0.0
        %950 = vmatprep.subr.mxu0 0.0
        %951 = vmatpush1.msra.mxu0 0.0
        %952 = vmatprep.subr.mxu0 0.0
        %953 = vmatpush1.msra.mxu0 0.0
        %954 = vmatprep.subr.mxu0 0.0
        %955 = vmatpush1.msra.mxu0 0.0
        %956 = vmatprep.mubr.f32.mxu0 0.0
        %957 = vmatmul.mubr.f32.gmra.mrb[0].mxu0 %v887
        %v958 = vpop.f32.mrb[0].mxu0
        %v959 = vadd.f32 0.0, %v958
        %v960 = vpop.f32.mrb[0].mxu0
        %v961 = vadd.f32 0.0, %v960
        %962 = vmatprep.mubr.f32.mxu0 0.0
        %963 = vmatmul.mubr.f32.gmra.mrb[0].mxu0 %v890
        %v964 = vpop.f32.mrb[0].mxu0
        %v965 = vadd.f32 0.0, %v964
        %v966 = vpop.f32.mrb[0].mxu0
        %v967 = vadd.f32 0.0, %v966
        %968 = vdwg.mxu0
        %v969 = vadd.f32 %v873, %v959
        %v970 = vadd.f32 %v875, %v961
        %v971 = vadd.f32 %v879, %v965
        %v972 = vadd.f32 %v881, %v967
        %v973 = vld [vmem:[%s5] sm:$0xff]
        %v974 = vld [vmem:[%s5 + $0x8] sm:$0xff]
        %976 = vset.pattern.permute.xlu0 0
        %977 = vperm.xlu0 %976, %v973
        %v978 = vpop.permute.xlu0 %977
        %981 = vset.pattern.permute.xlu0 0
        %982 = vperm.xlu0 %981, %v974
        %v983 = vpop.permute.xlu0 %982
        %v985 = vadd.f32 %v969, %v978
        %v986 = vadd.f32 %v970, %v978
        %v987 = vadd.f32 %v971, %v983
        %v988 = vadd.f32 %v972, %v983
        %v989 = vadd.f32 %v985, %v321
        %v990 = vadd.f32 %v986, %v322
        %v991 = vadd.f32 %v987, %v323
        %v992 = vadd.f32 %v988, %v324
        %v993 = vmax.f32 %v989, 0.0
        %v994 = vmax.f32 %v990, 0.0
        %v995 = vmax.f32 %v991, 0.0
        %v996 = vmax.f32 %v992, 0.0
        %997 = vrot.lane.b32.xlu0 %v993, 1
        %v998 = vpop.permute.xlu0 %997
        %999 = vrot.lane.b32.xlu0 %v995, 1
        %v1000 = vpop.permute.xlu0 %999
        %1001 = vrot.lane.b32.xlu0 %v994, 1
        %v1002 = vpop.permute.xlu0 %1001
        %1003 = vrot.lane.b32.xlu0 %v996, 1
        %v1004 = vpop.permute.xlu0 %1003
        %v1005 = vsel %vm335, %v998, %v1002
        %v1006 = vsel %vm335, %v1000, %v1004
        %v1007 = vsel %vm335, %v1002, %v998
        %v1008 = vsel %vm335, %v1004, %v1000
        %v1009 = vmul.f32 %v1007, %v354
        %v1010 = vmul.f32 %v1005, %v358
        %v1011 = vmul.f32 %v1008, %v354
        %v1012 = vmul.f32 %v1006, %v358
        %1013 = vrot.lane.b32.xlu0 %v993, 127
        %v1014 = vpop.permute.xlu0 %1013
        %1015 = vrot.lane.b32.xlu0 %v995, 127
        %v1016 = vpop.permute.xlu0 %1015
        %1017 = vrot.lane.b32.xlu0 %v994, 127
        %v1018 = vpop.permute.xlu0 %1017
        %1019 = vrot.lane.b32.xlu0 %v996, 127
        %v1020 = vpop.permute.xlu0 %1019
        %v1021 = vsel %vm371, %v1014, %v1018
        %v1022 = vsel %vm371, %v1016, %v1020
        %v1023 = vsel %vm371, %v1018, %v1014
        %v1024 = vsel %vm371, %v1020, %v1016
        %v1025 = vmul.f32 %v1021, %v389
        %v1026 = vmul.f32 %v1023, %v393
        %v1027 = vmul.f32 %v1022, %v389
        %v1028 = vmul.f32 %v1024, %v393
        %s1029 = scalar_lea.vmem [#allocation6], 64
        %v1030 = vld [vmem:[%s1029] sm:$0xff]
        %v1031 = vld [vmem:[%s1029 + $0x8] sm:$0xff]
        %s1032 = scalar_lea.vmem [#allocation6], 48
        %v1033 = vld [vmem:[%s1032] sm:$0xff]
        %v1034 = vld [vmem:[%s1032 + $0x8] sm:$0xff]
        %v1036 = vsel %vm403, %v1033, 0
        %v1039 = vsel %vm403, %v1034, 0
        %1041 = vmatprep.subr.mxu0 %v1010
        %1042 = vmatpush1.msra.mxu0 %v1009
        %1043 = vmatprep.subr.mxu0 %v1012
        %1044 = vmatpush1.msra.mxu0 %v1011
        %1045 = vmatprep.subr.mxu0 0.0
        %1046 = vmatpush1.msra.mxu0 0.0
        %1047 = vmatprep.subr.mxu0 0.0
        %1048 = vmatpush1.msra.mxu0 0.0
        %1049 = vmatprep.subr.mxu0 0.0
        %1050 = vmatpush1.msra.mxu0 0.0
        %1051 = vmatprep.subr.mxu0 0.0
        %1052 = vmatpush1.msra.mxu0 0.0
        %1053 = vmatprep.subr.mxu0 0.0
        %1054 = vmatpush1.msra.mxu0 0.0
        %1055 = vmatprep.subr.mxu0 0.0
        %1056 = vmatpush1.msra.mxu0 0.0
        %1057 = vmatprep.subr.mxu0 0.0
        %1058 = vmatpush1.msra.mxu0 0.0
        %1059 = vmatprep.subr.mxu0 0.0
        %1060 = vmatpush1.msra.mxu0 0.0
        %1061 = vmatprep.subr.mxu0 0.0
        %1062 = vmatpush1.msra.mxu0 0.0
        %1063 = vmatprep.subr.mxu0 0.0
        %1064 = vmatpush1.msra.mxu0 0.0
        %1065 = vmatprep.subr.mxu0 0.0
        %1066 = vmatpush1.msra.mxu0 0.0
        %1067 = vmatprep.subr.mxu0 0.0
        %1068 = vmatpush1.msra.mxu0 0.0
        %1069 = vmatprep.subr.mxu0 0.0
        %1070 = vmatpush1.msra.mxu0 0.0
        %1071 = vmatprep.subr.mxu0 0.0
        %1072 = vmatpush1.msra.mxu0 0.0
        %1073 = vmatprep.subr.mxu0 0.0
        %1074 = vmatpush1.msra.mxu0 0.0
        %1075 = vmatprep.subr.mxu0 0.0
        %1076 = vmatpush1.msra.mxu0 0.0
        %1077 = vmatprep.subr.mxu0 0.0
        %1078 = vmatpush1.msra.mxu0 0.0
        %1079 = vmatprep.subr.mxu0 0.0
        %1080 = vmatpush1.msra.mxu0 0.0
        %1081 = vmatprep.subr.mxu0 0.0
        %1082 = vmatpush1.msra.mxu0 0.0
        %1083 = vmatprep.subr.mxu0 0.0
        %1084 = vmatpush1.msra.mxu0 0.0
        %1085 = vmatprep.subr.mxu0 0.0
        %1086 = vmatpush1.msra.mxu0 0.0
        %1087 = vmatprep.subr.mxu0 0.0
        %1088 = vmatpush1.msra.mxu0 0.0
        %1089 = vmatprep.subr.mxu0 0.0
        %1090 = vmatpush1.msra.mxu0 0.0
        %1091 = vmatprep.subr.mxu0 0.0
        %1092 = vmatpush1.msra.mxu0 0.0
        %1093 = vmatprep.subr.mxu0 0.0
        %1094 = vmatpush1.msra.mxu0 0.0
        %1095 = vmatprep.subr.mxu0 0.0
        %1096 = vmatpush1.msra.mxu0 0.0
        %1097 = vmatprep.subr.mxu0 0.0
        %1098 = vmatpush1.msra.mxu0 0.0
        %1099 = vmatprep.subr.mxu0 0.0
        %1100 = vmatpush1.msra.mxu0 0.0
        %1101 = vmatprep.subr.mxu0 0.0
        %1102 = vmatpush1.msra.mxu0 0.0
        %1103 = vmatprep.subr.mxu0 0.0
        %1104 = vmatpush1.msra.mxu0 0.0
        %1105 = vmatprep.mubr.f32.mxu0 0.0
        %1106 = vmatmul.mubr.f32.gmra.mrb[0].mxu0 %v1036
        %v1107 = vpop.f32.mrb[0].mxu0
        %v1108 = vadd.f32 0.0, %v1107
        %v1109 = vpop.f32.mrb[0].mxu0
        %v1110 = vadd.f32 0.0, %v1109
        %1111 = vmatprep.mubr.f32.mxu0 0.0
        %1112 = vmatmul.mubr.f32.gmra.mrb[0].mxu0 %v1039
        %v1113 = vpop.f32.mrb[0].mxu0
        %v1114 = vadd.f32 0.0, %v1113
        %v1115 = vpop.f32.mrb[0].mxu0
        %v1116 = vadd.f32 0.0, %v1115
        %1117 = vdwg.mxu0
        %v1119 = vsel %vm403, %v1030, 0
        %v1122 = vsel %vm403, %v1031, 0
        %1124 = vmatprep.subr.mxu0 %v994
        %1125 = vmatpush1.msra.mxu0 %v993
        %1126 = vmatprep.subr.mxu0 %v996
        %1127 = vmatpush1.msra.mxu0 %v995
        %1128 = vmatprep.subr.mxu0 0.0
        %1129 = vmatpush1.msra.mxu0 0.0
        %1130 = vmatprep.subr.mxu0 0.0
        %1131 = vmatpush1.msra.mxu0 0.0
        %1132 = vmatprep.subr.mxu0 0.0
        %1133 = vmatpush1.msra.mxu0 0.0
        %1134 = vmatprep.subr.mxu0 0.0
        %1135 = vmatpush1.msra.mxu0 0.0
        %1136 = vmatprep.subr.mxu0 0.0
        %1137 = vmatpush1.msra.mxu0 0.0
        %1138 = vmatprep.subr.mxu0 0.0
        %1139 = vmatpush1.msra.mxu0 0.0
        %1140 = vmatprep.subr.mxu0 0.0
        %1141 = vmatpush1.msra.mxu0 0.0
        %1142 = vmatprep.subr.mxu0 0.0
        %1143 = vmatpush1.msra.mxu0 0.0
        %1144 = vmatprep.subr.mxu0 0.0
        %1145 = vmatpush1.msra.mxu0 0.0
        %1146 = vmatprep.subr.mxu0 0.0
        %1147 = vmatpush1.msra.mxu0 0.0
        %1148 = vmatprep.subr.mxu0 0.0
        %1149 = vmatpush1.msra.mxu0 0.0
        %1150 = vmatprep.subr.mxu0 0.0
        %1151 = vmatpush1.msra.mxu0 0.0
        %1152 = vmatprep.subr.mxu0 0.0
        %1153 = vmatpush1.msra.mxu0 0.0
        %1154 = vmatprep.subr.mxu0 0.0
        %1155 = vmatpush1.msra.mxu0 0.0
        %1156 = vmatprep.subr.mxu0 0.0
        %1157 = vmatpush1.msra.mxu0 0.0
        %1158 = vmatprep.subr.mxu0 0.0
        %1159 = vmatpush1.msra.mxu0 0.0
        %1160 = vmatprep.subr.mxu0 0.0
        %1161 = vmatpush1.msra.mxu0 0.0
        %1162 = vmatprep.subr.mxu0 0.0
        %1163 = vmatpush1.msra.mxu0 0.0
        %1164 = vmatprep.subr.mxu0 0.0
        %1165 = vmatpush1.msra.mxu0 0.0
        %1166 = vmatprep.subr.mxu0 0.0
        %1167 = vmatpush1.msra.mxu0 0.0
        %1168 = vmatprep.subr.mxu0 0.0
        %1169 = vmatpush1.msra.mxu0 0.0
        %1170 = vmatprep.subr.mxu0 0.0
        %1171 = vmatpush1.msra.mxu0 0.0
        %1172 = vmatprep.subr.mxu0 0.0
        %1173 = vmatpush1.msra.mxu0 0.0
        %1174 = vmatprep.subr.mxu0 0.0
        %1175 = vmatpush1.msra.mxu0 0.0
        %1176 = vmatprep.subr.mxu0 0.0
        %1177 = vmatpush1.msra.mxu0 0.0
        %1178 = vmatprep.subr.mxu0 0.0
        %1179 = vmatpush1.msra.mxu0 0.0
        %1180 = vmatprep.subr.mxu0 0.0
        %1181 = vmatpush1.msra.mxu0 0.0
        %1182 = vmatprep.subr.mxu0 0.0
        %1183 = vmatpush1.msra.mxu0 0.0
        %1184 = vmatprep.subr.mxu0 0.0
        %1185 = vmatpush1.msra.mxu0 0.0
        %1186 = vmatprep.subr.mxu0 0.0
        %1187 = vmatpush1.msra.mxu0 0.0
        %1188 = vmatprep.mubr.f32.mxu0 0.0
        %1189 = vmatmul.mubr.f32.gmra.mrb[0].mxu0 %v1119
        %v1190 = vpop.f32.mrb[0].mxu0
        %v1191 = vadd.f32 %v1108, %v1190
        %v1192 = vpop.f32.mrb[0].mxu0
        %v1193 = vadd.f32 %v1110, %v1192
        %1194 = vmatprep.mubr.f32.mxu0 0.0
        %1195 = vmatmul.mubr.f32.gmra.mrb[0].mxu0 %v1122
        %v1196 = vpop.f32.mrb[0].mxu0
        %v1197 = vadd.f32 %v1114, %v1196
        %v1198 = vpop.f32.mrb[0].mxu0
        %v1199 = vadd.f32 %v1116, %v1198
        %1200 = vdwg.mxu0
        %s1201 = scalar_lea.vmem [#allocation6], 80
        %v1202 = vld [vmem:[%s1201] sm:$0xff]
        %v1203 = vld [vmem:[%s1201 + $0x8] sm:$0xff]
        %v1205 = vsel %vm403, %v1202, 0
        %v1208 = vsel %vm403, %v1203, 0
        %1210 = vmatprep.subr.mxu0 %v1026
        %1211 = vmatpush1.msra.mxu0 %v1025
        %1212 = vmatprep.subr.mxu0 %v1028
        %1213 = vmatpush1.msra.mxu0 %v1027
        %1214 = vmatprep.subr.mxu0 0.0
        %1215 = vmatpush1.msra.mxu0 0.0
        %1216 = vmatprep.subr.mxu0 0.0
        %1217 = vmatpush1.msra.mxu0 0.0
        %1218 = vmatprep.subr.mxu0 0.0
        %1219 = vmatpush1.msra.mxu0 0.0
        %1220 = vmatprep.subr.mxu0 0.0
        %1221 = vmatpush1.msra.mxu0 0.0
        %1222 = vmatprep.subr.mxu0 0.0
        %1223 = vmatpush1.msra.mxu0 0.0
        %1224 = vmatprep.subr.mxu0 0.0
        %1225 = vmatpush1.msra.mxu0 0.0
        %1226 = vmatprep.subr.mxu0 0.0
        %1227 = vmatpush1.msra.mxu0 0.0
        %1228 = vmatprep.subr.mxu0 0.0
        %1229 = vmatpush1.msra.mxu0 0.0
        %1230 = vmatprep.subr.mxu0 0.0
        %1231 = vmatpush1.msra.mxu0 0.0
        %1232 = vmatprep.subr.mxu0 0.0
        %1233 = vmatpush1.msra.mxu0 0.0
        %1234 = vmatprep.subr.mxu0 0.0
        %1235 = vmatpush1.msra.mxu0 0.0
        %1236 = vmatprep.subr.mxu0 0.0
        %1237 = vmatpush1.msra.mxu0 0.0
        %1238 = vmatprep.subr.mxu0 0.0
        %1239 = vmatpush1.msra.mxu0 0.0
        %1240 = vmatprep.subr.mxu0 0.0
        %1241 = vmatpush1.msra.mxu0 0.0
        %1242 = vmatprep.subr.mxu0 0.0
        %1243 = vmatpush1.msra.mxu0 0.0
        %1244 = vmatprep.subr.mxu0 0.0
        %1245 = vmatpush1.msra.mxu0 0.0
        %1246 = vmatprep.subr.mxu0 0.0
        %1247 = vmatpush1.msra.mxu0 0.0
        %1248 = vmatprep.subr.mxu0 0.0
        %1249 = vmatpush1.msra.mxu0 0.0
        %1250 = vmatprep.subr.mxu0 0.0
        %1251 = vmatpush1.msra.mxu0 0.0
        %1252 = vmatprep.subr.mxu0 0.0
        %1253 = vmatpush1.msra.mxu0 0.0
        %1254 = vmatprep.subr.mxu0 0.0
        %1255 = vmatpush1.msra.mxu0 0.0
        %1256 = vmatprep.subr.mxu0 0.0
        %1257 = vmatpush1.msra.mxu0 0.0
        %1258 = vmatprep.subr.mxu0 0.0
        %1259 = vmatpush1.msra.mxu0 0.0
        %1260 = vmatprep.subr.mxu0 0.0
        %1261 = vmatpush1.msra.mxu0 0.0
        %1262 = vmatprep.subr.mxu0 0.0
        %1263 = vmatpush1.msra.mxu0 0.0
        %1264 = vmatprep.subr.mxu0 0.0
        %1265 = vmatpush1.msra.mxu0 0.0
        %1266 = vmatprep.subr.mxu0 0.0
        %1267 = vmatpush1.msra.mxu0 0.0
        %1268 = vmatprep.subr.mxu0 0.0
        %1269 = vmatpush1.msra.mxu0 0.0
        %1270 = vmatprep.subr.mxu0 0.0
        %1271 = vmatpush1.msra.mxu0 0.0
        %1272 = vmatprep.subr.mxu0 0.0
        %1273 = vmatpush1.msra.mxu0 0.0
        %1274 = vmatprep.mubr.f32.mxu0 0.0
        %1275 = vmatmul.mubr.f32.gmra.mrb[0].mxu0 %v1205
        %v1276 = vpop.f32.mrb[0].mxu0
        %v1277 = vadd.f32 0.0, %v1276
        %v1278 = vpop.f32.mrb[0].mxu0
        %v1279 = vadd.f32 0.0, %v1278
        %1280 = vmatprep.mubr.f32.mxu0 0.0
        %1281 = vmatmul.mubr.f32.gmra.mrb[0].mxu0 %v1208
        %v1282 = vpop.f32.mrb[0].mxu0
        %v1283 = vadd.f32 0.0, %v1282
        %v1284 = vpop.f32.mrb[0].mxu0
        %v1285 = vadd.f32 0.0, %v1284
        %1286 = vdwg.mxu0
        %v1287 = vadd.f32 %v1191, %v1277
        %v1288 = vadd.f32 %v1193, %v1279
        %v1289 = vadd.f32 %v1197, %v1283
        %v1290 = vadd.f32 %v1199, %v1285
        %s1291 = scalar_lea.vmem %s4, 16
        %v1292 = vld [vmem:[%s1291] sm:$0xff]
        %v1293 = vld [vmem:[%s1291 + $0x8] sm:$0xff]
        %1295 = vset.pattern.permute.xlu0 0
        %1296 = vperm.xlu0 %1295, %v1292
        %v1297 = vpop.permute.xlu0 %1296
        %1300 = vset.pattern.permute.xlu0 0
        %1301 = vperm.xlu0 %1300, %v1293
        %v1302 = vpop.permute.xlu0 %1301
        %v1304 = vadd.f32 %v1287, %v1297
        %v1305 = vadd.f32 %v1288, %v1297
        %v1306 = vadd.f32 %v1289, %v1302
        %v1307 = vadd.f32 %v1290, %v1302
        %v1308 = vmax.f32 %v1304, 0.0
        %v1309 = vmax.f32 %v1305, 0.0
        %v1310 = vmax.f32 %v1306, 0.0
        %v1311 = vmax.f32 %v1307, 0.0
        %1312 = vrot.lane.b32.xlu0 %v1308, 1
        %v1313 = vpop.permute.xlu0 %1312
        %1314 = vrot.lane.b32.xlu0 %v1310, 1
        %v1315 = vpop.permute.xlu0 %1314
        %1316 = vrot.lane.b32.xlu0 %v1309, 1
        %v1317 = vpop.permute.xlu0 %1316
        %1318 = vrot.lane.b32.xlu0 %v1311, 1
        %v1319 = vpop.permute.xlu0 %1318
        %v1320 = vsel %vm335, %v1313, %v1317
        %v1321 = vsel %vm335, %v1315, %v1319
        %v1322 = vsel %vm335, %v1317, %v1313
        %v1323 = vsel %vm335, %v1319, %v1315
        %v1324 = vmul.f32 %v1322, %v354
        %v1325 = vmul.f32 %v1320, %v358
        %v1326 = vmul.f32 %v1323, %v354
        %v1327 = vmul.f32 %v1321, %v358
        %1328 = vrot.lane.b32.xlu0 %v1308, 127
        %v1329 = vpop.permute.xlu0 %1328
        %1330 = vrot.lane.b32.xlu0 %v1310, 127
        %v1331 = vpop.permute.xlu0 %1330
        %1332 = vrot.lane.b32.xlu0 %v1309, 127
        %v1333 = vpop.permute.xlu0 %1332
        %1334 = vrot.lane.b32.xlu0 %v1311, 127
        %v1335 = vpop.permute.xlu0 %1334
        %v1336 = vsel %vm371, %v1329, %v1333
        %v1337 = vsel %vm371, %v1331, %v1335
        %v1338 = vsel %vm371, %v1333, %v1329
        %v1339 = vsel %vm371, %v1335, %v1331
        %v1340 = vmul.f32 %v1336, %v389
        %v1341 = vmul.f32 %v1338, %v393
        %v1342 = vmul.f32 %v1337, %v389
        %v1343 = vmul.f32 %v1339, %v393
        %s1344 = scalar_lea.vmem [#allocation8], 64
        %v1345 = vld [vmem:[%s1344] sm:$0xff]
        %v1346 = vld [vmem:[%s1344 + $0x8] sm:$0xff]
        %s1347 = scalar_lea.vmem [#allocation8], 48
        %v1348 = vld [vmem:[%s1347] sm:$0xff]
        %v1349 = vld [vmem:[%s1347 + $0x8] sm:$0xff]
        %v1351 = vsel %vm403, %v1348, 0
        %v1354 = vsel %vm403, %v1349, 0
        %1356 = vmatprep.subr.mxu0 %v1325
        %1357 = vmatpush1.msra.mxu0 %v1324
        %1358 = vmatprep.subr.mxu0 %v1327
        %1359 = vmatpush1.msra.mxu0 %v1326
        %1360 = vmatprep.subr.mxu0 0.0
        %1361 = vmatpush1.msra.mxu0 0.0
        %1362 = vmatprep.subr.mxu0 0.0
        %1363 = vmatpush1.msra.mxu0 0.0
        %1364 = vmatprep.subr.mxu0 0.0
        %1365 = vmatpush1.msra.mxu0 0.0
        %1366 = vmatprep.subr.mxu0 0.0
        %1367 = vmatpush1.msra.mxu0 0.0
        %1368 = vmatprep.subr.mxu0 0.0
        %1369 = vmatpush1.msra.mxu0 0.0
        %1370 = vmatprep.subr.mxu0 0.0
        %1371 = vmatpush1.msra.mxu0 0.0
        %1372 = vmatprep.subr.mxu0 0.0
        %1373 = vmatpush1.msra.mxu0 0.0
        %1374 = vmatprep.subr.mxu0 0.0
        %1375 = vmatpush1.msra.mxu0 0.0
        %1376 = vmatprep.subr.mxu0 0.0
        %1377 = vmatpush1.msra.mxu0 0.0
        %1378 = vmatprep.subr.mxu0 0.0
        %1379 = vmatpush1.msra.mxu0 0.0
        %1380 = vmatprep.subr.mxu0 0.0
        %1381 = vmatpush1.msra.mxu0 0.0
        %1382 = vmatprep.subr.mxu0 0.0
        %1383 = vmatpush1.msra.mxu0 0.0
        %1384 = vmatprep.subr.mxu0 0.0
        %1385 = vmatpush1.msra.mxu0 0.0
        %1386 = vmatprep.subr.mxu0 0.0
        %1387 = vmatpush1.msra.mxu0 0.0
        %1388 = vmatprep.subr.mxu0 0.0
        %1389 = vmatpush1.msra.mxu0 0.0
        %1390 = vmatprep.subr.mxu0 0.0
        %1391 = vmatpush1.msra.mxu0 0.0
        %1392 = vmatprep.subr.mxu0 0.0
        %1393 = vmatpush1.msra.mxu0 0.0
        %1394 = vmatprep.subr.mxu0 0.0
        %1395 = vmatpush1.msra.mxu0 0.0
        %1396 = vmatprep.subr.mxu0 0.0
        %1397 = vmatpush1.msra.mxu0 0.0
        %1398 = vmatprep.subr.mxu0 0.0
        %1399 = vmatpush1.msra.mxu0 0.0
        %1400 = vmatprep.subr.mxu0 0.0
        %1401 = vmatpush1.msra.mxu0 0.0
        %1402 = vmatprep.subr.mxu0 0.0
        %1403 = vmatpush1.msra.mxu0 0.0
        %1404 = vmatprep.subr.mxu0 0.0
        %1405 = vmatpush1.msra.mxu0 0.0
        %1406 = vmatprep.subr.mxu0 0.0
        %1407 = vmatpush1.msra.mxu0 0.0
        %1408 = vmatprep.subr.mxu0 0.0
        %1409 = vmatpush1.msra.mxu0 0.0
        %1410 = vmatprep.subr.mxu0 0.0
        %1411 = vmatpush1.msra.mxu0 0.0
        %1412 = vmatprep.subr.mxu0 0.0
        %1413 = vmatpush1.msra.mxu0 0.0
        %1414 = vmatprep.subr.mxu0 0.0
        %1415 = vmatpush1.msra.mxu0 0.0
        %1416 = vmatprep.subr.mxu0 0.0
        %1417 = vmatpush1.msra.mxu0 0.0
        %1418 = vmatprep.subr.mxu0 0.0
        %1419 = vmatpush1.msra.mxu0 0.0
        %1420 = vmatprep.mubr.f32.mxu0 0.0
        %1421 = vmatmul.mubr.f32.gmra.mrb[0].mxu0 %v1351
        %v1422 = vpop.f32.mrb[0].mxu0
        %v1423 = vadd.f32 0.0, %v1422
        %v1424 = vpop.f32.mrb[0].mxu0
        %v1425 = vadd.f32 0.0, %v1424
        %1426 = vmatprep.mubr.f32.mxu0 0.0
        %1427 = vmatmul.mubr.f32.gmra.mrb[0].mxu0 %v1354
        %v1428 = vpop.f32.mrb[0].mxu0
        %v1429 = vadd.f32 0.0, %v1428
        %v1430 = vpop.f32.mrb[0].mxu0
        %v1431 = vadd.f32 0.0, %v1430
        %1432 = vdwg.mxu0
        %v1434 = vsel %vm403, %v1345, 0
        %v1437 = vsel %vm403, %v1346, 0
        %1439 = vmatprep.subr.mxu0 %v1309
        %1440 = vmatpush1.msra.mxu0 %v1308
        %1441 = vmatprep.subr.mxu0 %v1311
        %1442 = vmatpush1.msra.mxu0 %v1310
        %1443 = vmatprep.subr.mxu0 0.0
        %1444 = vmatpush1.msra.mxu0 0.0
        %1445 = vmatprep.subr.mxu0 0.0
        %1446 = vmatpush1.msra.mxu0 0.0
        %1447 = vmatprep.subr.mxu0 0.0
        %1448 = vmatpush1.msra.mxu0 0.0
        %1449 = vmatprep.subr.mxu0 0.0
        %1450 = vmatpush1.msra.mxu0 0.0
        %1451 = vmatprep.subr.mxu0 0.0
        %1452 = vmatpush1.msra.mxu0 0.0
        %1453 = vmatprep.subr.mxu0 0.0
        %1454 = vmatpush1.msra.mxu0 0.0
        %1455 = vmatprep.subr.mxu0 0.0
        %1456 = vmatpush1.msra.mxu0 0.0
        %1457 = vmatprep.subr.mxu0 0.0
        %1458 = vmatpush1.msra.mxu0 0.0
        %1459 = vmatprep.subr.mxu0 0.0
        %1460 = vmatpush1.msra.mxu0 0.0
        %1461 = vmatprep.subr.mxu0 0.0
        %1462 = vmatpush1.msra.mxu0 0.0
        %1463 = vmatprep.subr.mxu0 0.0
        %1464 = vmatpush1.msra.mxu0 0.0
        %1465 = vmatprep.subr.mxu0 0.0
        %1466 = vmatpush1.msra.mxu0 0.0
        %1467 = vmatprep.subr.mxu0 0.0
        %1468 = vmatpush1.msra.mxu0 0.0
        %1469 = vmatprep.subr.mxu0 0.0
        %1470 = vmatpush1.msra.mxu0 0.0
        %1471 = vmatprep.subr.mxu0 0.0
        %1472 = vmatpush1.msra.mxu0 0.0
        %1473 = vmatprep.subr.mxu0 0.0
        %1474 = vmatpush1.msra.mxu0 0.0
        %1475 = vmatprep.subr.mxu0 0.0
        %1476 = vmatpush1.msra.mxu0 0.0
        %1477 = vmatprep.subr.mxu0 0.0
        %1478 = vmatpush1.msra.mxu0 0.0
        %1479 = vmatprep.subr.mxu0 0.0
        %1480 = vmatpush1.msra.mxu0 0.0
        %1481 = vmatprep.subr.mxu0 0.0
        %1482 = vmatpush1.msra.mxu0 0.0
        %1483 = vmatprep.subr.mxu0 0.0
        %1484 = vmatpush1.msra.mxu0 0.0
        %1485 = vmatprep.subr.mxu0 0.0
        %1486 = vmatpush1.msra.mxu0 0.0
        %1487 = vmatprep.subr.mxu0 0.0
        %1488 = vmatpush1.msra.mxu0 0.0
        %1489 = vmatprep.subr.mxu0 0.0
        %1490 = vmatpush1.msra.mxu0 0.0
        %1491 = vmatprep.subr.mxu0 0.0
        %1492 = vmatpush1.msra.mxu0 0.0
        %1493 = vmatprep.subr.mxu0 0.0
        %1494 = vmatpush1.msra.mxu0 0.0
        %1495 = vmatprep.subr.mxu0 0.0
        %1496 = vmatpush1.msra.mxu0 0.0
        %1497 = vmatprep.subr.mxu0 0.0
        %1498 = vmatpush1.msra.mxu0 0.0
        %1499 = vmatprep.subr.mxu0 0.0
        %1500 = vmatpush1.msra.mxu0 0.0
        %1501 = vmatprep.subr.mxu0 0.0
        %1502 = vmatpush1.msra.mxu0 0.0
        %1503 = vmatprep.mubr.f32.mxu0 0.0
        %1504 = vmatmul.mubr.f32.gmra.mrb[0].mxu0 %v1434
        %v1505 = vpop.f32.mrb[0].mxu0
        %v1506 = vadd.f32 %v1423, %v1505
        %v1507 = vpop.f32.mrb[0].mxu0
        %v1508 = vadd.f32 %v1425, %v1507
        %1509 = vmatprep.mubr.f32.mxu0 0.0
        %1510 = vmatmul.mubr.f32.gmra.mrb[0].mxu0 %v1437
        %v1511 = vpop.f32.mrb[0].mxu0
        %v1512 = vadd.f32 %v1429, %v1511
        %v1513 = vpop.f32.mrb[0].mxu0
        %v1514 = vadd.f32 %v1431, %v1513
        %1515 = vdwg.mxu0
        %s1516 = scalar_lea.vmem [#allocation8], 80
        %v1517 = vld [vmem:[%s1516] sm:$0xff]
        %v1518 = vld [vmem:[%s1516 + $0x8] sm:$0xff]
        %v1520 = vsel %vm403, %v1517, 0
        %v1523 = vsel %vm403, %v1518, 0
        %1525 = vmatprep.subr.mxu0 %v1341
        %1526 = vmatpush1.msra.mxu0 %v1340
        %1527 = vmatprep.subr.mxu0 %v1343
        %1528 = vmatpush1.msra.mxu0 %v1342
        %1529 = vmatprep.subr.mxu0 0.0
        %1530 = vmatpush1.msra.mxu0 0.0
        %1531 = vmatprep.subr.mxu0 0.0
        %1532 = vmatpush1.msra.mxu0 0.0
        %1533 = vmatprep.subr.mxu0 0.0
        %1534 = vmatpush1.msra.mxu0 0.0
        %1535 = vmatprep.subr.mxu0 0.0
        %1536 = vmatpush1.msra.mxu0 0.0
        %1537 = vmatprep.subr.mxu0 0.0
        %1538 = vmatpush1.msra.mxu0 0.0
        %1539 = vmatprep.subr.mxu0 0.0
        %1540 = vmatpush1.msra.mxu0 0.0
        %1541 = vmatprep.subr.mxu0 0.0
        %1542 = vmatpush1.msra.mxu0 0.0
        %1543 = vmatprep.subr.mxu0 0.0
        %1544 = vmatpush1.msra.mxu0 0.0
        %1545 = vmatprep.subr.mxu0 0.0
        %1546 = vmatpush1.msra.mxu0 0.0
        %1547 = vmatprep.subr.mxu0 0.0
        %1548 = vmatpush1.msra.mxu0 0.0
        %1549 = vmatprep.subr.mxu0 0.0
        %1550 = vmatpush1.msra.mxu0 0.0
        %1551 = vmatprep.subr.mxu0 0.0
        %1552 = vmatpush1.msra.mxu0 0.0
        %1553 = vmatprep.subr.mxu0 0.0
        %1554 = vmatpush1.msra.mxu0 0.0
        %1555 = vmatprep.subr.mxu0 0.0
        %1556 = vmatpush1.msra.mxu0 0.0
        %1557 = vmatprep.subr.mxu0 0.0
        %1558 = vmatpush1.msra.mxu0 0.0
        %1559 = vmatprep.subr.mxu0 0.0
        %1560 = vmatpush1.msra.mxu0 0.0
        %1561 = vmatprep.subr.mxu0 0.0
        %1562 = vmatpush1.msra.mxu0 0.0
        %1563 = vmatprep.subr.mxu0 0.0
        %1564 = vmatpush1.msra.mxu0 0.0
        %1565 = vmatprep.subr.mxu0 0.0
        %1566 = vmatpush1.msra.mxu0 0.0
        %1567 = vmatprep.subr.mxu0 0.0
        %1568 = vmatpush1.msra.mxu0 0.0
        %1569 = vmatprep.subr.mxu0 0.0
        %1570 = vmatpush1.msra.mxu0 0.0
        %1571 = vmatprep.subr.mxu0 0.0
        %1572 = vmatpush1.msra.mxu0 0.0
        %1573 = vmatprep.subr.mxu0 0.0
        %1574 = vmatpush1.msra.mxu0 0.0
        %1575 = vmatprep.subr.mxu0 0.0
        %1576 = vmatpush1.msra.mxu0 0.0
        %1577 = vmatprep.subr.mxu0 0.0
        %1578 = vmatpush1.msra.mxu0 0.0
        %1579 = vmatprep.subr.mxu0 0.0
        %1580 = vmatpush1.msra.mxu0 0.0
        %1581 = vmatprep.subr.mxu0 0.0
        %1582 = vmatpush1.msra.mxu0 0.0
        %1583 = vmatprep.subr.mxu0 0.0
        %1584 = vmatpush1.msra.mxu0 0.0
        %1585 = vmatprep.subr.mxu0 0.0
        %1586 = vmatpush1.msra.mxu0 0.0
        %1587 = vmatprep.subr.mxu0 0.0
        %1588 = vmatpush1.msra.mxu0 0.0
        %1589 = vmatprep.mubr.f32.mxu0 0.0
        %1590 = vmatmul.mubr.f32.gmra.mrb[0].mxu0 %v1520
        %v1591 = vpop.f32.mrb[0].mxu0
        %v1592 = vadd.f32 0.0, %v1591
        %v1593 = vpop.f32.mrb[0].mxu0
        %v1594 = vadd.f32 0.0, %v1593
        %1595 = vmatprep.mubr.f32.mxu0 0.0
        %1596 = vmatmul.mubr.f32.gmra.mrb[0].mxu0 %v1523
        %v1597 = vpop.f32.mrb[0].mxu0
        %v1598 = vadd.f32 0.0, %v1597
        %v1599 = vpop.f32.mrb[0].mxu0
        %v1600 = vadd.f32 0.0, %v1599
        %1601 = vdwg.mxu0
        %v1602 = vadd.f32 %v1506, %v1592
        %v1603 = vadd.f32 %v1508, %v1594
        %v1604 = vadd.f32 %v1512, %v1598
        %v1605 = vadd.f32 %v1514, %v1600
        %s1606 = scalar_lea.vmem %s5, 16
        %v1607 = vld [vmem:[%s1606] sm:$0xff]
        %v1608 = vld [vmem:[%s1606 + $0x8] sm:$0xff]
        %1610 = vset.pattern.permute.xlu0 0
        %1611 = vperm.xlu0 %1610, %v1607
        %v1612 = vpop.permute.xlu0 %1611
        %1615 = vset.pattern.permute.xlu0 0
        %1616 = vperm.xlu0 %1615, %v1608
        %v1617 = vpop.permute.xlu0 %1616
        %v1619 = vadd.f32 %v1602, %v1612
        %v1620 = vadd.f32 %v1603, %v1612
        %v1621 = vadd.f32 %v1604, %v1617
        %v1622 = vadd.f32 %v1605, %v1617
        %v1623 = vadd.f32 %v1619, %v993
        %v1624 = vadd.f32 %v1620, %v994
        %v1625 = vadd.f32 %v1621, %v995
        %v1626 = vadd.f32 %v1622, %v996
        %v1627 = vmax.f32 %v1623, 0.0
        %v1628 = vmax.f32 %v1624, 0.0
        %v1629 = vmax.f32 %v1625, 0.0
        %v1630 = vmax.f32 %v1626, 0.0
        %v1631 = vlaneseq
        %v1632 = vshrl.u32 %v1631, 7
        %v1633 = vsub.s32 2, %v1632
        %v1634 = vrot.slane %v320, %v1633
        %v1635 = vlaneseq
        %v1636 = vshrl.u32 %v1635, 7
        %v1637 = vsub.s32 6, %v1636
        %v1638 = vrot.slane %v320, %v1637
        %v1641 = vlaneseq
        %v1642 = vshrl.u32 %v1641, 7
        %v1643 = vsub.s32 2, %v1642
        %v1644 = vrot.slane %v1634, %v1643
        %v1645 = vlaneseq
        %v1646 = vshrl.u32 %v1645, 7
        %v1647 = vsub.s32 2, %v1646
        %v1648 = vrot.slane %v1638, %v1647
        %v1649 = vmul.f32 %v1627, %v1644
        %v1650 = vmul.f32 %v1628, %v1648
        %v1651 = vmul.f32 %v1629, %v1644
        %v1652 = vmul.f32 %v1630, %v1648
        %1653 = vst [vmem:[%s317] sm:$0xff] %v1649
        %1654 = vst [vmem:[%s317 + $0x8] sm:$0xff] %v1650
        %1655 = vst [vmem:[%s317 + $0x10] sm:$0xff] %v1651
        %1656 = vst [vmem:[%s317 + $0x18] sm:$0xff] %v1652
        %s1657 = sand.u32 %s161, 1
        %s1658 = scalar_lea.sflag [#allocation4], %s1657
        %s1659 = sand.u32 %s161, 1
        %s1660 = smul.addr %s1659, 32
        %s1661 = scalar_lea.vmem [#allocation9], %s1660
        // Predicated region
        $region80: #{tpu_custom_call.1} parent=62 // pred_check
          %p1662 = pneg %p171
        $region81: #{tpu_custom_call.1} parent=62 // pred_check_branch
          %1664 = sbr.rel (%p1662) target = $region83
        $region82: #{tpu_custom_call.1} parent=62 // pred_region
          %s1665 = smul.u32 2, %s22
          %s1667 = ssub.s32 512, 512
          %1668 = vsyncadd %s1658, %s1667
          %s1669 = smul.addr %s1665, 128
          %s1670 = scalar_lea.hbm %s6, %s1669
          %s1671 = sshll.u32 %s1661, 4
          %s1672 = int_to_ptr.vmem [resolvable:$true] %s1671
          %1677 = dma.vmem_to_hbm [thread:$0]  %s1672, 512, %s1670, %s1658, 256, 512, 16
        $region83: #{tpu_custom_call.1} parent=62 // pred_fallthru
          _
      $region63: #{tpu_custom_call.1} parent=5 // pred_fallthru
        _
      %p1678 = scmp.le.s32.totalorder 2, %s17
      // Predicated region
      $region84: #{tpu_custom_call.1} parent=5 // pred_check
        %p1679 = pneg %p1678
      $region85: #{tpu_custom_call.1} parent=5 // pred_check_branch
        %1681 = sbr.rel (%p1679) target = $region87
      $region86: #{tpu_custom_call.1} parent=5 // pred_region
        %s1682 = ssub.s32 %s17, 2
        // Predicated region
        $region88: #{tpu_custom_call.1} parent=86 // pred_check
          %p1683 = pneg %p177
        $region89: #{tpu_custom_call.1} parent=86 // pred_check_branch
          %1685 = sbr.rel (%p1683) target = $region91
        $region90: #{tpu_custom_call.1} parent=86 // pred_region
          %s1686 = sand.u32 %s162, 1
          %s1687 = scalar_lea.sflag [#allocation4], %s1686
          %s1688 = sand.u32 %s162, 1
          %s1689 = smul.addr %s1688, 32
          %s1690 = scalar_lea.vmem [#allocation9], %s1689
          %1691 = dma.done %s1687, 512
        $region91: #{tpu_custom_call.1} parent=86 // pred_fallthru
          _
      $region87: #{tpu_custom_call.1} parent=5 // pred_fallthru
        _
    $region6: #{tpu_custom_call.1} parent=1 // loop_footer
      %s21 = sadd.s32 1, %s17
    $region7: #{tpu_custom_call.1} parent=1 // loop_footer_branch
      %16 = sbr.rel target = $region3
    $region8: #{tpu_custom_call.1} parent=1 // loop_exit
      _
    %1692 = vsyncpa [#allocation3], 1
    %s1693 = scalar_lea.sflag [#allocation3], 1
    %1694 = vsyncpa %s1693, 1
    %1695 = vsyncpa [#allocation7], 1
    %1696 = vsyncpa [#allocation4], 1
    %s1697 = scalar_lea.sflag [#allocation4], 1
    %1698 = vsyncpa %s1697, 1

</llo_original>
